<compile_context>
chip_gen: v6e
topology: v6e:2x2x1
jax: 0.10.0
libtpu: 0.0.40
codegen_flags: <defaults>
</compile_context>

<pallas_src>
import math
from functools import partial

import jax
import jax.numpy as jnp
from jax.experimental import pallas as pl
from jax.experimental.pallas import tpu as pltpu


# ----------------------------- in-kernel helpers -----------------------------

def _layer_norm(x, g, b, eps=1e-5):
    # x: (N, D), g/b: (1, D)
    mu = jnp.mean(x, axis=-1, keepdims=True)
    xc = x - mu
    var = jnp.mean(xc * xc, axis=-1, keepdims=True)
    return xc * jax.lax.rsqrt(var + eps) * g + b


def _softmax_lastdim(s, approx_recip):
    m = jnp.max(s, axis=-1, keepdims=True)
    e = jnp.exp(s - m)
    d = jnp.sum(e, axis=-1, keepdims=True)
    if approx_recip:
        return e * pl.reciprocal(d, approx=True)   # EUP slot, frees VALU
    return e / d


# --------------------------------- kernel ------------------------------------

def bi_attention_kernel(
        v_ref, l_ref, vpos_ref,
        lnv_g_ref, lnv_b_ref, lnl_g_ref, lnl_b_ref,
        wq_ref, bq_ref, wk_ref, bk_ref, wvl_ref, bvl_ref, wvv_ref, bvv_ref,
        wov_ref, bov_ref, wol_ref, bol_ref,
        gv_ref, gl_ref,
        v_out_ref, l_out_ref,
        *, num_heads, approx_recip):
    f32 = jnp.float32
    _, T, Dv = v_ref.shape
    _, S, Dl = l_ref.shape
    E = wq_ref.shape[1]
    hd = E // num_heads

    # ---- per-batch activations (grid axis = batch) ----
    v = v_ref[0].astype(f32)        # (T, Dv)
    l = l_ref[0].astype(f32)        # (S, Dl)
    vp = vpos_ref[0].astype(f32)    # (T, Dv)

    # ---- hoist broadcast constants once ----
    lnv_g = lnv_g_ref[...]
    lnv_b = lnv_b_ref[...]
    lnl_g = lnl_g_ref[...]
    lnl_b = lnl_b_ref[...]
    bq = bq_ref[...]
    bk = bk_ref[...]
    bvl = bvl_ref[...]
    bvv = bvv_ref[...]
    bov = bov_ref[...]
    bol = bol_ref[...]
    gv = gv_ref[...]
    gl = gl_ref[...]
    wov = wov_ref[...]              # (E, Dv)  pre-transposed
    wol = wol_ref[...]              # (E, Dl)  pre-transposed

    # ---- LayerNorms ----
    v_ln = _layer_norm(v, lnv_g, lnv_b)       # (T, Dv)
    l_ln = _layer_norm(l, lnl_g, lnl_b)       # (S, Dl)

    # ---- projections (scale already folded into wq/bq in the wrapper) ----
    q = jnp.dot(v_ln + vp, wq_ref[...], preferred_element_type=f32) + bq    # (T, E)
    k = jnp.dot(l_ln, wk_ref[...], preferred_element_type=f32) + bk         # (S, E)
    vl = jnp.dot(l_ln, wvl_ref[...], preferred_element_type=f32) + bvl      # (S, E)
    vv = jnp.dot(v_ln, wvv_ref[...], preferred_element_type=f32) + bvv      # (T, E)

    # ---- bi-directional attention ----
    # Per head: both score orientations computed on the MXU (no XLU transpose);
    # per-head outputs are lane-concatenated, then ONE K=E output projection.
    ov_heads = []
    ol_heads = []
    for h in range(num_heads):      # static unroll (small H)
        sl = slice(h * hd, (h + 1) * hd)
        qh, kh, vlh, vvh = q[:, sl], k[:, sl], vl[:, sl], vv[:, sl]

        s = jnp.einsum('td,sd->ts', qh, kh, preferred_element_type=f32)   # (T, S)
        sT = jnp.einsum('sd,td->st', kh, qh, preferred_element_type=f32)  # (S, T)

        # v-side: softmax over S (keys = language)
        p_v = _softmax_lastdim(s, approx_recip)
        # l-side: softmax over T (the module's pre-softmax max shift is a
        # softmax no-op; our max-shift inside _softmax_lastdim is equivalent)
        p_l = _softmax_lastdim(sT, approx_recip)

        ov_heads.append(jnp.dot(p_v, vlh, preferred_element_type=f32))    # (T, hd)
        ol_heads.append(jnp.dot(p_l, vvh, preferred_element_type=f32))    # (S, hd)

    attn_v = jnp.concatenate(ov_heads, axis=-1)    # (T, E)
    attn_l = jnp.concatenate(ol_heads, axis=-1)    # (S, E)

    delta_v = jnp.dot(attn_v, wov, preferred_element_type=f32) + bov      # (T, Dv)
    delta_l = jnp.dot(attn_l, wol, preferred_element_type=f32) + bol      # (S, Dl)

    # Residual uses the post-LayerNorm tensors (matches the original module,
    # which reassigns v/l to the LN outputs before the residual add).
    v_out = v_ln + gv * delta_v
    l_out = l_ln + gl * delta_l

    v_out_ref[...] = v_out.reshape(1, T, Dv).astype(v_out_ref.dtype)
    l_out_ref[...] = l_out.reshape(1, S, Dl).astype(l_out_ref.dtype)


# -------------------------------- wrapper ------------------------------------

def bi_attention_block(v, l, v_pos, params, *, num_heads, approx_recip=True):
    """v/v_pos: (B, T, v_dim);  l: (B, S, l_dim).  Returns (v_out, l_out)."""
    B, T, Dv = v.shape
    _, S, Dl = l.shape
    E = params["v_proj_w"].shape[0]
    hd = E // num_heads
    scale = hd ** -0.5

    # --- trace-time weight prep (free layout plumbing) ---
    wq = params["v_proj_w"].T * scale                   # (Dv, E), scale folded in
    bq = (params["v_proj_b"] * scale).reshape(1, E)
    wk = params["l_proj_w"].T                           # (Dl, E)
    bk = params["l_proj_b"].reshape(1, E)
    wvl = params["values_l_proj_w"].T                   # (Dl, E)
    bvl = params["values_l_proj_b"].reshape(1, E)
    wvv = params["values_v_proj_w"].T                   # (Dv, E)
    bvv = params["values_v_proj_b"].reshape(1, E)
    wov = params["out_v_proj_w"].T                      # (E, Dv)
    bov = params["out_v_proj_b"].reshape(1, Dv)
    wol = params["out_l_proj_w"].T                      # (E, Dl)
    bol = params["out_l_proj_b"].reshape(1, Dl)

    lnv_g = params["ln_v_g"].reshape(1, Dv)
    lnv_b = params["ln_v_b"].reshape(1, Dv)
    lnl_g = params["ln_l_g"].reshape(1, Dl)
    lnl_b = params["ln_l_b"].reshape(1, Dl)
    gv = params["gamma_v"].reshape(1, Dv)
    gl = params["gamma_l"].reshape(1, Dl)

    def batch3(shape):
        # one batch element per grid step (tiled along the grid axis)
        return pl.BlockSpec(shape, lambda b: (b, 0, 0))

    def const2(shape):
        # constant index map -> fetched once, resident across grid steps
        return pl.BlockSpec(shape, lambda b: (0, 0))

    in_specs = [
        batch3((1, T, Dv)), batch3((1, S, Dl)), batch3((1, T, Dv)),
        const2((1, Dv)), const2((1, Dv)), const2((1, Dl)), const2((1, Dl)),
        const2((Dv, E)), const2((1, E)),     # wq, bq
        const2((Dl, E)), const2((1, E)),     # wk, bk
        const2((Dl, E)), const2((1, E)),     # wvl, bvl
        const2((Dv, E)), const2((1, E)),     # wvv, bvv
        const2((E, Dv)), const2((1, Dv)),    # wov, bov
        const2((E, Dl)), const2((1, Dl)),    # wol, bol
        const2((1, Dv)), const2((1, Dl)),    # gamma_v, gamma_l
    ]

    v_out, l_out = pl.pallas_call(
        partial(bi_attention_kernel, num_heads=num_heads, approx_recip=approx_recip),
        out_shape=(jax.ShapeDtypeStruct((B, T, Dv), v.dtype),
                   jax.ShapeDtypeStruct((B, S, Dl), l.dtype)),
        grid_spec=pltpu.PrefetchScalarGridSpec(
            num_scalar_prefetch=0,
            grid=(B,),
            in_specs=in_specs,
            out_specs=(batch3((1, T, Dv)), batch3((1, S, Dl))),
        ),
        compiler_params=pltpu.CompilerParams(
            dimension_semantics=("parallel",),          # megacore sharding on v7x
            vmem_limit_bytes=32 * 1024 * 1024),
    )(v, l, v_pos,
      lnv_g, lnv_b, lnl_g, lnl_b,
      wq, bq, wk, bk, wvl, bvl, wvv, bvv,
      wov, bov, wol, bol,
      gv, gl)

    return v_out, l_out


# ----------------------------- pure-JAX reference ----------------------------

def _ref_block(v, l, v_pos, params, *, num_heads):
    def ln(x, g, b, eps=1e-5):
        mu = x.mean(-1, keepdims=True)
        var = ((x - mu) ** 2).mean(-1, keepdims=True)
        return (x - mu) / jnp.sqrt(var + eps) * g + b

    B, T, Dv = v.shape
    _, S, Dl = l.shape
    E = params["v_proj_w"].shape[0]
    H = num_heads
    hd = E // H
    scale = hd ** -0.5

    v_ln = ln(v, params["ln_v_g"], params["ln_v_b"])
    l_ln = ln(l, params["ln_l_g"], params["ln_l_b"])

    q = ((v_ln + v_pos) @ params["v_proj_w"].T + params["v_proj_b"]) * scale
    k = l_ln @ params["l_proj_w"].T + params["l_proj_b"]
    vv = v_ln @ params["values_v_proj_w"].T + params["values_v_proj_b"]
    vl = l_ln @ params["values_l_proj_w"].T + params["values_l_proj_b"]

    def shape(x, n):
        return x.reshape(B, n, H, hd).transpose(0, 2, 1, 3)

    qh, kh, vvh, vlh = shape(q, T), shape(k, S), shape(vv, T), shape(vl, S)
    s = jnp.einsum("bhtd,bhsd->bhts", qh, kh)               # (B,H,T,S)
    pv = jax.nn.softmax(s, axis=-1)
    sT = jnp.swapaxes(s, 2, 3)                              # (B,H,S,T)
    pl_ = jax.nn.softmax(sT - sT.max(-1, keepdims=True), axis=-1)
    ov = jnp.einsum("bhts,bhsd->bhtd", pv, vlh).transpose(0, 2, 1, 3).reshape(B, T, E)
    ol = jnp.einsum("bhst,bhtd->bhsd", pl_, vvh).transpose(0, 2, 1, 3).reshape(B, S, E)
    dv = ov @ params["out_v_proj_w"].T + params["out_v_proj_b"]
    dl = ol @ params["out_l_proj_w"].T + params["out_l_proj_b"]
    return v_ln + params["gamma_v"] * dv, l_ln + params["gamma_l"] * dl


# ---------------------------------- main -------------------------------------

if __name__ == "__main__":
    v_dim, l_dim, embed_dim, num_heads = 32, 64, 32, 4
    B, T, S = 2, 8, 16

    key = jax.random.PRNGKey(0)
    ks = jax.random.split(key, 20)

    def w(k, shape, scale=0.1):
        return (scale * jax.random.normal(k, shape)).astype(jnp.float32)

    params = {
        "ln_v_g": jnp.ones((v_dim,), jnp.float32),
        "ln_v_b": jnp.zeros((v_dim,), jnp.float32),
        "ln_l_g": jnp.ones((l_dim,), jnp.float32),
        "ln_l_b": jnp.zeros((l_dim,), jnp.float32),
        "v_proj_w": w(ks[0], (embed_dim, v_dim)),
        "v_proj_b": w(ks[1], (embed_dim,)),
        "l_proj_w": w(ks[2], (embed_dim, l_dim)),
        "l_proj_b": w(ks[3], (embed_dim,)),
        "values_v_proj_w": w(ks[4], (embed_dim, v_dim)),
        "values_v_proj_b": w(ks[5], (embed_dim,)),
        "values_l_proj_w": w(ks[6], (embed_dim, l_dim)),
        "values_l_proj_b": w(ks[7], (embed_dim,)),
        "out_v_proj_w": w(ks[8], (v_dim, embed_dim)),
        "out_v_proj_b": w(ks[9], (v_dim,)),
        "out_l_proj_w": w(ks[10], (l_dim, embed_dim)),
        "out_l_proj_b": w(ks[11], (l_dim,)),
        # init_values default is 1e-4; use a larger value so the attention path
        # actually contributes to the output and is exercised by the check.
        "gamma_v": jnp.full((v_dim,), 0.5, jnp.float32),
        "gamma_l": jnp.full((l_dim,), 0.5, jnp.float32),
    }

    v = w(ks[12], (B, T, v_dim), scale=1.0)
    l = w(ks[13], (B, S, l_dim), scale=1.0)
    v_pos = w(ks[14], (B, T, v_dim), scale=1.0)

    v_out, l_out = bi_attention_block(v, l, v_pos, params, num_heads=num_heads)
    v_out = jax.block_until_ready(v_out)
    l_out = jax.block_until_ready(l_out)

    v_expected, l_expected = _ref_block(v, l, v_pos, params, num_heads=num_heads)

    assert v_out.shape == (B, T, v_dim) and l_out.shape == (B, S, l_dim)
    assert bool(jnp.all(jnp.isfinite(v_out))) and bool(jnp.all(jnp.isfinite(l_out)))
    assert bool(jnp.allclose(v_out, v_expected, atol=2e-3, rtol=2e-3)), \
        float(jnp.max(jnp.abs(v_out - v_expected)))
    assert bool(jnp.allclose(l_out, l_expected, atol=2e-3, rtol=2e-3)), \
        float(jnp.max(jnp.abs(l_out - l_expected)))

    print("KERNEL_OK")
</pallas_src>

<mosaic_0001>
module attributes {stable_mosaic.version = 11 : i64} {
  func.func @bi_attention_kernel(%arg0: i32, %arg1: memref<1x8x32xf32, #tpu.memory_space<vmem>>, %arg2: memref<1x16x64xf32, #tpu.memory_space<vmem>>, %arg3: memref<1x8x32xf32, #tpu.memory_space<vmem>>, %arg4: memref<1x32xf32, #tpu.memory_space<vmem>>, %arg5: memref<1x32xf32, #tpu.memory_space<vmem>>, %arg6: memref<1x64xf32, #tpu.memory_space<vmem>>, %arg7: memref<1x64xf32, #tpu.memory_space<vmem>>, %arg8: memref<32x32xf32, #tpu.memory_space<vmem>>, %arg9: memref<1x32xf32, #tpu.memory_space<vmem>>, %arg10: memref<64x32xf32, #tpu.memory_space<vmem>>, %arg11: memref<1x32xf32, #tpu.memory_space<vmem>>, %arg12: memref<64x32xf32, #tpu.memory_space<vmem>>, %arg13: memref<1x32xf32, #tpu.memory_space<vmem>>, %arg14: memref<32x32xf32, #tpu.memory_space<vmem>>, %arg15: memref<1x32xf32, #tpu.memory_space<vmem>>, %arg16: memref<32x32xf32, #tpu.memory_space<vmem>>, %arg17: memref<1x32xf32, #tpu.memory_space<vmem>>, %arg18: memref<32x64xf32, #tpu.memory_space<vmem>>, %arg19: memref<1x64xf32, #tpu.memory_space<vmem>>, %arg20: memref<1x32xf32, #tpu.memory_space<vmem>>, %arg21: memref<1x64xf32, #tpu.memory_space<vmem>>, %arg22: memref<1x8x32xf32, #tpu.memory_space<vmem>>, %arg23: memref<1x16x64xf32, #tpu.memory_space<vmem>>) attributes {dimension_semantics = [#tpu.dimension_semantics<parallel>], iteration_bounds = array<i64: 2>, scalar_prefetch = 0 : i64, scratch_operands = 0 : i64, tpu.core_type = #tpu.core_type<tc>, window_params = [{transform_indices = @transform_0, window_bounds = array<i64: 1, 8, 32>}, {transform_indices = @transform_1, window_bounds = array<i64: 1, 16, 64>}, {transform_indices = @transform_2, window_bounds = array<i64: 1, 8, 32>}, {pipeline_mode = #tpu.pipeline_mode<synchronous>, transform_indices = @transform_3, window_bounds = array<i64: 1, 32>}, {pipeline_mode = #tpu.pipeline_mode<synchronous>, transform_indices = @transform_4, window_bounds = array<i64: 1, 32>}, {pipeline_mode = #tpu.pipeline_mode<synchronous>, transform_indices = @transform_5, window_bounds = array<i64: 1, 64>}, {pipeline_mode = #tpu.pipeline_mode<synchronous>, transform_indices = @transform_6, window_bounds = array<i64: 1, 64>}, {pipeline_mode = #tpu.pipeline_mode<synchronous>, transform_indices = @transform_7, window_bounds = array<i64: 32, 32>}, {pipeline_mode = #tpu.pipeline_mode<synchronous>, transform_indices = @transform_8, window_bounds = array<i64: 1, 32>}, {pipeline_mode = #tpu.pipeline_mode<synchronous>, transform_indices = @transform_9, window_bounds = array<i64: 64, 32>}, {pipeline_mode = #tpu.pipeline_mode<synchronous>, transform_indices = @transform_10, window_bounds = array<i64: 1, 32>}, {pipeline_mode = #tpu.pipeline_mode<synchronous>, transform_indices = @transform_11, window_bounds = array<i64: 64, 32>}, {pipeline_mode = #tpu.pipeline_mode<synchronous>, transform_indices = @transform_12, window_bounds = array<i64: 1, 32>}, {pipeline_mode = #tpu.pipeline_mode<synchronous>, transform_indices = @transform_13, window_bounds = array<i64: 32, 32>}, {pipeline_mode = #tpu.pipeline_mode<synchronous>, transform_indices = @transform_14, window_bounds = array<i64: 1, 32>}, {pipeline_mode = #tpu.pipeline_mode<synchronous>, transform_indices = @transform_15, window_bounds = array<i64: 32, 32>}, {pipeline_mode = #tpu.pipeline_mode<synchronous>, transform_indices = @transform_16, window_bounds = array<i64: 1, 32>}, {pipeline_mode = #tpu.pipeline_mode<synchronous>, transform_indices = @transform_17, window_bounds = array<i64: 32, 64>}, {pipeline_mode = #tpu.pipeline_mode<synchronous>, transform_indices = @transform_18, window_bounds = array<i64: 1, 64>}, {pipeline_mode = #tpu.pipeline_mode<synchronous>, transform_indices = @transform_19, window_bounds = array<i64: 1, 32>}, {pipeline_mode = #tpu.pipeline_mode<synchronous>, transform_indices = @transform_20, window_bounds = array<i64: 1, 64>}, {transform_indices = @transform_21, window_bounds = array<i64: 1, 8, 32>}, {transform_indices = @transform_22, window_bounds = array<i64: 1, 16, 64>}]} {
    %c0 = arith.constant 0 : index
    %c0_0 = arith.constant 0 : index
    %c0_1 = arith.constant 0 : index
    %0 = vector.load %arg1[%c0, %c0_0, %c0_1] : memref<1x8x32xf32, #tpu.memory_space<vmem>>, vector<1x8x32xf32>
    %1 = vector.shape_cast %0 : vector<1x8x32xf32> to vector<8x32xf32>
    %c0_2 = arith.constant 0 : index
    %c0_3 = arith.constant 0 : index
    %c0_4 = arith.constant 0 : index
    %2 = vector.load %arg2[%c0_2, %c0_3, %c0_4] : memref<1x16x64xf32, #tpu.memory_space<vmem>>, vector<1x16x64xf32>
    %3 = vector.shape_cast %2 : vector<1x16x64xf32> to vector<16x64xf32>
    %c0_5 = arith.constant 0 : index
    %c0_6 = arith.constant 0 : index
    %c0_7 = arith.constant 0 : index
    %4 = vector.load %arg3[%c0_5, %c0_6, %c0_7] : memref<1x8x32xf32, #tpu.memory_space<vmem>>, vector<1x8x32xf32>
    %5 = vector.shape_cast %4 : vector<1x8x32xf32> to vector<8x32xf32>
    %c0_8 = arith.constant 0 : index
    %c0_9 = arith.constant 0 : index
    %6 = vector.load %arg4[%c0_8, %c0_9] : memref<1x32xf32, #tpu.memory_space<vmem>>, vector<1x32xf32>
    %c0_10 = arith.constant 0 : index
    %c0_11 = arith.constant 0 : index
    %7 = vector.load %arg5[%c0_10, %c0_11] : memref<1x32xf32, #tpu.memory_space<vmem>>, vector<1x32xf32>
    %c0_12 = arith.constant 0 : index
    %c0_13 = arith.constant 0 : index
    %8 = vector.load %arg6[%c0_12, %c0_13] : memref<1x64xf32, #tpu.memory_space<vmem>>, vector<1x64xf32>
    %c0_14 = arith.constant 0 : index
    %c0_15 = arith.constant 0 : index
    %9 = vector.load %arg7[%c0_14, %c0_15] : memref<1x64xf32, #tpu.memory_space<vmem>>, vector<1x64xf32>
    %c0_16 = arith.constant 0 : index
    %c0_17 = arith.constant 0 : index
    %10 = vector.load %arg9[%c0_16, %c0_17] : memref<1x32xf32, #tpu.memory_space<vmem>>, vector<1x32xf32>
    %c0_18 = arith.constant 0 : index
    %c0_19 = arith.constant 0 : index
    %11 = vector.load %arg11[%c0_18, %c0_19] : memref<1x32xf32, #tpu.memory_space<vmem>>, vector<1x32xf32>
    %c0_20 = arith.constant 0 : index
    %c0_21 = arith.constant 0 : index
    %12 = vector.load %arg13[%c0_20, %c0_21] : memref<1x32xf32, #tpu.memory_space<vmem>>, vector<1x32xf32>
    %c0_22 = arith.constant 0 : index
    %c0_23 = arith.constant 0 : index
    %13 = vector.load %arg15[%c0_22, %c0_23] : memref<1x32xf32, #tpu.memory_space<vmem>>, vector<1x32xf32>
    %c0_24 = arith.constant 0 : index
    %c0_25 = arith.constant 0 : index
    %14 = vector.load %arg17[%c0_24, %c0_25] : memref<1x32xf32, #tpu.memory_space<vmem>>, vector<1x32xf32>
    %c0_26 = arith.constant 0 : index
    %c0_27 = arith.constant 0 : index
    %15 = vector.load %arg19[%c0_26, %c0_27] : memref<1x64xf32, #tpu.memory_space<vmem>>, vector<1x64xf32>
    %c0_28 = arith.constant 0 : index
    %c0_29 = arith.constant 0 : index
    %16 = vector.load %arg20[%c0_28, %c0_29] : memref<1x32xf32, #tpu.memory_space<vmem>>, vector<1x32xf32>
    %c0_30 = arith.constant 0 : index
    %c0_31 = arith.constant 0 : index
    %17 = vector.load %arg21[%c0_30, %c0_31] : memref<1x64xf32, #tpu.memory_space<vmem>>, vector<1x64xf32>
    %c0_32 = arith.constant 0 : index
    %c0_33 = arith.constant 0 : index
    %18 = vector.load %arg16[%c0_32, %c0_33] : memref<32x32xf32, #tpu.memory_space<vmem>>, vector<32x32xf32>
    %c0_34 = arith.constant 0 : index
    %c0_35 = arith.constant 0 : index
    %19 = vector.load %arg18[%c0_34, %c0_35] : memref<32x64xf32, #tpu.memory_space<vmem>>, vector<32x64xf32>
    %cst = arith.constant dense<0.000000e+00> : vector<8xf32>
    %20 = vector.multi_reduction <add>, %1, %cst [1] : vector<8x32xf32> to vector<8xf32>
    %21 = vector.shape_cast %20 : vector<8xf32> to vector<8x1xf32>
    %cst_36 = arith.constant 3.200000e+01 : f32
    %22 = vector.broadcast %cst_36 : f32 to vector<8x1xf32>
    %23 = arith.divf %21, %22 : vector<8x1xf32>
    %24 = vector.broadcast %23 : vector<8x1xf32> to vector<8x32xf32>
    %25 = arith.subf %1, %24 : vector<8x32xf32>
    %26 = arith.mulf %25, %25 : vector<8x32xf32>
    %cst_37 = arith.constant dense<0.000000e+00> : vector<8xf32>
    %27 = vector.multi_reduction <add>, %26, %cst_37 [1] : vector<8x32xf32> to vector<8xf32>
    %28 = vector.shape_cast %27 : vector<8xf32> to vector<8x1xf32>
    %cst_38 = arith.constant 3.200000e+01 : f32
    %29 = vector.broadcast %cst_38 : f32 to vector<8x1xf32>
    %30 = arith.divf %28, %29 : vector<8x1xf32>
    %cst_39 = arith.constant 9.99999974E-6 : f32
    %31 = vector.broadcast %cst_39 : f32 to vector<8x1xf32>
    %32 = arith.addf %30, %31 : vector<8x1xf32>
    %33 = math.rsqrt %32 : vector<8x1xf32>
    %34 = vector.broadcast %33 : vector<8x1xf32> to vector<8x32xf32>
    %35 = arith.mulf %25, %34 : vector<8x32xf32>
    %36 = vector.broadcast %6 : vector<1x32xf32> to vector<8x32xf32>
    %37 = arith.mulf %35, %36 : vector<8x32xf32>
    %38 = vector.broadcast %7 : vector<1x32xf32> to vector<8x32xf32>
    %39 = arith.addf %37, %38 : vector<8x32xf32>
    %cst_40 = arith.constant dense<0.000000e+00> : vector<16xf32>
    %40 = vector.multi_reduction <add>, %3, %cst_40 [1] : vector<16x64xf32> to vector<16xf32>
    %41 = vector.shape_cast %40 : vector<16xf32> to vector<16x1xf32>
    %cst_41 = arith.constant 6.400000e+01 : f32
    %42 = vector.broadcast %cst_41 : f32 to vector<16x1xf32>
    %43 = arith.divf %41, %42 : vector<16x1xf32>
    %44 = vector.broadcast %43 : vector<16x1xf32> to vector<16x64xf32>
    %45 = arith.subf %3, %44 : vector<16x64xf32>
    %46 = arith.mulf %45, %45 : vector<16x64xf32>
    %cst_42 = arith.constant dense<0.000000e+00> : vector<16xf32>
    %47 = vector.multi_reduction <add>, %46, %cst_42 [1] : vector<16x64xf32> to vector<16xf32>
    %48 = vector.shape_cast %47 : vector<16xf32> to vector<16x1xf32>
    %cst_43 = arith.constant 6.400000e+01 : f32
    %49 = vector.broadcast %cst_43 : f32 to vector<16x1xf32>
    %50 = arith.divf %48, %49 : vector<16x1xf32>
    %cst_44 = arith.constant 9.99999974E-6 : f32
    %51 = vector.broadcast %cst_44 : f32 to vector<16x1xf32>
    %52 = arith.addf %50, %51 : vector<16x1xf32>
    %53 = math.rsqrt %52 : vector<16x1xf32>
    %54 = vector.broadcast %53 : vector<16x1xf32> to vector<16x64xf32>
    %55 = arith.mulf %45, %54 : vector<16x64xf32>
    %56 = vector.broadcast %8 : vector<1x64xf32> to vector<16x64xf32>
    %57 = arith.mulf %55, %56 : vector<16x64xf32>
    %58 = vector.broadcast %9 : vector<1x64xf32> to vector<16x64xf32>
    %59 = arith.addf %57, %58 : vector<16x64xf32>
    %60 = arith.addf %39, %5 : vector<8x32xf32>
    %c0_45 = arith.constant 0 : index
    %c0_46 = arith.constant 0 : index
    %61 = vector.load %arg8[%c0_45, %c0_46] : memref<32x32xf32, #tpu.memory_space<vmem>>, vector<32x32xf32>
    %cst_47 = arith.constant dense<0.000000e+00> : vector<8x32xf32>
    %62 = tpu.matmul %60, %61, %cst_47 {dimension_numbers = #tpu.dot_dimension_numbers<[1], [0], [0], [1], [0, 0, 1, 1], [], []>} : vector<8x32xf32>, vector<32x32xf32>, vector<8x32xf32> -> vector<8x32xf32>
    %63 = vector.broadcast %10 : vector<1x32xf32> to vector<8x32xf32>
    %64 = arith.addf %62, %63 : vector<8x32xf32>
    %c0_48 = arith.constant 0 : index
    %c0_49 = arith.constant 0 : index
    %65 = vector.load %arg10[%c0_48, %c0_49] : memref<64x32xf32, #tpu.memory_space<vmem>>, vector<64x32xf32>
    %cst_50 = arith.constant dense<0.000000e+00> : vector<16x32xf32>
    %66 = tpu.matmul %59, %65, %cst_50 {dimension_numbers = #tpu.dot_dimension_numbers<[1], [0], [0], [1], [0, 0, 1, 1], [], []>} : vector<16x64xf32>, vector<64x32xf32>, vector<16x32xf32> -> vector<16x32xf32>
    %67 = vector.broadcast %11 : vector<1x32xf32> to vector<16x32xf32>
    %68 = arith.addf %66, %67 : vector<16x32xf32>
    %c0_51 = arith.constant 0 : index
    %c0_52 = arith.constant 0 : index
    %69 = vector.load %arg12[%c0_51, %c0_52] : memref<64x32xf32, #tpu.memory_space<vmem>>, vector<64x32xf32>
    %cst_53 = arith.constant dense<0.000000e+00> : vector<16x32xf32>
    %70 = tpu.matmul %59, %69, %cst_53 {dimension_numbers = #tpu.dot_dimension_numbers<[1], [0], [0], [1], [0, 0, 1, 1], [], []>} : vector<16x64xf32>, vector<64x32xf32>, vector<16x32xf32> -> vector<16x32xf32>
    %71 = vector.broadcast %12 : vector<1x32xf32> to vector<16x32xf32>
    %72 = arith.addf %70, %71 : vector<16x32xf32>
    %c0_54 = arith.constant 0 : index
    %c0_55 = arith.constant 0 : index
    %73 = vector.load %arg14[%c0_54, %c0_55] : memref<32x32xf32, #tpu.memory_space<vmem>>, vector<32x32xf32>
    %cst_56 = arith.constant dense<0.000000e+00> : vector<8x32xf32>
    %74 = tpu.matmul %39, %73, %cst_56 {dimension_numbers = #tpu.dot_dimension_numbers<[1], [0], [0], [1], [0, 0, 1, 1], [], []>} : vector<8x32xf32>, vector<32x32xf32>, vector<8x32xf32> -> vector<8x32xf32>
    %75 = vector.broadcast %13 : vector<1x32xf32> to vector<8x32xf32>
    %76 = arith.addf %74, %75 : vector<8x32xf32>
    %77 = vector.extract_strided_slice %64 {offsets = [0, 0], sizes = [8, 8], strides = [1, 1]} : vector<8x32xf32> to vector<8x8xf32>
    %78 = vector.extract_strided_slice %68 {offsets = [0, 0], sizes = [16, 8], strides = [1, 1]} : vector<16x32xf32> to vector<16x8xf32>
    %79 = vector.extract_strided_slice %72 {offsets = [0, 0], sizes = [16, 8], strides = [1, 1]} : vector<16x32xf32> to vector<16x8xf32>
    %80 = vector.extract_strided_slice %76 {offsets = [0, 0], sizes = [8, 8], strides = [1, 1]} : vector<8x32xf32> to vector<8x8xf32>
    "tpu.trace_start"() <{level = 10 : i32, message = "td,sd->ts"}> : () -> ()
    %cst_57 = arith.constant dense<0.000000e+00> : vector<8x16xf32>
    %81 = tpu.matmul %77, %78, %cst_57 {dimension_numbers = #tpu.dot_dimension_numbers<[1], [1], [0], [0], [0, 0, 1, 0], [], []>} : vector<8x8xf32>, vector<16x8xf32>, vector<8x16xf32> -> vector<8x16xf32>
    "tpu.trace_stop"() : () -> ()
    "tpu.trace_start"() <{level = 10 : i32, message = "sd,td->st"}> : () -> ()
    %cst_58 = arith.constant dense<0.000000e+00> : vector<16x8xf32>
    %82 = tpu.matmul %78, %77, %cst_58 {dimension_numbers = #tpu.dot_dimension_numbers<[1], [1], [0], [0], [0, 0, 1, 0], [], []>} : vector<16x8xf32>, vector<8x8xf32>, vector<16x8xf32> -> vector<16x8xf32>
    "tpu.trace_stop"() : () -> ()
    %cst_59 = arith.constant dense<0xFF800000> : vector<8xf32>
    %83 = vector.multi_reduction <maximumf>, %81, %cst_59 [1] : vector<8x16xf32> to vector<8xf32>
    %84 = vector.shape_cast %83 : vector<8xf32> to vector<8x1xf32>
    %85 = vector.broadcast %84 : vector<8x1xf32> to vector<8x16xf32>
    %86 = arith.subf %81, %85 : vector<8x16xf32>
    %87 = math.exp %86 : vector<8x16xf32>
    %cst_60 = arith.constant dense<0.000000e+00> : vector<8xf32>
    %88 = vector.multi_reduction <add>, %87, %cst_60 [1] : vector<8x16xf32> to vector<8xf32>
    %89 = vector.shape_cast %88 : vector<8xf32> to vector<8x1xf32>
    %90 = tpu.reciprocal %89 {approx = true} : vector<8x1xf32> -> vector<8x1xf32>
    %91 = vector.broadcast %90 : vector<8x1xf32> to vector<8x16xf32>
    %92 = arith.mulf %87, %91 : vector<8x16xf32>
    %cst_61 = arith.constant dense<0xFF800000> : vector<16xf32>
    %93 = vector.multi_reduction <maximumf>, %82, %cst_61 [1] : vector<16x8xf32> to vector<16xf32>
    %94 = vector.shape_cast %93 : vector<16xf32> to vector<16x1xf32>
    %95 = vector.broadcast %94 : vector<16x1xf32> to vector<16x8xf32>
    %96 = arith.subf %82, %95 : vector<16x8xf32>
    %97 = math.exp %96 : vector<16x8xf32>
    %cst_62 = arith.constant dense<0.000000e+00> : vector<16xf32>
    %98 = vector.multi_reduction <add>, %97, %cst_62 [1] : vector<16x8xf32> to vector<16xf32>
    %99 = vector.shape_cast %98 : vector<16xf32> to vector<16x1xf32>
    %100 = tpu.reciprocal %99 {approx = true} : vector<16x1xf32> -> vector<16x1xf32>
    %101 = vector.broadcast %100 : vector<16x1xf32> to vector<16x8xf32>
    %102 = arith.mulf %97, %101 : vector<16x8xf32>
    %cst_63 = arith.constant dense<0.000000e+00> : vector<8x8xf32>
    %103 = tpu.matmul %92, %79, %cst_63 {dimension_numbers = #tpu.dot_dimension_numbers<[1], [0], [0], [1], [0, 0, 1, 1], [], []>} : vector<8x16xf32>, vector<16x8xf32>, vector<8x8xf32> -> vector<8x8xf32>
    %cst_64 = arith.constant dense<0.000000e+00> : vector<16x8xf32>
    %104 = tpu.matmul %102, %80, %cst_64 {dimension_numbers = #tpu.dot_dimension_numbers<[1], [0], [0], [1], [0, 0, 1, 1], [], []>} : vector<16x8xf32>, vector<8x8xf32>, vector<16x8xf32> -> vector<16x8xf32>
    %105 = vector.extract_strided_slice %64 {offsets = [0, 8], sizes = [8, 8], strides = [1, 1]} : vector<8x32xf32> to vector<8x8xf32>
    %106 = vector.extract_strided_slice %68 {offsets = [0, 8], sizes = [16, 8], strides = [1, 1]} : vector<16x32xf32> to vector<16x8xf32>
    %107 = vector.extract_strided_slice %72 {offsets = [0, 8], sizes = [16, 8], strides = [1, 1]} : vector<16x32xf32> to vector<16x8xf32>
    %108 = vector.extract_strided_slice %76 {offsets = [0, 8], sizes = [8, 8], strides = [1, 1]} : vector<8x32xf32> to vector<8x8xf32>
    "tpu.trace_start"() <{level = 10 : i32, message = "td,sd->ts"}> : () -> ()
    %cst_65 = arith.constant dense<0.000000e+00> : vector<8x16xf32>
    %109 = tpu.matmul %105, %106, %cst_65 {dimension_numbers = #tpu.dot_dimension_numbers<[1], [1], [0], [0], [0, 0, 1, 0], [], []>} : vector<8x8xf32>, vector<16x8xf32>, vector<8x16xf32> -> vector<8x16xf32>
    "tpu.trace_stop"() : () -> ()
    "tpu.trace_start"() <{level = 10 : i32, message = "sd,td->st"}> : () -> ()
    %cst_66 = arith.constant dense<0.000000e+00> : vector<16x8xf32>
    %110 = tpu.matmul %106, %105, %cst_66 {dimension_numbers = #tpu.dot_dimension_numbers<[1], [1], [0], [0], [0, 0, 1, 0], [], []>} : vector<16x8xf32>, vector<8x8xf32>, vector<16x8xf32> -> vector<16x8xf32>
    "tpu.trace_stop"() : () -> ()
    %cst_67 = arith.constant dense<0xFF800000> : vector<8xf32>
    %111 = vector.multi_reduction <maximumf>, %109, %cst_67 [1] : vector<8x16xf32> to vector<8xf32>
    %112 = vector.shape_cast %111 : vector<8xf32> to vector<8x1xf32>
    %113 = vector.broadcast %112 : vector<8x1xf32> to vector<8x16xf32>
    %114 = arith.subf %109, %113 : vector<8x16xf32>
    %115 = math.exp %114 : vector<8x16xf32>
    %cst_68 = arith.constant dense<0.000000e+00> : vector<8xf32>
    %116 = vector.multi_reduction <add>, %115, %cst_68 [1] : vector<8x16xf32> to vector<8xf32>
    %117 = vector.shape_cast %116 : vector<8xf32> to vector<8x1xf32>
    %118 = tpu.reciprocal %117 {approx = true} : vector<8x1xf32> -> vector<8x1xf32>
    %119 = vector.broadcast %118 : vector<8x1xf32> to vector<8x16xf32>
    %120 = arith.mulf %115, %119 : vector<8x16xf32>
    %cst_69 = arith.constant dense<0xFF800000> : vector<16xf32>
    %121 = vector.multi_reduction <maximumf>, %110, %cst_69 [1] : vector<16x8xf32> to vector<16xf32>
    %122 = vector.shape_cast %121 : vector<16xf32> to vector<16x1xf32>
    %123 = vector.broadcast %122 : vector<16x1xf32> to vector<16x8xf32>
    %124 = arith.subf %110, %123 : vector<16x8xf32>
    %125 = math.exp %124 : vector<16x8xf32>
    %cst_70 = arith.constant dense<0.000000e+00> : vector<16xf32>
    %126 = vector.multi_reduction <add>, %125, %cst_70 [1] : vector<16x8xf32> to vector<16xf32>
    %127 = vector.shape_cast %126 : vector<16xf32> to vector<16x1xf32>
    %128 = tpu.reciprocal %127 {approx = true} : vector<16x1xf32> -> vector<16x1xf32>
    %129 = vector.broadcast %128 : vector<16x1xf32> to vector<16x8xf32>
    %130 = arith.mulf %125, %129 : vector<16x8xf32>
    %cst_71 = arith.constant dense<0.000000e+00> : vector<8x8xf32>
    %131 = tpu.matmul %120, %107, %cst_71 {dimension_numbers = #tpu.dot_dimension_numbers<[1], [0], [0], [1], [0, 0, 1, 1], [], []>} : vector<8x16xf32>, vector<16x8xf32>, vector<8x8xf32> -> vector<8x8xf32>
    %cst_72 = arith.constant dense<0.000000e+00> : vector<16x8xf32>
    %132 = tpu.matmul %130, %108, %cst_72 {dimension_numbers = #tpu.dot_dimension_numbers<[1], [0], [0], [1], [0, 0, 1, 1], [], []>} : vector<16x8xf32>, vector<8x8xf32>, vector<16x8xf32> -> vector<16x8xf32>
    %133 = vector.extract_strided_slice %64 {offsets = [0, 16], sizes = [8, 8], strides = [1, 1]} : vector<8x32xf32> to vector<8x8xf32>
    %134 = vector.extract_strided_slice %68 {offsets = [0, 16], sizes = [16, 8], strides = [1, 1]} : vector<16x32xf32> to vector<16x8xf32>
    %135 = vector.extract_strided_slice %72 {offsets = [0, 16], sizes = [16, 8], strides = [1, 1]} : vector<16x32xf32> to vector<16x8xf32>
    %136 = vector.extract_strided_slice %76 {offsets = [0, 16], sizes = [8, 8], strides = [1, 1]} : vector<8x32xf32> to vector<8x8xf32>
    "tpu.trace_start"() <{level = 10 : i32, message = "td,sd->ts"}> : () -> ()
    %cst_73 = arith.constant dense<0.000000e+00> : vector<8x16xf32>
    %137 = tpu.matmul %133, %134, %cst_73 {dimension_numbers = #tpu.dot_dimension_numbers<[1], [1], [0], [0], [0, 0, 1, 0], [], []>} : vector<8x8xf32>, vector<16x8xf32>, vector<8x16xf32> -> vector<8x16xf32>
    "tpu.trace_stop"() : () -> ()
    "tpu.trace_start"() <{level = 10 : i32, message = "sd,td->st"}> : () -> ()
    %cst_74 = arith.constant dense<0.000000e+00> : vector<16x8xf32>
    %138 = tpu.matmul %134, %133, %cst_74 {dimension_numbers = #tpu.dot_dimension_numbers<[1], [1], [0], [0], [0, 0, 1, 0], [], []>} : vector<16x8xf32>, vector<8x8xf32>, vector<16x8xf32> -> vector<16x8xf32>
    "tpu.trace_stop"() : () -> ()
    %cst_75 = arith.constant dense<0xFF800000> : vector<8xf32>
    %139 = vector.multi_reduction <maximumf>, %137, %cst_75 [1] : vector<8x16xf32> to vector<8xf32>
    %140 = vector.shape_cast %139 : vector<8xf32> to vector<8x1xf32>
    %141 = vector.broadcast %140 : vector<8x1xf32> to vector<8x16xf32>
    %142 = arith.subf %137, %141 : vector<8x16xf32>
    %143 = math.exp %142 : vector<8x16xf32>
    %cst_76 = arith.constant dense<0.000000e+00> : vector<8xf32>
    %144 = vector.multi_reduction <add>, %143, %cst_76 [1] : vector<8x16xf32> to vector<8xf32>
    %145 = vector.shape_cast %144 : vector<8xf32> to vector<8x1xf32>
    %146 = tpu.reciprocal %145 {approx = true} : vector<8x1xf32> -> vector<8x1xf32>
    %147 = vector.broadcast %146 : vector<8x1xf32> to vector<8x16xf32>
    %148 = arith.mulf %143, %147 : vector<8x16xf32>
    %cst_77 = arith.constant dense<0xFF800000> : vector<16xf32>
    %149 = vector.multi_reduction <maximumf>, %138, %cst_77 [1] : vector<16x8xf32> to vector<16xf32>
    %150 = vector.shape_cast %149 : vector<16xf32> to vector<16x1xf32>
    %151 = vector.broadcast %150 : vector<16x1xf32> to vector<16x8xf32>
    %152 = arith.subf %138, %151 : vector<16x8xf32>
    %153 = math.exp %152 : vector<16x8xf32>
    %cst_78 = arith.constant dense<0.000000e+00> : vector<16xf32>
    %154 = vector.multi_reduction <add>, %153, %cst_78 [1] : vector<16x8xf32> to vector<16xf32>
    %155 = vector.shape_cast %154 : vector<16xf32> to vector<16x1xf32>
    %156 = tpu.reciprocal %155 {approx = true} : vector<16x1xf32> -> vector<16x1xf32>
    %157 = vector.broadcast %156 : vector<16x1xf32> to vector<16x8xf32>
    %158 = arith.mulf %153, %157 : vector<16x8xf32>
    %cst_79 = arith.constant dense<0.000000e+00> : vector<8x8xf32>
    %159 = tpu.matmul %148, %135, %cst_79 {dimension_numbers = #tpu.dot_dimension_numbers<[1], [0], [0], [1], [0, 0, 1, 1], [], []>} : vector<8x16xf32>, vector<16x8xf32>, vector<8x8xf32> -> vector<8x8xf32>
    %cst_80 = arith.constant dense<0.000000e+00> : vector<16x8xf32>
    %160 = tpu.matmul %158, %136, %cst_80 {dimension_numbers = #tpu.dot_dimension_numbers<[1], [0], [0], [1], [0, 0, 1, 1], [], []>} : vector<16x8xf32>, vector<8x8xf32>, vector<16x8xf32> -> vector<16x8xf32>
    %161 = vector.extract_strided_slice %64 {offsets = [0, 24], sizes = [8, 8], strides = [1, 1]} : vector<8x32xf32> to vector<8x8xf32>
    %162 = vector.extract_strided_slice %68 {offsets = [0, 24], sizes = [16, 8], strides = [1, 1]} : vector<16x32xf32> to vector<16x8xf32>
    %163 = vector.extract_strided_slice %72 {offsets = [0, 24], sizes = [16, 8], strides = [1, 1]} : vector<16x32xf32> to vector<16x8xf32>
    %164 = vector.extract_strided_slice %76 {offsets = [0, 24], sizes = [8, 8], strides = [1, 1]} : vector<8x32xf32> to vector<8x8xf32>
    "tpu.trace_start"() <{level = 10 : i32, message = "td,sd->ts"}> : () -> ()
    %cst_81 = arith.constant dense<0.000000e+00> : vector<8x16xf32>
    %165 = tpu.matmul %161, %162, %cst_81 {dimension_numbers = #tpu.dot_dimension_numbers<[1], [1], [0], [0], [0, 0, 1, 0], [], []>} : vector<8x8xf32>, vector<16x8xf32>, vector<8x16xf32> -> vector<8x16xf32>
    "tpu.trace_stop"() : () -> ()
    "tpu.trace_start"() <{level = 10 : i32, message = "sd,td->st"}> : () -> ()
    %cst_82 = arith.constant dense<0.000000e+00> : vector<16x8xf32>
    %166 = tpu.matmul %162, %161, %cst_82 {dimension_numbers = #tpu.dot_dimension_numbers<[1], [1], [0], [0], [0, 0, 1, 0], [], []>} : vector<16x8xf32>, vector<8x8xf32>, vector<16x8xf32> -> vector<16x8xf32>
    "tpu.trace_stop"() : () -> ()
    %cst_83 = arith.constant dense<0xFF800000> : vector<8xf32>
    %167 = vector.multi_reduction <maximumf>, %165, %cst_83 [1] : vector<8x16xf32> to vector<8xf32>
    %168 = vector.shape_cast %167 : vector<8xf32> to vector<8x1xf32>
    %169 = vector.broadcast %168 : vector<8x1xf32> to vector<8x16xf32>
    %170 = arith.subf %165, %169 : vector<8x16xf32>
    %171 = math.exp %170 : vector<8x16xf32>
    %cst_84 = arith.constant dense<0.000000e+00> : vector<8xf32>
    %172 = vector.multi_reduction <add>, %171, %cst_84 [1] : vector<8x16xf32> to vector<8xf32>
    %173 = vector.shape_cast %172 : vector<8xf32> to vector<8x1xf32>
    %174 = tpu.reciprocal %173 {approx = true} : vector<8x1xf32> -> vector<8x1xf32>
    %175 = vector.broadcast %174 : vector<8x1xf32> to vector<8x16xf32>
    %176 = arith.mulf %171, %175 : vector<8x16xf32>
    %cst_85 = arith.constant dense<0xFF800000> : vector<16xf32>
    %177 = vector.multi_reduction <maximumf>, %166, %cst_85 [1] : vector<16x8xf32> to vector<16xf32>
    %178 = vector.shape_cast %177 : vector<16xf32> to vector<16x1xf32>
    %179 = vector.broadcast %178 : vector<16x1xf32> to vector<16x8xf32>
    %180 = arith.subf %166, %179 : vector<16x8xf32>
    %181 = math.exp %180 : vector<16x8xf32>
    %cst_86 = arith.constant dense<0.000000e+00> : vector<16xf32>
    %182 = vector.multi_reduction <add>, %181, %cst_86 [1] : vector<16x8xf32> to vector<16xf32>
    %183 = vector.shape_cast %182 : vector<16xf32> to vector<16x1xf32>
    %184 = tpu.reciprocal %183 {approx = true} : vector<16x1xf32> -> vector<16x1xf32>
    %185 = vector.broadcast %184 : vector<16x1xf32> to vector<16x8xf32>
    %186 = arith.mulf %181, %185 : vector<16x8xf32>
    %cst_87 = arith.constant dense<0.000000e+00> : vector<8x8xf32>
    %187 = tpu.matmul %176, %163, %cst_87 {dimension_numbers = #tpu.dot_dimension_numbers<[1], [0], [0], [1], [0, 0, 1, 1], [], []>} : vector<8x16xf32>, vector<16x8xf32>, vector<8x8xf32> -> vector<8x8xf32>
    %cst_88 = arith.constant dense<0.000000e+00> : vector<16x8xf32>
    %188 = tpu.matmul %186, %164, %cst_88 {dimension_numbers = #tpu.dot_dimension_numbers<[1], [0], [0], [1], [0, 0, 1, 1], [], []>} : vector<16x8xf32>, vector<8x8xf32>, vector<16x8xf32> -> vector<16x8xf32>
    %189 = tpu.concatenate %103, %131, %159, %187 in 1 : vector<8x8xf32>, vector<8x8xf32>, vector<8x8xf32>, vector<8x8xf32> -> vector<8x32xf32>
    %190 = tpu.concatenate %104, %132, %160, %188 in 1 : vector<16x8xf32>, vector<16x8xf32>, vector<16x8xf32>, vector<16x8xf32> -> vector<16x32xf32>
    %cst_89 = arith.constant dense<0.000000e+00> : vector<8x32xf32>
    %191 = tpu.matmul %189, %18, %cst_89 {dimension_numbers = #tpu.dot_dimension_numbers<[1], [0], [0], [1], [0, 0, 1, 1], [], []>} : vector<8x32xf32>, vector<32x32xf32>, vector<8x32xf32> -> vector<8x32xf32>
    %192 = vector.broadcast %14 : vector<1x32xf32> to vector<8x32xf32>
    %193 = arith.addf %191, %192 : vector<8x32xf32>
    %cst_90 = arith.constant dense<0.000000e+00> : vector<16x64xf32>
    %194 = tpu.matmul %190, %19, %cst_90 {dimension_numbers = #tpu.dot_dimension_numbers<[1], [0], [0], [1], [0, 0, 1, 1], [], []>} : vector<16x32xf32>, vector<32x64xf32>, vector<16x64xf32> -> vector<16x64xf32>
    %195 = vector.broadcast %15 : vector<1x64xf32> to vector<16x64xf32>
    %196 = arith.addf %194, %195 : vector<16x64xf32>
    %197 = vector.broadcast %16 : vector<1x32xf32> to vector<8x32xf32>
    %198 = arith.mulf %197, %193 : vector<8x32xf32>
    %199 = arith.addf %39, %198 : vector<8x32xf32>
    %200 = vector.broadcast %17 : vector<1x64xf32> to vector<16x64xf32>
    %201 = arith.mulf %200, %196 : vector<16x64xf32>
    %202 = arith.addf %59, %201 : vector<16x64xf32>
    %203 = vector.shape_cast %199 : vector<8x32xf32> to vector<1x8x32xf32>
    %c0_91 = arith.constant 0 : index
    %c0_92 = arith.constant 0 : index
    %c0_93 = arith.constant 0 : index
    %204 = vector.load %arg22[%c0_91, %c0_92, %c0_93] : memref<1x8x32xf32, #tpu.memory_space<vmem>>, vector<1x8x32xf32>
    tpu.vector_store %arg22[%c0_91, %c0_92, %c0_93], %203 {strides = array<i32>} : memref<1x8x32xf32, #tpu.memory_space<vmem>>, vector<1x8x32xf32>,
    %205 = vector.shape_cast %202 : vector<16x64xf32> to vector<1x16x64xf32>
    %c0_94 = arith.constant 0 : index
    %c0_95 = arith.constant 0 : index
    %c0_96 = arith.constant 0 : index
    %206 = vector.load %arg23[%c0_94, %c0_95, %c0_96] : memref<1x16x64xf32, #tpu.memory_space<vmem>>, vector<1x16x64xf32>
    tpu.vector_store %arg23[%c0_94, %c0_95, %c0_96], %205 {strides = array<i32>} : memref<1x16x64xf32, #tpu.memory_space<vmem>>, vector<1x16x64xf32>,
    return
  }
  func.func @transform_0(%arg0: i32) -> (i32, i32, i32) {
    %c0_i32 = arith.constant 0 : i32
    %c0_i32_0 = arith.constant 0 : i32
    %c0_i32_1 = arith.constant 0 : i32
    return %arg0, %c0_i32, %c0_i32_0 : i32, i32, i32
  }
  func.func @transform_1(%arg0: i32) -> (i32, i32, i32) {
    %c0_i32 = arith.constant 0 : i32
    %c0_i32_0 = arith.constant 0 : i32
    %c0_i32_1 = arith.constant 0 : i32
    return %arg0, %c0_i32, %c0_i32_0 : i32, i32, i32
  }
  func.func @transform_2(%arg0: i32) -> (i32, i32, i32) {
    %c0_i32 = arith.constant 0 : i32
    %c0_i32_0 = arith.constant 0 : i32
    %c0_i32_1 = arith.constant 0 : i32
    return %arg0, %c0_i32, %c0_i32_0 : i32, i32, i32
  }
  func.func @transform_3(%arg0: i32) -> (i32, i32) {
    %c0_i32 = arith.constant 0 : i32
    %c0_i32_0 = arith.constant 0 : i32
    %c0_i32_1 = arith.constant 0 : i32
    return %c0_i32, %c0_i32_0 : i32, i32
  }
  func.func @transform_4(%arg0: i32) -> (i32, i32) {
    %c0_i32 = arith.constant 0 : i32
    %c0_i32_0 = arith.constant 0 : i32
    %c0_i32_1 = arith.constant 0 : i32
    return %c0_i32, %c0_i32_0 : i32, i32
  }
  func.func @transform_5(%arg0: i32) -> (i32, i32) {
    %c0_i32 = arith.constant 0 : i32
    %c0_i32_0 = arith.constant 0 : i32
    %c0_i32_1 = arith.constant 0 : i32
    return %c0_i32, %c0_i32_0 : i32, i32
  }
  func.func @transform_6(%arg0: i32) -> (i32, i32) {
    %c0_i32 = arith.constant 0 : i32
    %c0_i32_0 = arith.constant 0 : i32
    %c0_i32_1 = arith.constant 0 : i32
    return %c0_i32, %c0_i32_0 : i32, i32
  }
  func.func @transform_7(%arg0: i32) -> (i32, i32) {
    %c0_i32 = arith.constant 0 : i32
    %c0_i32_0 = arith.constant 0 : i32
    %c0_i32_1 = arith.constant 0 : i32
    return %c0_i32, %c0_i32_0 : i32, i32
  }
  func.func @transform_8(%arg0: i32) -> (i32, i32) {
    %c0_i32 = arith.constant 0 : i32
    %c0_i32_0 = arith.constant 0 : i32
    %c0_i32_1 = arith.constant 0 : i32
    return %c0_i32, %c0_i32_0 : i32, i32
  }
  func.func @transform_9(%arg0: i32) -> (i32, i32) {
    %c0_i32 = arith.constant 0 : i32
    %c0_i32_0 = arith.constant 0 : i32
    %c0_i32_1 = arith.constant 0 : i32
    return %c0_i32, %c0_i32_0 : i32, i32
  }
  func.func @transform_10(%arg0: i32) -> (i32, i32) {
    %c0_i32 = arith.constant 0 : i32
    %c0_i32_0 = arith.constant 0 : i32
    %c0_i32_1 = arith.constant 0 : i32
    return %c0_i32, %c0_i32_0 : i32, i32
  }
  func.func @transform_11(%arg0: i32) -> (i32, i32) {
    %c0_i32 = arith.constant 0 : i32
    %c0_i32_0 = arith.constant 0 : i32
    %c0_i32_1 = arith.constant 0 : i32
    return %c0_i32, %c0_i32_0 : i32, i32
  }
  func.func @transform_12(%arg0: i32) -> (i32, i32) {
    %c0_i32 = arith.constant 0 : i32
    %c0_i32_0 = arith.constant 0 : i32
    %c0_i32_1 = arith.constant 0 : i32
    return %c0_i32, %c0_i32_0 : i32, i32
  }
  func.func @transform_13(%arg0: i32) -> (i32, i32) {
    %c0_i32 = arith.constant 0 : i32
    %c0_i32_0 = arith.constant 0 : i32
    %c0_i32_1 = arith.constant 0 : i32
    return %c0_i32, %c0_i32_0 : i32, i32
  }
  func.func @transform_14(%arg0: i32) -> (i32, i32) {
    %c0_i32 = arith.constant 0 : i32
    %c0_i32_0 = arith.constant 0 : i32
    %c0_i32_1 = arith.constant 0 : i32
    return %c0_i32, %c0_i32_0 : i32, i32
  }
  func.func @transform_15(%arg0: i32) -> (i32, i32) {
    %c0_i32 = arith.constant 0 : i32
    %c0_i32_0 = arith.constant 0 : i32
    %c0_i32_1 = arith.constant 0 : i32
    return %c0_i32, %c0_i32_0 : i32, i32
  }
  func.func @transform_16(%arg0: i32) -> (i32, i32) {
    %c0_i32 = arith.constant 0 : i32
    %c0_i32_0 = arith.constant 0 : i32
    %c0_i32_1 = arith.constant 0 : i32
    return %c0_i32, %c0_i32_0 : i32, i32
  }
  func.func @transform_17(%arg0: i32) -> (i32, i32) {
    %c0_i32 = arith.constant 0 : i32
    %c0_i32_0 = arith.constant 0 : i32
    %c0_i32_1 = arith.constant 0 : i32
    return %c0_i32, %c0_i32_0 : i32, i32
  }
  func.func @transform_18(%arg0: i32) -> (i32, i32) {
    %c0_i32 = arith.constant 0 : i32
    %c0_i32_0 = arith.constant 0 : i32
    %c0_i32_1 = arith.constant 0 : i32
    return %c0_i32, %c0_i32_0 : i32, i32
  }
  func.func @transform_19(%arg0: i32) -> (i32, i32) {
    %c0_i32 = arith.constant 0 : i32
    %c0_i32_0 = arith.constant 0 : i32
    %c0_i32_1 = arith.constant 0 : i32
    return %c0_i32, %c0_i32_0 : i32, i32
  }
  func.func @transform_20(%arg0: i32) -> (i32, i32) {
    %c0_i32 = arith.constant 0 : i32
    %c0_i32_0 = arith.constant 0 : i32
    %c0_i32_1 = arith.constant 0 : i32
    return %c0_i32, %c0_i32_0 : i32, i32
  }
  func.func @transform_21(%arg0: i32) -> (i32, i32, i32) {
    %c0_i32 = arith.constant 0 : i32
    %c0_i32_0 = arith.constant 0 : i32
    %c0_i32_1 = arith.constant 0 : i32
    return %arg0, %c0_i32, %c0_i32_0 : i32, i32, i32
  }
  func.func @transform_22(%arg0: i32) -> (i32, i32, i32) {
    %c0_i32 = arith.constant 0 : i32
    %c0_i32_0 = arith.constant 0 : i32
    %c0_i32_1 = arith.constant 0 : i32
    return %arg0, %c0_i32, %c0_i32_0 : i32, i32, i32
  }
}

</mosaic_0001>

<llo_original>
// kernel: tpu_custom_call.1
$region0: #{tpu_custom_call.1}
  #allocation0 [shape = 'u32[]', space=smem, size = 0x4, offset = 0x4, fixed_abs, tag = 'smem constant byte address 0x4 - core index']
  #allocation1 [shape = 'u32[144,128]{1,0:T(1,128)}', space=vmem, size = 0x12000, scoped, tag = 'internal scratch']
  %s0 = inlined_call_operand.hbm [shape: f32[2,8,32], index: 0, kind: input, shape index: {}]
  %s1 = inlined_call_operand.vmem [shape: f32[2,16,64], index: 1, kind: input, shape index: {}]
  %s2 = inlined_call_operand.hbm [shape: f32[2,8,32], index: 2, kind: input, shape index: {}]
  %s3 = inlined_call_operand.vmem [shape: f32[1,32], index: 3, kind: input, shape index: {}]
  %s4 = inlined_call_operand.vmem [shape: f32[1,32], index: 4, kind: input, shape index: {}]
  %s5 = inlined_call_operand.vmem [shape: f32[1,64], index: 5, kind: input, shape index: {}]
  %s6 = inlined_call_operand.vmem [shape: f32[1,64], index: 6, kind: input, shape index: {}]
  %s7 = inlined_call_operand.vmem [shape: f32[32,32], index: 7, kind: input, shape index: {}]
  %s8 = inlined_call_operand.vmem [shape: f32[1,32], index: 8, kind: input, shape index: {}]
  %s9 = inlined_call_operand.vmem [shape: f32[64,32], index: 9, kind: input, shape index: {}]
  %s10 = inlined_call_operand.vmem [shape: f32[1,32], index: 10, kind: input, shape index: {}]
  %s11 = inlined_call_operand.vmem [shape: f32[64,32], index: 11, kind: input, shape index: {}]
  %s12 = inlined_call_operand.vmem [shape: f32[1,32], index: 12, kind: input, shape index: {}]
  %s13 = inlined_call_operand.vmem [shape: f32[32,32], index: 13, kind: input, shape index: {}]
  %s14 = inlined_call_operand.vmem [shape: f32[1,32], index: 14, kind: input, shape index: {}]
  %s15 = inlined_call_operand.vmem [shape: f32[32,32], index: 15, kind: input, shape index: {}]
  %s16 = inlined_call_operand.vmem [shape: f32[1,32], index: 16, kind: input, shape index: {}]
  %s17 = inlined_call_operand.vmem [shape: f32[32,64], index: 17, kind: input, shape index: {}]
  %s18 = inlined_call_operand.vmem [shape: f32[1,64], index: 18, kind: input, shape index: {}]
  %s19 = inlined_call_operand.vmem [shape: f32[1,32], index: 19, kind: input, shape index: {}]
  %s20 = inlined_call_operand.vmem [shape: f32[1,64], index: 20, kind: input, shape index: {}]
  %s21 = inlined_call_operand.hbm [shape: f32[2,8,32], index: 21, kind: output, shape index: {0}]
  %s22 = inlined_call_operand.hbm [shape: f32[2,16,64], index: 22, kind: output, shape index: {1}]
  %23 = xla_tuple %s21, %s22
  %s24 = sld [smem:[#allocation0]]
  $region133: #{tpu_custom_call.1} parent=0
    _
  %s26 = ssub.s32 1, %s24
  %s27 = scalar_select 0, %s26, %s24
  $region1: #{tpu_custom_call.1} parent=0
    #allocation2 [shape = 'u8[8192]{0}', space=vmem, size = 0x2000, scoped, tag = 'input window, operand 0']
    #allocation3 [shape = 's32[2]{0}', space=sflag, size = 0x8, scoped, tag = 'scoped memory for tpu_custom_call.1']
    #allocation4 [shape = 's32[2]{0}', space=sflag, size = 0x8, scoped, tag = 'scoped memory for tpu_custom_call.1']
    #allocation5 [shape = 'u8[8192]{0}', space=vmem, size = 0x2000, scoped, tag = 'input window, operand 2']
    #allocation6 [shape = 's32[2]{0}', space=sflag, size = 0x8, scoped, tag = 'scoped memory for tpu_custom_call.1']
    #allocation7 [shape = 'u8[8192]{0}', space=vmem, size = 0x2000, scoped, tag = 'output window, operand 0']
    #allocation8 [shape = 'u8[16384]{0}', space=vmem, size = 0x4000, scoped, tag = 'output window, operand 1']
    #allocation9 [shape = 's32[2]{0}', space=sflag, size = 0x8, scoped, tag = 'scoped memory for tpu_custom_call.1']
    %28 = vsyncpa [#allocation3], 0
    %s29 = scalar_lea.sflag [#allocation3], 1
    %30 = vsyncpa %s29, 0
    %31 = vsyncpa [#allocation6], 0
    %s32 = scalar_lea.sflag [#allocation6], 1
    %33 = vsyncpa %s32, 0
    %34 = vsyncpa [#allocation4], 0
    %s35 = scalar_lea.sflag [#allocation4], 1
    %36 = vsyncpa %s35, 0
    %37 = vsyncpa [#allocation9], 0
    %s38 = scalar_lea.sflag [#allocation9], 1
    %39 = vsyncpa %s38, 0
    loop: start=0, step=1, limit=4
    $region2: #{tpu_custom_call.1} parent=1 // loop_pre_header
      _
    $region3: #{tpu_custom_call.1} parent=1 // loop_header
      %s41 = sphi 0, %s45
      %p42 = scmp.ge.s32.totalorder %s41, 4
      %s51 = sphi 0, %s53
      %s54 = sphi 0, %s51
      %s55 = sphi 0, %s54
      %s71 = sphi 0, %s55
      %s77 = sphi 0, %s79
      %s80 = sphi 0, %s77
      %s81 = sphi 0, %s80
      %s97 = sphi 0, %s81
      %s103 = sphi 0, %s105
      %s106 = sphi 0, %s103
      %s107 = sphi 0, %s106
      %s123 = sphi 0, %s107
      %s127 = sphi 0, %s127
      %s129 = sphi 0, %s127
      %s130 = sphi 0, %s129
      %s144 = sphi 0, %s130
      %s148 = sphi 0, %s148
      %s150 = sphi 0, %s148
      %s151 = sphi 0, %s150
      %s165 = sphi 0, %s151
      %s169 = sphi 0, %s169
      %s171 = sphi 0, %s169
      %s172 = sphi 0, %s171
      %s186 = sphi 0, %s172
      %s190 = sphi 0, %s190
      %s192 = sphi 0, %s190
      %s193 = sphi 0, %s192
      %s207 = sphi 0, %s193
      %s211 = sphi 0, %s211
      %s213 = sphi 0, %s211
      %s214 = sphi 0, %s213
      %s228 = sphi 0, %s214
      %s232 = sphi 0, %s232
      %s234 = sphi 0, %s232
      %s235 = sphi 0, %s234
      %s249 = sphi 0, %s235
      %s253 = sphi 0, %s253
      %s255 = sphi 0, %s253
      %s256 = sphi 0, %s255
      %s270 = sphi 0, %s256
      %s274 = sphi 0, %s274
      %s276 = sphi 0, %s274
      %s277 = sphi 0, %s276
      %s291 = sphi 0, %s277
      %s295 = sphi 0, %s295
      %s297 = sphi 0, %s295
      %s298 = sphi 0, %s297
      %s312 = sphi 0, %s298
      %s316 = sphi 0, %s316
      %s318 = sphi 0, %s316
      %s319 = sphi 0, %s318
      %s333 = sphi 0, %s319
      %s337 = sphi 0, %s337
      %s339 = sphi 0, %s337
      %s340 = sphi 0, %s339
      %s354 = sphi 0, %s340
      %s358 = sphi 0, %s358
      %s360 = sphi 0, %s358
      %s361 = sphi 0, %s360
      %s375 = sphi 0, %s361
      %s379 = sphi 0, %s379
      %s381 = sphi 0, %s379
      %s382 = sphi 0, %s381
      %s396 = sphi 0, %s382
      %s400 = sphi 0, %s400
      %s402 = sphi 0, %s400
      %s403 = sphi 0, %s402
      %s417 = sphi 0, %s403
      %s421 = sphi 0, %s421
      %s423 = sphi 0, %s421
      %s424 = sphi 0, %s423
      %s438 = sphi 0, %s424
      %s442 = sphi 0, %s442
      %s444 = sphi 0, %s442
      %s445 = sphi 0, %s444
      %s459 = sphi 0, %s445
      %s463 = sphi 0, %s463
      %s465 = sphi 0, %s463
      %s466 = sphi 0, %s465
      %s480 = sphi 0, %s466
      %s484 = sphi 0, %s484
      %s486 = sphi 0, %s484
      %s487 = sphi 0, %s486
      %s501 = sphi 0, %s487
      %s507 = sphi 0, %s509
      %s510 = sphi 0, %s507
      %s511 = sphi 0, %s510
      %s527 = sphi 0, %s511
      %s533 = sphi 0, %s535
      %s536 = sphi 0, %s533
      %s537 = sphi 0, %s536
      %s553 = sphi 0, %s537
    $region4: #{tpu_custom_call.1} parent=1 // loop_header_branch
      %44 = sbr.rel (%p42) target = $region8
    $region5: #{tpu_custom_call.1} parent=1 // loop_body
      %s46 = ssub.s32 %s41, 1
      %s47 = ssub.s32 %s41, 2
      %s48 = sadd.s32 %s41, 1
      %s49 = ssub.s32 %s41, %s48
      %p50 = scmp.eq.s32.totalorder %s49, 0
      %s52 = sadd.s32 %s51, 1
      %s53 = scalar_select %p50, %s51, %s52
      %p56 = pneg %p50
      %p57 = scmp.eq.s32.totalorder %s41, 1
      %p58 = por %p56, %p57
      %p59 = scmp.ne.s32.totalorder %s51, %s54
      %p60 = scmp.eq.s32.totalorder %s41, 0
      %p61 = por %p59, %p60
      %p62 = scmp.ne.s32.totalorder %s51, %s54
      %p63 = scmp.eq.s32.totalorder %s46, 1
      %p64 = por %p62, %p63
      %p65 = scmp.ne.s32.totalorder %s54, %s55
      %p66 = scmp.eq.s32.totalorder %s46, 0
      %p67 = por %p65, %p66
      %p68 = scmp.ne.s32.totalorder %s54, %s55
      %p69 = scmp.eq.s32.totalorder %s47, 1
      %p70 = por %p68, %p69
      %p72 = scmp.ne.s32.totalorder %s55, %s71
      %p73 = scmp.eq.s32.totalorder %s47, 0
      %p74 = por %p72, %p73
      %s75 = ssub.s32 %s41, %s48
      %p76 = scmp.eq.s32.totalorder %s75, 0
      %s78 = sadd.s32 %s77, 1
      %s79 = scalar_select %p76, %s77, %s78
      %p82 = pneg %p76
      %p83 = scmp.eq.s32.totalorder %s41, 1
      %p84 = por %p82, %p83
      %p85 = scmp.ne.s32.totalorder %s77, %s80
      %p86 = scmp.eq.s32.totalorder %s41, 0
      %p87 = por %p85, %p86
      %p88 = scmp.ne.s32.totalorder %s77, %s80
      %p89 = scmp.eq.s32.totalorder %s46, 1
      %p90 = por %p88, %p89
      %p91 = scmp.ne.s32.totalorder %s80, %s81
      %p92 = scmp.eq.s32.totalorder %s46, 0
      %p93 = por %p91, %p92
      %p94 = scmp.ne.s32.totalorder %s80, %s81
      %p95 = scmp.eq.s32.totalorder %s47, 1
      %p96 = por %p94, %p95
      %p98 = scmp.ne.s32.totalorder %s81, %s97
      %p99 = scmp.eq.s32.totalorder %s47, 0
      %p100 = por %p98, %p99
      %s101 = ssub.s32 %s41, %s48
      %p102 = scmp.eq.s32.totalorder %s101, 0
      %s104 = sadd.s32 %s103, 1
      %s105 = scalar_select %p102, %s103, %s104
      %p108 = pneg %p102
      %p109 = scmp.eq.s32.totalorder %s41, 1
      %p110 = por %p108, %p109
      %p111 = scmp.ne.s32.totalorder %s103, %s106
      %p112 = scmp.eq.s32.totalorder %s41, 0
      %p113 = por %p111, %p112
      %p114 = scmp.ne.s32.totalorder %s103, %s106
      %p115 = scmp.eq.s32.totalorder %s46, 1
      %p116 = por %p114, %p115
      %p117 = scmp.ne.s32.totalorder %s106, %s107
      %p118 = scmp.eq.s32.totalorder %s46, 0
      %p119 = por %p117, %p118
      %p120 = scmp.ne.s32.totalorder %s106, %s107
      %p121 = scmp.eq.s32.totalorder %s47, 1
      %p122 = por %p120, %p121
      %p124 = scmp.ne.s32.totalorder %s107, %s123
      %p125 = scmp.eq.s32.totalorder %s47, 0
      %p126 = por %p124, %p125
      %s128 = sadd.s32 %s127, 1
      %p131 = scmp.eq.s32.totalorder %s41, 1
      %p132 = scmp.ne.s32.totalorder %s127, %s129
      %p133 = scmp.eq.s32.totalorder %s41, 0
      %p134 = por %p132, %p133
      %p135 = scmp.ne.s32.totalorder %s127, %s129
      %p136 = scmp.eq.s32.totalorder %s46, 1
      %p137 = por %p135, %p136
      %p138 = scmp.ne.s32.totalorder %s129, %s130
      %p139 = scmp.eq.s32.totalorder %s46, 0
      %p140 = por %p138, %p139
      %p141 = scmp.ne.s32.totalorder %s129, %s130
      %p142 = scmp.eq.s32.totalorder %s47, 1
      %p143 = por %p141, %p142
      %p145 = scmp.ne.s32.totalorder %s130, %s144
      %p146 = scmp.eq.s32.totalorder %s47, 0
      %p147 = por %p145, %p146
      %s149 = sadd.s32 %s148, 1
      %p152 = scmp.eq.s32.totalorder %s41, 1
      %p153 = scmp.ne.s32.totalorder %s148, %s150
      %p154 = scmp.eq.s32.totalorder %s41, 0
      %p155 = por %p153, %p154
      %p156 = scmp.ne.s32.totalorder %s148, %s150
      %p157 = scmp.eq.s32.totalorder %s46, 1
      %p158 = por %p156, %p157
      %p159 = scmp.ne.s32.totalorder %s150, %s151
      %p160 = scmp.eq.s32.totalorder %s46, 0
      %p161 = por %p159, %p160
      %p162 = scmp.ne.s32.totalorder %s150, %s151
      %p163 = scmp.eq.s32.totalorder %s47, 1
      %p164 = por %p162, %p163
      %p166 = scmp.ne.s32.totalorder %s151, %s165
      %p167 = scmp.eq.s32.totalorder %s47, 0
      %p168 = por %p166, %p167
      %s170 = sadd.s32 %s169, 1
      %p173 = scmp.eq.s32.totalorder %s41, 1
      %p174 = scmp.ne.s32.totalorder %s169, %s171
      %p175 = scmp.eq.s32.totalorder %s41, 0
      %p176 = por %p174, %p175
      %p177 = scmp.ne.s32.totalorder %s169, %s171
      %p178 = scmp.eq.s32.totalorder %s46, 1
      %p179 = por %p177, %p178
      %p180 = scmp.ne.s32.totalorder %s171, %s172
      %p181 = scmp.eq.s32.totalorder %s46, 0
      %p182 = por %p180, %p181
      %p183 = scmp.ne.s32.totalorder %s171, %s172
      %p184 = scmp.eq.s32.totalorder %s47, 1
      %p185 = por %p183, %p184
      %p187 = scmp.ne.s32.totalorder %s172, %s186
      %p188 = scmp.eq.s32.totalorder %s47, 0
      %p189 = por %p187, %p188
      %s191 = sadd.s32 %s190, 1
      %p194 = scmp.eq.s32.totalorder %s41, 1
      %p195 = scmp.ne.s32.totalorder %s190, %s192
      %p196 = scmp.eq.s32.totalorder %s41, 0
      %p197 = por %p195, %p196
      %p198 = scmp.ne.s32.totalorder %s190, %s192
      %p199 = scmp.eq.s32.totalorder %s46, 1
      %p200 = por %p198, %p199
      %p201 = scmp.ne.s32.totalorder %s192, %s193
      %p202 = scmp.eq.s32.totalorder %s46, 0
      %p203 = por %p201, %p202
      %p204 = scmp.ne.s32.totalorder %s192, %s193
      %p205 = scmp.eq.s32.totalorder %s47, 1
      %p206 = por %p204, %p205
      %p208 = scmp.ne.s32.totalorder %s193, %s207
      %p209 = scmp.eq.s32.totalorder %s47, 0
      %p210 = por %p208, %p209
      %s212 = sadd.s32 %s211, 1
      %p215 = scmp.eq.s32.totalorder %s41, 1
      %p216 = scmp.ne.s32.totalorder %s211, %s213
      %p217 = scmp.eq.s32.totalorder %s41, 0
      %p218 = por %p216, %p217
      %p219 = scmp.ne.s32.totalorder %s211, %s213
      %p220 = scmp.eq.s32.totalorder %s46, 1
      %p221 = por %p219, %p220
      %p222 = scmp.ne.s32.totalorder %s213, %s214
      %p223 = scmp.eq.s32.totalorder %s46, 0
      %p224 = por %p222, %p223
      %p225 = scmp.ne.s32.totalorder %s213, %s214
      %p226 = scmp.eq.s32.totalorder %s47, 1
      %p227 = por %p225, %p226
      %p229 = scmp.ne.s32.totalorder %s214, %s228
      %p230 = scmp.eq.s32.totalorder %s47, 0
      %p231 = por %p229, %p230
      %s233 = sadd.s32 %s232, 1
      %p236 = scmp.eq.s32.totalorder %s41, 1
      %p237 = scmp.ne.s32.totalorder %s232, %s234
      %p238 = scmp.eq.s32.totalorder %s41, 0
      %p239 = por %p237, %p238
      %p240 = scmp.ne.s32.totalorder %s232, %s234
      %p241 = scmp.eq.s32.totalorder %s46, 1
      %p242 = por %p240, %p241
      %p243 = scmp.ne.s32.totalorder %s234, %s235
      %p244 = scmp.eq.s32.totalorder %s46, 0
      %p245 = por %p243, %p244
      %p246 = scmp.ne.s32.totalorder %s234, %s235
      %p247 = scmp.eq.s32.totalorder %s47, 1
      %p248 = por %p246, %p247
      %p250 = scmp.ne.s32.totalorder %s235, %s249
      %p251 = scmp.eq.s32.totalorder %s47, 0
      %p252 = por %p250, %p251
      %s254 = sadd.s32 %s253, 1
      %p257 = scmp.eq.s32.totalorder %s41, 1
      %p258 = scmp.ne.s32.totalorder %s253, %s255
      %p259 = scmp.eq.s32.totalorder %s41, 0
      %p260 = por %p258, %p259
      %p261 = scmp.ne.s32.totalorder %s253, %s255
      %p262 = scmp.eq.s32.totalorder %s46, 1
      %p263 = por %p261, %p262
      %p264 = scmp.ne.s32.totalorder %s255, %s256
      %p265 = scmp.eq.s32.totalorder %s46, 0
      %p266 = por %p264, %p265
      %p267 = scmp.ne.s32.totalorder %s255, %s256
      %p268 = scmp.eq.s32.totalorder %s47, 1
      %p269 = por %p267, %p268
      %p271 = scmp.ne.s32.totalorder %s256, %s270
      %p272 = scmp.eq.s32.totalorder %s47, 0
      %p273 = por %p271, %p272
      %s275 = sadd.s32 %s274, 1
      %p278 = scmp.eq.s32.totalorder %s41, 1
      %p279 = scmp.ne.s32.totalorder %s274, %s276
      %p280 = scmp.eq.s32.totalorder %s41, 0
      %p281 = por %p279, %p280
      %p282 = scmp.ne.s32.totalorder %s274, %s276
      %p283 = scmp.eq.s32.totalorder %s46, 1
      %p284 = por %p282, %p283
      %p285 = scmp.ne.s32.totalorder %s276, %s277
      %p286 = scmp.eq.s32.totalorder %s46, 0
      %p287 = por %p285, %p286
      %p288 = scmp.ne.s32.totalorder %s276, %s277
      %p289 = scmp.eq.s32.totalorder %s47, 1
      %p290 = por %p288, %p289
      %p292 = scmp.ne.s32.totalorder %s277, %s291
      %p293 = scmp.eq.s32.totalorder %s47, 0
      %p294 = por %p292, %p293
      %s296 = sadd.s32 %s295, 1
      %p299 = scmp.eq.s32.totalorder %s41, 1
      %p300 = scmp.ne.s32.totalorder %s295, %s297
      %p301 = scmp.eq.s32.totalorder %s41, 0
      %p302 = por %p300, %p301
      %p303 = scmp.ne.s32.totalorder %s295, %s297
      %p304 = scmp.eq.s32.totalorder %s46, 1
      %p305 = por %p303, %p304
      %p306 = scmp.ne.s32.totalorder %s297, %s298
      %p307 = scmp.eq.s32.totalorder %s46, 0
      %p308 = por %p306, %p307
      %p309 = scmp.ne.s32.totalorder %s297, %s298
      %p310 = scmp.eq.s32.totalorder %s47, 1
      %p311 = por %p309, %p310
      %p313 = scmp.ne.s32.totalorder %s298, %s312
      %p314 = scmp.eq.s32.totalorder %s47, 0
      %p315 = por %p313, %p314
      %s317 = sadd.s32 %s316, 1
      %p320 = scmp.eq.s32.totalorder %s41, 1
      %p321 = scmp.ne.s32.totalorder %s316, %s318
      %p322 = scmp.eq.s32.totalorder %s41, 0
      %p323 = por %p321, %p322
      %p324 = scmp.ne.s32.totalorder %s316, %s318
      %p325 = scmp.eq.s32.totalorder %s46, 1
      %p326 = por %p324, %p325
      %p327 = scmp.ne.s32.totalorder %s318, %s319
      %p328 = scmp.eq.s32.totalorder %s46, 0
      %p329 = por %p327, %p328
      %p330 = scmp.ne.s32.totalorder %s318, %s319
      %p331 = scmp.eq.s32.totalorder %s47, 1
      %p332 = por %p330, %p331
      %p334 = scmp.ne.s32.totalorder %s319, %s333
      %p335 = scmp.eq.s32.totalorder %s47, 0
      %p336 = por %p334, %p335
      %s338 = sadd.s32 %s337, 1
      %p341 = scmp.eq.s32.totalorder %s41, 1
      %p342 = scmp.ne.s32.totalorder %s337, %s339
      %p343 = scmp.eq.s32.totalorder %s41, 0
      %p344 = por %p342, %p343
      %p345 = scmp.ne.s32.totalorder %s337, %s339
      %p346 = scmp.eq.s32.totalorder %s46, 1
      %p347 = por %p345, %p346
      %p348 = scmp.ne.s32.totalorder %s339, %s340
      %p349 = scmp.eq.s32.totalorder %s46, 0
      %p350 = por %p348, %p349
      %p351 = scmp.ne.s32.totalorder %s339, %s340
      %p352 = scmp.eq.s32.totalorder %s47, 1
      %p353 = por %p351, %p352
      %p355 = scmp.ne.s32.totalorder %s340, %s354
      %p356 = scmp.eq.s32.totalorder %s47, 0
      %p357 = por %p355, %p356
      %s359 = sadd.s32 %s358, 1
      %p362 = scmp.eq.s32.totalorder %s41, 1
      %p363 = scmp.ne.s32.totalorder %s358, %s360
      %p364 = scmp.eq.s32.totalorder %s41, 0
      %p365 = por %p363, %p364
      %p366 = scmp.ne.s32.totalorder %s358, %s360
      %p367 = scmp.eq.s32.totalorder %s46, 1
      %p368 = por %p366, %p367
      %p369 = scmp.ne.s32.totalorder %s360, %s361
      %p370 = scmp.eq.s32.totalorder %s46, 0
      %p371 = por %p369, %p370
      %p372 = scmp.ne.s32.totalorder %s360, %s361
      %p373 = scmp.eq.s32.totalorder %s47, 1
      %p374 = por %p372, %p373
      %p376 = scmp.ne.s32.totalorder %s361, %s375
      %p377 = scmp.eq.s32.totalorder %s47, 0
      %p378 = por %p376, %p377
      %s380 = sadd.s32 %s379, 1
      %p383 = scmp.eq.s32.totalorder %s41, 1
      %p384 = scmp.ne.s32.totalorder %s379, %s381
      %p385 = scmp.eq.s32.totalorder %s41, 0
      %p386 = por %p384, %p385
      %p387 = scmp.ne.s32.totalorder %s379, %s381
      %p388 = scmp.eq.s32.totalorder %s46, 1
      %p389 = por %p387, %p388
      %p390 = scmp.ne.s32.totalorder %s381, %s382
      %p391 = scmp.eq.s32.totalorder %s46, 0
      %p392 = por %p390, %p391
      %p393 = scmp.ne.s32.totalorder %s381, %s382
      %p394 = scmp.eq.s32.totalorder %s47, 1
      %p395 = por %p393, %p394
      %p397 = scmp.ne.s32.totalorder %s382, %s396
      %p398 = scmp.eq.s32.totalorder %s47, 0
      %p399 = por %p397, %p398
      %s401 = sadd.s32 %s400, 1
      %p404 = scmp.eq.s32.totalorder %s41, 1
      %p405 = scmp.ne.s32.totalorder %s400, %s402
      %p406 = scmp.eq.s32.totalorder %s41, 0
      %p407 = por %p405, %p406
      %p408 = scmp.ne.s32.totalorder %s400, %s402
      %p409 = scmp.eq.s32.totalorder %s46, 1
      %p410 = por %p408, %p409
      %p411 = scmp.ne.s32.totalorder %s402, %s403
      %p412 = scmp.eq.s32.totalorder %s46, 0
      %p413 = por %p411, %p412
      %p414 = scmp.ne.s32.totalorder %s402, %s403
      %p415 = scmp.eq.s32.totalorder %s47, 1
      %p416 = por %p414, %p415
      %p418 = scmp.ne.s32.totalorder %s403, %s417
      %p419 = scmp.eq.s32.totalorder %s47, 0
      %p420 = por %p418, %p419
      %s422 = sadd.s32 %s421, 1
      %p425 = scmp.eq.s32.totalorder %s41, 1
      %p426 = scmp.ne.s32.totalorder %s421, %s423
      %p427 = scmp.eq.s32.totalorder %s41, 0
      %p428 = por %p426, %p427
      %p429 = scmp.ne.s32.totalorder %s421, %s423
      %p430 = scmp.eq.s32.totalorder %s46, 1
      %p431 = por %p429, %p430
      %p432 = scmp.ne.s32.totalorder %s423, %s424
      %p433 = scmp.eq.s32.totalorder %s46, 0
      %p434 = por %p432, %p433
      %p435 = scmp.ne.s32.totalorder %s423, %s424
      %p436 = scmp.eq.s32.totalorder %s47, 1
      %p437 = por %p435, %p436
      %p439 = scmp.ne.s32.totalorder %s424, %s438
      %p440 = scmp.eq.s32.totalorder %s47, 0
      %p441 = por %p439, %p440
      %s443 = sadd.s32 %s442, 1
      %p446 = scmp.eq.s32.totalorder %s41, 1
      %p447 = scmp.ne.s32.totalorder %s442, %s444
      %p448 = scmp.eq.s32.totalorder %s41, 0
      %p449 = por %p447, %p448
      %p450 = scmp.ne.s32.totalorder %s442, %s444
      %p451 = scmp.eq.s32.totalorder %s46, 1
      %p452 = por %p450, %p451
      %p453 = scmp.ne.s32.totalorder %s444, %s445
      %p454 = scmp.eq.s32.totalorder %s46, 0
      %p455 = por %p453, %p454
      %p456 = scmp.ne.s32.totalorder %s444, %s445
      %p457 = scmp.eq.s32.totalorder %s47, 1
      %p458 = por %p456, %p457
      %p460 = scmp.ne.s32.totalorder %s445, %s459
      %p461 = scmp.eq.s32.totalorder %s47, 0
      %p462 = por %p460, %p461
      %s464 = sadd.s32 %s463, 1
      %p467 = scmp.eq.s32.totalorder %s41, 1
      %p468 = scmp.ne.s32.totalorder %s463, %s465
      %p469 = scmp.eq.s32.totalorder %s41, 0
      %p470 = por %p468, %p469
      %p471 = scmp.ne.s32.totalorder %s463, %s465
      %p472 = scmp.eq.s32.totalorder %s46, 1
      %p473 = por %p471, %p472
      %p474 = scmp.ne.s32.totalorder %s465, %s466
      %p475 = scmp.eq.s32.totalorder %s46, 0
      %p476 = por %p474, %p475
      %p477 = scmp.ne.s32.totalorder %s465, %s466
      %p478 = scmp.eq.s32.totalorder %s47, 1
      %p479 = por %p477, %p478
      %p481 = scmp.ne.s32.totalorder %s466, %s480
      %p482 = scmp.eq.s32.totalorder %s47, 0
      %p483 = por %p481, %p482
      %s485 = sadd.s32 %s484, 1
      %p488 = scmp.eq.s32.totalorder %s41, 1
      %p489 = scmp.ne.s32.totalorder %s484, %s486
      %p490 = scmp.eq.s32.totalorder %s41, 0
      %p491 = por %p489, %p490
      %p492 = scmp.ne.s32.totalorder %s484, %s486
      %p493 = scmp.eq.s32.totalorder %s46, 1
      %p494 = por %p492, %p493
      %p495 = scmp.ne.s32.totalorder %s486, %s487
      %p496 = scmp.eq.s32.totalorder %s46, 0
      %p497 = por %p495, %p496
      %p498 = scmp.ne.s32.totalorder %s486, %s487
      %p499 = scmp.eq.s32.totalorder %s47, 1
      %p500 = por %p498, %p499
      %p502 = scmp.ne.s32.totalorder %s487, %s501
      %p503 = scmp.eq.s32.totalorder %s47, 0
      %p504 = por %p502, %p503
      %s505 = ssub.s32 %s41, %s48
      %p506 = scmp.eq.s32.totalorder %s505, 0
      %s508 = sadd.s32 %s507, 1
      %s509 = scalar_select %p506, %s507, %s508
      %p512 = pneg %p506
      %p513 = scmp.eq.s32.totalorder %s41, 1
      %p514 = por %p512, %p513
      %p515 = scmp.ne.s32.totalorder %s507, %s510
      %p516 = scmp.eq.s32.totalorder %s41, 0
      %p517 = por %p515, %p516
      %p518 = scmp.ne.s32.totalorder %s507, %s510
      %p519 = scmp.eq.s32.totalorder %s46, 1
      %p520 = por %p518, %p519
      %p521 = scmp.ne.s32.totalorder %s510, %s511
      %p522 = scmp.eq.s32.totalorder %s46, 0
      %p523 = por %p521, %p522
      %p524 = scmp.ne.s32.totalorder %s510, %s511
      %p525 = scmp.eq.s32.totalorder %s47, 1
      %p526 = por %p524, %p525
      %p528 = scmp.ne.s32.totalorder %s511, %s527
      %p529 = scmp.eq.s32.totalorder %s47, 0
      %p530 = por %p528, %p529
      %s531 = ssub.s32 %s41, %s48
      %p532 = scmp.eq.s32.totalorder %s531, 0
      %s534 = sadd.s32 %s533, 1
      %s535 = scalar_select %p532, %s533, %s534
      %p538 = pneg %p532
      %p539 = scmp.eq.s32.totalorder %s41, 1
      %p540 = por %p538, %p539
      %p541 = scmp.ne.s32.totalorder %s533, %s536
      %p542 = scmp.eq.s32.totalorder %s41, 0
      %p543 = por %p541, %p542
      %p544 = scmp.ne.s32.totalorder %s533, %s536
      %p545 = scmp.eq.s32.totalorder %s46, 1
      %p546 = por %p544, %p545
      %p547 = scmp.ne.s32.totalorder %s536, %s537
      %p548 = scmp.eq.s32.totalorder %s46, 0
      %p549 = por %p547, %p548
      %p550 = scmp.ne.s32.totalorder %s536, %s537
      %p551 = scmp.eq.s32.totalorder %s47, 1
      %p552 = por %p550, %p551
      %p554 = scmp.ne.s32.totalorder %s537, %s553
      %p555 = scmp.eq.s32.totalorder %s47, 0
      %p556 = por %p554, %p555
      %p557 = scmp.le.s32.totalorder 1, %s41
      %p558 = scmp.lt.s32.totalorder %s41, 3
      %p559 = pnand %p557, %p558
      %p560 = pneg %p559
      // Predicated region
      $region9: #{tpu_custom_call.1} parent=5 // pred_check
        _
      $region10: #{tpu_custom_call.1} parent=5 // pred_check_branch
        %562 = sbr.rel (%p559) target = $region12
      $region11: #{tpu_custom_call.1} parent=5 // pred_region
        %s563 = ssub.s32 %s41, 1
        // Predicated region
        $region13: #{tpu_custom_call.1} parent=11 // pred_check
          %p564 = pneg %p140
        $region14: #{tpu_custom_call.1} parent=11 // pred_check_branch
          %566 = sbr.rel (%p564) target = $region16
        $region15: #{tpu_custom_call.1} parent=11 // pred_region
          _
        $region16: #{tpu_custom_call.1} parent=11 // pred_fallthru
          _
        // Predicated region
        $region17: #{tpu_custom_call.1} parent=11 // pred_check
          %p567 = pneg %p161
        $region18: #{tpu_custom_call.1} parent=11 // pred_check_branch
          %569 = sbr.rel (%p567) target = $region20
        $region19: #{tpu_custom_call.1} parent=11 // pred_region
          _
        $region20: #{tpu_custom_call.1} parent=11 // pred_fallthru
          _
        // Predicated region
        $region21: #{tpu_custom_call.1} parent=11 // pred_check
          %p570 = pneg %p182
        $region22: #{tpu_custom_call.1} parent=11 // pred_check_branch
          %572 = sbr.rel (%p570) target = $region24
        $region23: #{tpu_custom_call.1} parent=11 // pred_region
          _
        $region24: #{tpu_custom_call.1} parent=11 // pred_fallthru
          _
        // Predicated region
        $region25: #{tpu_custom_call.1} parent=11 // pred_check
          %p573 = pneg %p203
        $region26: #{tpu_custom_call.1} parent=11 // pred_check_branch
          %575 = sbr.rel (%p573) target = $region28
        $region27: #{tpu_custom_call.1} parent=11 // pred_region
          _
        $region28: #{tpu_custom_call.1} parent=11 // pred_fallthru
          _
        // Predicated region
        $region29: #{tpu_custom_call.1} parent=11 // pred_check
          %p576 = pneg %p224
        $region30: #{tpu_custom_call.1} parent=11 // pred_check_branch
          %578 = sbr.rel (%p576) target = $region32
        $region31: #{tpu_custom_call.1} parent=11 // pred_region
          _
        $region32: #{tpu_custom_call.1} parent=11 // pred_fallthru
          _
        // Predicated region
        $region33: #{tpu_custom_call.1} parent=11 // pred_check
          %p579 = pneg %p245
        $region34: #{tpu_custom_call.1} parent=11 // pred_check_branch
          %581 = sbr.rel (%p579) target = $region36
        $region35: #{tpu_custom_call.1} parent=11 // pred_region
          _
        $region36: #{tpu_custom_call.1} parent=11 // pred_fallthru
          _
        // Predicated region
        $region37: #{tpu_custom_call.1} parent=11 // pred_check
          %p582 = pneg %p266
        $region38: #{tpu_custom_call.1} parent=11 // pred_check_branch
          %584 = sbr.rel (%p582) target = $region40
        $region39: #{tpu_custom_call.1} parent=11 // pred_region
          _
        $region40: #{tpu_custom_call.1} parent=11 // pred_fallthru
          _
        // Predicated region
        $region41: #{tpu_custom_call.1} parent=11 // pred_check
          %p585 = pneg %p287
        $region42: #{tpu_custom_call.1} parent=11 // pred_check_branch
          %587 = sbr.rel (%p585) target = $region44
        $region43: #{tpu_custom_call.1} parent=11 // pred_region
          _
        $region44: #{tpu_custom_call.1} parent=11 // pred_fallthru
          _
        // Predicated region
        $region45: #{tpu_custom_call.1} parent=11 // pred_check
          %p588 = pneg %p308
        $region46: #{tpu_custom_call.1} parent=11 // pred_check_branch
          %590 = sbr.rel (%p588) target = $region48
        $region47: #{tpu_custom_call.1} parent=11 // pred_region
          _
        $region48: #{tpu_custom_call.1} parent=11 // pred_fallthru
          _
        // Predicated region
        $region49: #{tpu_custom_call.1} parent=11 // pred_check
          %p591 = pneg %p329
        $region50: #{tpu_custom_call.1} parent=11 // pred_check_branch
          %593 = sbr.rel (%p591) target = $region52
        $region51: #{tpu_custom_call.1} parent=11 // pred_region
          _
        $region52: #{tpu_custom_call.1} parent=11 // pred_fallthru
          _
        // Predicated region
        $region53: #{tpu_custom_call.1} parent=11 // pred_check
          %p594 = pneg %p350
        $region54: #{tpu_custom_call.1} parent=11 // pred_check_branch
          %596 = sbr.rel (%p594) target = $region56
        $region55: #{tpu_custom_call.1} parent=11 // pred_region
          _
        $region56: #{tpu_custom_call.1} parent=11 // pred_fallthru
          _
        // Predicated region
        $region57: #{tpu_custom_call.1} parent=11 // pred_check
          %p597 = pneg %p371
        $region58: #{tpu_custom_call.1} parent=11 // pred_check_branch
          %599 = sbr.rel (%p597) target = $region60
        $region59: #{tpu_custom_call.1} parent=11 // pred_region
          _
        $region60: #{tpu_custom_call.1} parent=11 // pred_fallthru
          _
        // Predicated region
        $region61: #{tpu_custom_call.1} parent=11 // pred_check
          %p600 = pneg %p392
        $region62: #{tpu_custom_call.1} parent=11 // pred_check_branch
          %602 = sbr.rel (%p600) target = $region64
        $region63: #{tpu_custom_call.1} parent=11 // pred_region
          _
        $region64: #{tpu_custom_call.1} parent=11 // pred_fallthru
          _
        // Predicated region
        $region65: #{tpu_custom_call.1} parent=11 // pred_check
          %p603 = pneg %p413
        $region66: #{tpu_custom_call.1} parent=11 // pred_check_branch
          %605 = sbr.rel (%p603) target = $region68
        $region67: #{tpu_custom_call.1} parent=11 // pred_region
          _
        $region68: #{tpu_custom_call.1} parent=11 // pred_fallthru
          _
        // Predicated region
        $region69: #{tpu_custom_call.1} parent=11 // pred_check
          %p606 = pneg %p434
        $region70: #{tpu_custom_call.1} parent=11 // pred_check_branch
          %608 = sbr.rel (%p606) target = $region72
        $region71: #{tpu_custom_call.1} parent=11 // pred_region
          _
        $region72: #{tpu_custom_call.1} parent=11 // pred_fallthru
          _
        // Predicated region
        $region73: #{tpu_custom_call.1} parent=11 // pred_check
          %p609 = pneg %p455
        $region74: #{tpu_custom_call.1} parent=11 // pred_check_branch
          %611 = sbr.rel (%p609) target = $region76
        $region75: #{tpu_custom_call.1} parent=11 // pred_region
          _
        $region76: #{tpu_custom_call.1} parent=11 // pred_fallthru
          _
        // Predicated region
        $region77: #{tpu_custom_call.1} parent=11 // pred_check
          %p612 = pneg %p476
        $region78: #{tpu_custom_call.1} parent=11 // pred_check_branch
          %614 = sbr.rel (%p612) target = $region80
        $region79: #{tpu_custom_call.1} parent=11 // pred_region
          _
        $region80: #{tpu_custom_call.1} parent=11 // pred_fallthru
          _
        // Predicated region
        $region81: #{tpu_custom_call.1} parent=11 // pred_check
          %p615 = pneg %p497
        $region82: #{tpu_custom_call.1} parent=11 // pred_check_branch
          %617 = sbr.rel (%p615) target = $region84
        $region83: #{tpu_custom_call.1} parent=11 // pred_region
          _
        $region84: #{tpu_custom_call.1} parent=11 // pred_fallthru
          _
      $region12: #{tpu_custom_call.1} parent=5 // pred_fallthru
        _
      %p618 = scmp.lt.s32.totalorder %s41, 2
      // Predicated region
      $region85: #{tpu_custom_call.1} parent=5 // pred_check
        %p619 = pneg %p618
      $region86: #{tpu_custom_call.1} parent=5 // pred_check_branch
        %621 = sbr.rel (%p619) target = $region88
      $region87: #{tpu_custom_call.1} parent=5 // pred_region
        // Predicated region
        $region89: #{tpu_custom_call.1} parent=87 // pred_check
          %p622 = pneg %p61
        $region90: #{tpu_custom_call.1} parent=87 // pred_check_branch
          %624 = sbr.rel (%p622) target = $region92
        $region91: #{tpu_custom_call.1} parent=87 // pred_region
          %s625 = sand.u32 %s51, 1
          %s626 = scalar_lea.sflag [#allocation3], %s625
          %s627 = sand.u32 %s51, 1
          %s628 = smul.addr %s627, 8
          %s629 = scalar_lea.vmem [#allocation2], %s628
          %s631 = ssub.s32 128, 128
          %632 = vsyncadd %s626, %s631
          %s633 = smul.addr %s41, 128
          %s634 = scalar_lea.hbm %s0, %s633
          %s636 = sshll.u32 %s629, 4
          %s637 = int_to_ptr.vmem [resolvable:$true] %s636
          %639 = dma.hbm_to_vmem [thread:$0]  %s634, 128, %s637, %s626
        $region92: #{tpu_custom_call.1} parent=87 // pred_fallthru
          _
        // Predicated region
        $region93: #{tpu_custom_call.1} parent=87 // pred_check
          %p640 = pneg %p87
        $region94: #{tpu_custom_call.1} parent=87 // pred_check_branch
          %642 = sbr.rel (%p640) target = $region96
        $region95: #{tpu_custom_call.1} parent=87 // pred_region
          %p643 = scmp.lt.s32.totalorder %s41, 1
          %s644 = scalar_select %p643, %s41, 1
          %s645 = smul.addr %s644, 2
          %s646 = smul.addr %s645, 8
          %s647 = scalar_lea.vmem %s1, %s646
        $region96: #{tpu_custom_call.1} parent=87 // pred_fallthru
          _
        // Predicated region
        $region97: #{tpu_custom_call.1} parent=87 // pred_check
          %p648 = pneg %p113
        $region98: #{tpu_custom_call.1} parent=87 // pred_check_branch
          %650 = sbr.rel (%p648) target = $region100
        $region99: #{tpu_custom_call.1} parent=87 // pred_region
          %s651 = sand.u32 %s103, 1
          %s652 = scalar_lea.sflag [#allocation6], %s651
          %s653 = sand.u32 %s103, 1
          %s654 = smul.addr %s653, 8
          %s655 = scalar_lea.vmem [#allocation5], %s654
          %s657 = ssub.s32 128, 128
          %658 = vsyncadd %s652, %s657
          %s659 = smul.addr %s41, 128
          %s660 = scalar_lea.hbm %s2, %s659
          %s662 = sshll.u32 %s655, 4
          %s663 = int_to_ptr.vmem [resolvable:$true] %s662
          %665 = dma.hbm_to_vmem [thread:$0]  %s660, 128, %s663, %s652
        $region100: #{tpu_custom_call.1} parent=87 // pred_fallthru
          _
      $region88: #{tpu_custom_call.1} parent=5 // pred_fallthru
        _
      %p666 = scmp.le.s32.totalorder 1, %s41
      %p667 = scmp.lt.s32.totalorder %s41, 3
      %p668 = pnand %p666, %p667
      %p669 = pneg %p668
      // Predicated region
      $region101: #{tpu_custom_call.1} parent=5 // pred_check
        _
      $region102: #{tpu_custom_call.1} parent=5 // pred_check_branch
        %671 = sbr.rel (%p668) target = $region104
      $region103: #{tpu_custom_call.1} parent=5 // pred_region
        %s672 = ssub.s32 %s41, 1
        %s673 = sand.u32 %s54, 1
        %s674 = scalar_lea.sflag [#allocation3], %s673
        %s675 = sand.u32 %s54, 1
        %s676 = smul.addr %s675, 8
        %s677 = scalar_lea.vmem [#allocation2], %s676
        // Predicated region
        $region105: #{tpu_custom_call.1} parent=103 // pred_check
          %p678 = pneg %p67
        $region106: #{tpu_custom_call.1} parent=103 // pred_check_branch
          %680 = sbr.rel (%p678) target = $region108
        $region107: #{tpu_custom_call.1} parent=103 // pred_region
          %681 = dma.done %s674, 128
        $region108: #{tpu_custom_call.1} parent=103 // pred_fallthru
          _
        %s682 = sand.u32 %s106, 1
        %s683 = scalar_lea.sflag [#allocation6], %s682
        %s684 = sand.u32 %s106, 1
        %s685 = smul.addr %s684, 8
        %s686 = scalar_lea.vmem [#allocation5], %s685
        // Predicated region
        $region109: #{tpu_custom_call.1} parent=103 // pred_check
          %p687 = pneg %p119
        $region110: #{tpu_custom_call.1} parent=103 // pred_check_branch
          %689 = sbr.rel (%p687) target = $region112
        $region111: #{tpu_custom_call.1} parent=103 // pred_region
          %690 = dma.done %s683, 128
        $region112: #{tpu_custom_call.1} parent=103 // pred_fallthru
          _
        %s691 = sand.u32 %s54, 1
        %s692 = scalar_lea.sflag [#allocation3], %s691
        %s693 = sand.u32 %s54, 1
        %s694 = smul.addr %s693, 8
        %s695 = scalar_lea.vmem [#allocation2], %s694
        %p696 = pneg %p67
        %p697 = pneg %p64
        %p698 = scmp.lt.s32.totalorder %s46, 1
        %s699 = scalar_select %p698, %s46, 1
        %s700 = smul.addr %s699, 2
        %s701 = smul.addr %s700, 8
        %s702 = scalar_lea.vmem %s1, %s701
        %p703 = pneg %p93
        %p704 = pneg %p90
        %s705 = sand.u32 %s106, 1
        %s706 = scalar_lea.sflag [#allocation6], %s705
        %s707 = sand.u32 %s106, 1
        %s708 = smul.addr %s707, 8
        %s709 = scalar_lea.vmem [#allocation5], %s708
        %p710 = pneg %p119
        %p711 = pneg %p116
        %p712 = pneg %p140
        %p713 = pneg %p137
        %p714 = pneg %p161
        %p715 = pneg %p158
        %p716 = pneg %p182
        %p717 = pneg %p179
        %p718 = pneg %p203
        %p719 = pneg %p200
        %p720 = pneg %p224
        %p721 = pneg %p221
        %p722 = pneg %p245
        %p723 = pneg %p242
        %p724 = pneg %p266
        %p725 = pneg %p263
        %p726 = pneg %p287
        %p727 = pneg %p284
        %p728 = pneg %p308
        %p729 = pneg %p305
        %p730 = pneg %p329
        %p731 = pneg %p326
        %p732 = pneg %p350
        %p733 = pneg %p347
        %p734 = pneg %p371
        %p735 = pneg %p368
        %p736 = pneg %p392
        %p737 = pneg %p389
        %p738 = pneg %p413
        %p739 = pneg %p410
        %p740 = pneg %p434
        %p741 = pneg %p431
        %p742 = pneg %p455
        %p743 = pneg %p452
        %p744 = pneg %p476
        %p745 = pneg %p473
        %p746 = pneg %p497
        %p747 = pneg %p494
        %p748 = pneg %p523
        %p749 = pneg %p520
        %s750 = sand.u32 %s510, 1
        %s751 = scalar_lea.sflag [#allocation4], %s750
        %s752 = sand.u32 %s510, 1
        %s753 = smul.addr %s752, 8
        %s754 = scalar_lea.vmem [#allocation7], %s753
        %p755 = pneg %p549
        %p756 = pneg %p546
        %s757 = sand.u32 %s536, 1
        %s758 = scalar_lea.sflag [#allocation9], %s757
        %s759 = sand.u32 %s536, 1
        %s760 = smul.addr %s759, 16
        %s761 = scalar_lea.vmem [#allocation8], %s760
        %p762 = scmp.lt.s32.totalorder %s46, 1
        %s763 = scalar_select %p762, %s46, 1
        %s764 = smul.addr %s763, 2
        %s765 = smul.addr %s764, 8
        %s766 = scalar_lea.vmem %s1, %s765
        %v767 = vld [vmem:[%s677] sm:$0xff]
        %v768 = vld [vmem:[%s766] sm:$0xff]
        %v769 = vld [vmem:[%s766 + $0x8] sm:$0xff]
        %v770 = vld [vmem:[%s686] sm:$0xff]
        %v771 = vld [vmem:[%s3] sm:$0x1]
        %v772 = vld [vmem:[%s4] sm:$0x1]
        %v773 = vld [vmem:[%s5] sm:$0x1]
        %v774 = vld [vmem:[%s6] sm:$0x1]
        %v775 = vld [vmem:[%s8] sm:$0x1]
        %v776 = vld [vmem:[%s10] sm:$0x1]
        %v777 = vld [vmem:[%s12] sm:$0x1]
        %v778 = vld [vmem:[%s14] sm:$0x1]
        %v779 = vld [vmem:[%s16] sm:$0x1]
        %v780 = vld [vmem:[%s18] sm:$0x1]
        %v781 = vld [vmem:[%s19] sm:$0x1]
        %v782 = vld [vmem:[%s20] sm:$0x1]
        %v783 = vld [vmem:[%s15] sm:$0xff]
        %v784 = vld [vmem:[%s15 + $0x8] sm:$0xff]
        %v785 = vld [vmem:[%s15 + $0x10] sm:$0xff]
        %v786 = vld [vmem:[%s15 + $0x18] sm:$0xff]
        %v787 = vld [vmem:[%s17] sm:$0xff]
        %v788 = vld [vmem:[%s17 + $0x8] sm:$0xff]
        %v789 = vld [vmem:[%s17 + $0x10] sm:$0xff]
        %v790 = vld [vmem:[%s17 + $0x18] sm:$0xff]
        %vm791 = vcmask 261120
        %v792 = vsel %vm791, %v767, 0.0
        %793 = vadd.xlane.f32.xlu0 %v792
        %v794 = vpop.xlane.xlu0 %793
        %v795 = vrcp.pop 32.0
        %v796 = vmul.f32 %v794, %v795
        %v797 = vsub.f32 %v767, %v796
        %v798 = vmul.f32 %v797, %v797
        %v799 = vsel %vm791, %v798, 0.0
        %800 = vadd.xlane.f32.xlu0 %v799
        %v801 = vpop.xlane.xlu0 %800
        %v802 = vmul.f32 %v801, %v795
        %v803 = vadd.f32 %v802, 1e-05
        %v804 = vrsqrt.pop %v803
        %v805 = vmul.f32 %v797, %v804
        %v807 = vlaneseq
        %v808 = vshrl.u32 %v807, 7
        %v809 = vsub.s32 0, %v808
        %v810 = vrot.slane %v771, %v809
        %v812 = vmul.f32 %v805, %v810
        %v814 = vlaneseq
        %v815 = vshrl.u32 %v814, 7
        %v816 = vsub.s32 0, %v815
        %v817 = vrot.slane %v772, %v816
        %v819 = vadd.f32 %v812, %v817
        %vm820 = vcmask 523264
        %v821 = vsel %vm820, %v768, 0.0
        %822 = vadd.xlane.f32.xlu0 %v821
        %v823 = vpop.xlane.xlu0 %822
        %v824 = vsel %vm820, %v769, 0.0
        %825 = vadd.xlane.f32.xlu0 %v824
        %v826 = vpop.xlane.xlu0 %825
        %v827 = vrcp.pop 64.0
        %v828 = vmul.f32 %v823, %v827
        %v829 = vmul.f32 %v826, %v827
        %v830 = vsub.f32 %v768, %v828
        %v831 = vsub.f32 %v769, %v829
        %v832 = vmul.f32 %v830, %v830
        %v833 = vmul.f32 %v831, %v831
        %v834 = vsel %vm820, %v832, 0.0
        %835 = vadd.xlane.f32.xlu0 %v834
        %v836 = vpop.xlane.xlu0 %835
        %v837 = vsel %vm820, %v833, 0.0
        %838 = vadd.xlane.f32.xlu0 %v837
        %v839 = vpop.xlane.xlu0 %838
        %v840 = vmul.f32 %v836, %v827
        %v841 = vmul.f32 %v839, %v827
        %v842 = vadd.f32 %v840, 1e-05
        %v843 = vadd.f32 %v841, 1e-05
        %v844 = vrsqrt.pop %v842
        %v845 = vrsqrt.pop %v843
        %v846 = vmul.f32 %v830, %v844
        %v847 = vmul.f32 %v831, %v845
        %v849 = vlaneseq
        %v850 = vshrl.u32 %v849, 7
        %v851 = vsub.s32 0, %v850
        %v852 = vrot.slane %v773, %v851
        %v854 = vmul.f32 %v846, %v852
        %v855 = vmul.f32 %v847, %v852
        %v857 = vlaneseq
        %v858 = vshrl.u32 %v857, 7
        %v859 = vsub.s32 0, %v858
        %v860 = vrot.slane %v774, %v859
        %v862 = vadd.f32 %v854, %v860
        %v863 = vadd.f32 %v855, %v860
        %v864 = vadd.f32 %v819, %v770
        %v865 = vld [vmem:[%s7] sm:$0xff]
        %v866 = vld [vmem:[%s7 + $0x8] sm:$0xff]
        %v867 = vld [vmem:[%s7 + $0x10] sm:$0xff]
        %v868 = vld [vmem:[%s7 + $0x18] sm:$0xff]
        %v870 = vlaneseq
        %v871 = vshrl.u32 %v870, 7
        %v872 = vsub.s32 0, %v871
        %v873 = vrot.slane %v775, %v872
        %v876 = vsel %vm791, %v864, 0
        %878 = vmatprep.subr.mxu0 0.0
        %879 = vmatpush1.msra.mxu0 0.0
        %880 = vmatprep.subr.mxu0 0.0
        %881 = vmatpush1.msra.mxu0 0.0
        %882 = vmatprep.subr.mxu0 0.0
        %883 = vmatpush1.msra.mxu0 0.0
        %884 = vmatprep.subr.mxu0 0.0
        %885 = vmatpush1.msra.mxu0 0.0
        %886 = vmatprep.subr.mxu0 0.0
        %887 = vmatpush1.msra.mxu0 0.0
        %888 = vmatprep.subr.mxu0 0.0
        %889 = vmatpush1.msra.mxu0 0.0
        %890 = vmatprep.subr.mxu0 0.0
        %891 = vmatpush1.msra.mxu0 0.0
        %892 = vmatprep.subr.mxu0 0.0
        %893 = vmatpush1.msra.mxu0 0.0
        %894 = vmatprep.subr.mxu0 0.0
        %895 = vmatpush1.msra.mxu0 0.0
        %896 = vmatprep.subr.mxu0 0.0
        %897 = vmatpush1.msra.mxu0 0.0
        %898 = vmatprep.subr.mxu0 0.0
        %899 = vmatpush1.msra.mxu0 0.0
        %900 = vmatprep.subr.mxu0 0.0
        %901 = vmatpush1.msra.mxu0 0.0
        %902 = vmatprep.subr.mxu0 0.0
        %903 = vmatpush1.msra.mxu0 %v868
        %904 = vmatprep.subr.mxu0 0.0
        %905 = vmatpush1.msra.mxu0 %v867
        %906 = vmatprep.subr.mxu0 0.0
        %907 = vmatpush1.msra.mxu0 %v866
        %908 = vmatprep.subr.mxu0 0.0
        %909 = vmatpush1.msra.mxu0 %v865
        %910 = vmatprep.subr.mxu0 0.0
        %911 = vmatpush2.msra.mxu0 0.0
        %912 = vmatprep.subr.mxu0 0.0
        %913 = vmatpush2.msra.mxu0 0.0
        %914 = vmatprep.subr.mxu0 0.0
        %915 = vmatpush2.msra.mxu0 0.0
        %916 = vmatprep.subr.mxu0 0.0
        %917 = vmatpush2.msra.mxu0 0.0
        %918 = vmatprep.subr.mxu0 0.0
        %919 = vmatpush2.msra.mxu0 0.0
        %920 = vmatprep.subr.mxu0 0.0
        %921 = vmatpush2.msra.mxu0 0.0
        %922 = vmatprep.subr.mxu0 0.0
        %923 = vmatpush2.msra.mxu0 0.0
        %924 = vmatprep.subr.mxu0 0.0
        %925 = vmatpush2.msra.mxu0 0.0
        %926 = vmatprep.subr.mxu0 0.0
        %927 = vmatpush2.msra.mxu0 0.0
        %928 = vmatprep.subr.mxu0 0.0
        %929 = vmatpush2.msra.mxu0 0.0
        %930 = vmatprep.subr.mxu0 0.0
        %931 = vmatpush2.msra.mxu0 0.0
        %932 = vmatprep.subr.mxu0 0.0
        %933 = vmatpush2.msra.mxu0 0.0
        %934 = vmatprep.subr.mxu0 0.0
        %935 = vmatpush2.msra.mxu0 0.0
        %936 = vmatprep.subr.mxu0 0.0
        %937 = vmatpush2.msra.mxu0 0.0
        %938 = vmatprep.subr.mxu0 0.0
        %939 = vmatpush2.msra.mxu0 0.0
        %940 = vmatprep.subr.mxu0 0.0
        %941 = vmatpush2.msra.mxu0 0.0
        %942 = vmatprep.mubr.f32.mxu0 0.0
        %943 = vmatmul.mubr.f32.gmra.mxu0 %v876
        %v944 = vpop.f32.mrf.mxu0
        %v945 = vadd.f32 %v873, %v944
        %v946 = vpop.f32.mrf.mxu0
        %947 = vdwg.mxu0
        %v948 = vld [vmem:[%s9] sm:$0xff]
        %v949 = vld [vmem:[%s9 + $0x8] sm:$0xff]
        %v950 = vld [vmem:[%s9 + $0x10] sm:$0xff]
        %v951 = vld [vmem:[%s9 + $0x18] sm:$0xff]
        %v952 = vld [vmem:[%s9 + $0x20] sm:$0xff]
        %v953 = vld [vmem:[%s9 + $0x28] sm:$0xff]
        %v954 = vld [vmem:[%s9 + $0x30] sm:$0xff]
        %v955 = vld [vmem:[%s9 + $0x38] sm:$0xff]
        %v957 = vlaneseq
        %v958 = vshrl.u32 %v957, 7
        %v959 = vsub.s32 0, %v958
        %v960 = vrot.slane %v776, %v959
        %v963 = vsel %vm820, %v862, 0
        %v966 = vsel %vm820, %v863, 0
        %968 = vmatprep.subr.mxu0 0.0
        %969 = vmatpush1.msra.mxu0 0.0
        %970 = vmatprep.subr.mxu0 0.0
        %971 = vmatpush1.msra.mxu0 0.0
        %972 = vmatprep.subr.mxu0 0.0
        %973 = vmatpush1.msra.mxu0 0.0
        %974 = vmatprep.subr.mxu0 0.0
        %975 = vmatpush1.msra.mxu0 0.0
        %976 = vmatprep.subr.mxu0 0.0
        %977 = vmatpush1.msra.mxu0 0.0
        %978 = vmatprep.subr.mxu0 0.0
        %979 = vmatpush1.msra.mxu0 0.0
        %980 = vmatprep.subr.mxu0 0.0
        %981 = vmatpush1.msra.mxu0 0.0
        %982 = vmatprep.subr.mxu0 0.0
        %983 = vmatpush1.msra.mxu0 0.0
        %984 = vmatprep.subr.mxu0 0.0
        %985 = vmatpush1.msra.mxu0 %v955
        %986 = vmatprep.subr.mxu0 0.0
        %987 = vmatpush1.msra.mxu0 %v954
        %988 = vmatprep.subr.mxu0 0.0
        %989 = vmatpush1.msra.mxu0 %v953
        %990 = vmatprep.subr.mxu0 0.0
        %991 = vmatpush1.msra.mxu0 %v952
        %992 = vmatprep.subr.mxu0 0.0
        %993 = vmatpush1.msra.mxu0 %v951
        %994 = vmatprep.subr.mxu0 0.0
        %995 = vmatpush1.msra.mxu0 %v950
        %996 = vmatprep.subr.mxu0 0.0
        %997 = vmatpush1.msra.mxu0 %v949
        %998 = vmatprep.subr.mxu0 0.0
        %999 = vmatpush1.msra.mxu0 %v948
        %1000 = vmatprep.subr.mxu0 0.0
        %1001 = vmatpush2.msra.mxu0 0.0
        %1002 = vmatprep.subr.mxu0 0.0
        %1003 = vmatpush2.msra.mxu0 0.0
        %1004 = vmatprep.subr.mxu0 0.0
        %1005 = vmatpush2.msra.mxu0 0.0
        %1006 = vmatprep.subr.mxu0 0.0
        %1007 = vmatpush2.msra.mxu0 0.0
        %1008 = vmatprep.subr.mxu0 0.0
        %1009 = vmatpush2.msra.mxu0 0.0
        %1010 = vmatprep.subr.mxu0 0.0
        %1011 = vmatpush2.msra.mxu0 0.0
        %1012 = vmatprep.subr.mxu0 0.0
        %1013 = vmatpush2.msra.mxu0 0.0
        %1014 = vmatprep.subr.mxu0 0.0
        %1015 = vmatpush2.msra.mxu0 0.0
        %1016 = vmatprep.subr.mxu0 0.0
        %1017 = vmatpush2.msra.mxu0 0.0
        %1018 = vmatprep.subr.mxu0 0.0
        %1019 = vmatpush2.msra.mxu0 0.0
        %1020 = vmatprep.subr.mxu0 0.0
        %1021 = vmatpush2.msra.mxu0 0.0
        %1022 = vmatprep.subr.mxu0 0.0
        %1023 = vmatpush2.msra.mxu0 0.0
        %1024 = vmatprep.subr.mxu0 0.0
        %1025 = vmatpush2.msra.mxu0 0.0
        %1026 = vmatprep.subr.mxu0 0.0
        %1027 = vmatpush2.msra.mxu0 0.0
        %1028 = vmatprep.subr.mxu0 0.0
        %1029 = vmatpush2.msra.mxu0 0.0
        %1030 = vmatprep.subr.mxu0 0.0
        %1031 = vmatpush2.msra.mxu0 0.0
        %1032 = vmatprep.mubr.f32.mxu0 0.0
        %1033 = vmatmul.mubr.f32.gmra.mxu0 %v963
        %v1034 = vpop.f32.mrf.mxu0
        %v1035 = vadd.f32 %v960, %v1034
        %v1036 = vpop.f32.mrf.mxu0
        %1037 = vmatprep.mubr.f32.mxu0 0.0
        %1038 = vmatmul.mubr.f32.gmra.mxu0 %v966
        %v1039 = vpop.f32.mrf.mxu0
        %v1040 = vadd.f32 %v960, %v1039
        %v1041 = vpop.f32.mrf.mxu0
        %1042 = vdwg.mxu0
        %v1043 = vld [vmem:[%s11] sm:$0xff]
        %v1044 = vld [vmem:[%s11 + $0x8] sm:$0xff]
        %v1045 = vld [vmem:[%s11 + $0x10] sm:$0xff]
        %v1046 = vld [vmem:[%s11 + $0x18] sm:$0xff]
        %v1047 = vld [vmem:[%s11 + $0x20] sm:$0xff]
        %v1048 = vld [vmem:[%s11 + $0x28] sm:$0xff]
        %v1049 = vld [vmem:[%s11 + $0x30] sm:$0xff]
        %v1050 = vld [vmem:[%s11 + $0x38] sm:$0xff]
        %v1052 = vlaneseq
        %v1053 = vshrl.u32 %v1052, 7
        %v1054 = vsub.s32 0, %v1053
        %v1055 = vrot.slane %v777, %v1054
        %1057 = vmatprep.subr.mxu0 0.0
        %1058 = vmatpush1.msra.mxu0 0.0
        %1059 = vmatprep.subr.mxu0 0.0
        %1060 = vmatpush1.msra.mxu0 0.0
        %1061 = vmatprep.subr.mxu0 0.0
        %1062 = vmatpush1.msra.mxu0 0.0
        %1063 = vmatprep.subr.mxu0 0.0
        %1064 = vmatpush1.msra.mxu0 0.0
        %1065 = vmatprep.subr.mxu0 0.0
        %1066 = vmatpush1.msra.mxu0 0.0
        %1067 = vmatprep.subr.mxu0 0.0
        %1068 = vmatpush1.msra.mxu0 0.0
        %1069 = vmatprep.subr.mxu0 0.0
        %1070 = vmatpush1.msra.mxu0 0.0
        %1071 = vmatprep.subr.mxu0 0.0
        %1072 = vmatpush1.msra.mxu0 0.0
        %1073 = vmatprep.subr.mxu0 0.0
        %1074 = vmatpush1.msra.mxu0 %v1050
        %1075 = vmatprep.subr.mxu0 0.0
        %1076 = vmatpush1.msra.mxu0 %v1049
        %1077 = vmatprep.subr.mxu0 0.0
        %1078 = vmatpush1.msra.mxu0 %v1048
        %1079 = vmatprep.subr.mxu0 0.0
        %1080 = vmatpush1.msra.mxu0 %v1047
        %1081 = vmatprep.subr.mxu0 0.0
        %1082 = vmatpush1.msra.mxu0 %v1046
        %1083 = vmatprep.subr.mxu0 0.0
        %1084 = vmatpush1.msra.mxu0 %v1045
        %1085 = vmatprep.subr.mxu0 0.0
        %1086 = vmatpush1.msra.mxu0 %v1044
        %1087 = vmatprep.subr.mxu0 0.0
        %1088 = vmatpush1.msra.mxu0 %v1043
        %1089 = vmatprep.subr.mxu0 0.0
        %1090 = vmatpush2.msra.mxu0 0.0
        %1091 = vmatprep.subr.mxu0 0.0
        %1092 = vmatpush2.msra.mxu0 0.0
        %1093 = vmatprep.subr.mxu0 0.0
        %1094 = vmatpush2.msra.mxu0 0.0
        %1095 = vmatprep.subr.mxu0 0.0
        %1096 = vmatpush2.msra.mxu0 0.0
        %1097 = vmatprep.subr.mxu0 0.0
        %1098 = vmatpush2.msra.mxu0 0.0
        %1099 = vmatprep.subr.mxu0 0.0
        %1100 = vmatpush2.msra.mxu0 0.0
        %1101 = vmatprep.subr.mxu0 0.0
        %1102 = vmatpush2.msra.mxu0 0.0
        %1103 = vmatprep.subr.mxu0 0.0
        %1104 = vmatpush2.msra.mxu0 0.0
        %1105 = vmatprep.subr.mxu0 0.0
        %1106 = vmatpush2.msra.mxu0 0.0
        %1107 = vmatprep.subr.mxu0 0.0
        %1108 = vmatpush2.msra.mxu0 0.0
        %1109 = vmatprep.subr.mxu0 0.0
        %1110 = vmatpush2.msra.mxu0 0.0
        %1111 = vmatprep.subr.mxu0 0.0
        %1112 = vmatpush2.msra.mxu0 0.0
        %1113 = vmatprep.subr.mxu0 0.0
        %1114 = vmatpush2.msra.mxu0 0.0
        %1115 = vmatprep.subr.mxu0 0.0
        %1116 = vmatpush2.msra.mxu0 0.0
        %1117 = vmatprep.subr.mxu0 0.0
        %1118 = vmatpush2.msra.mxu0 0.0
        %1119 = vmatprep.subr.mxu0 0.0
        %1120 = vmatpush2.msra.mxu0 0.0
        %1121 = vmatprep.mubr.f32.mxu0 0.0
        %1122 = vmatmul.mubr.f32.gmra.mxu0 %v963
        %v1123 = vpop.f32.mrf.mxu0
        %v1124 = vadd.f32 %v1055, %v1123
        %v1125 = vpop.f32.mrf.mxu0
        %1126 = vmatprep.mubr.f32.mxu0 0.0
        %1127 = vmatmul.mubr.f32.gmra.mxu0 %v966
        %v1128 = vpop.f32.mrf.mxu0
        %v1129 = vadd.f32 %v1055, %v1128
        %v1130 = vpop.f32.mrf.mxu0
        %1131 = vdwg.mxu0
        %v1132 = vld [vmem:[%s13] sm:$0xff]
        %v1133 = vld [vmem:[%s13 + $0x8] sm:$0xff]
        %v1134 = vld [vmem:[%s13 + $0x10] sm:$0xff]
        %v1135 = vld [vmem:[%s13 + $0x18] sm:$0xff]
        %v1137 = vlaneseq
        %v1138 = vshrl.u32 %v1137, 7
        %v1139 = vsub.s32 0, %v1138
        %v1140 = vrot.slane %v778, %v1139
        %v1143 = vsel %vm791, %v819, 0
        %1145 = vmatprep.subr.mxu0 0.0
        %1146 = vmatpush1.msra.mxu0 0.0
        %1147 = vmatprep.subr.mxu0 0.0
        %1148 = vmatpush1.msra.mxu0 0.0
        %1149 = vmatprep.subr.mxu0 0.0
        %1150 = vmatpush1.msra.mxu0 0.0
        %1151 = vmatprep.subr.mxu0 0.0
        %1152 = vmatpush1.msra.mxu0 0.0
        %1153 = vmatprep.subr.mxu0 0.0
        %1154 = vmatpush1.msra.mxu0 0.0
        %1155 = vmatprep.subr.mxu0 0.0
        %1156 = vmatpush1.msra.mxu0 0.0
        %1157 = vmatprep.subr.mxu0 0.0
        %1158 = vmatpush1.msra.mxu0 0.0
        %1159 = vmatprep.subr.mxu0 0.0
        %1160 = vmatpush1.msra.mxu0 0.0
        %1161 = vmatprep.subr.mxu0 0.0
        %1162 = vmatpush1.msra.mxu0 0.0
        %1163 = vmatprep.subr.mxu0 0.0
        %1164 = vmatpush1.msra.mxu0 0.0
        %1165 = vmatprep.subr.mxu0 0.0
        %1166 = vmatpush1.msra.mxu0 0.0
        %1167 = vmatprep.subr.mxu0 0.0
        %1168 = vmatpush1.msra.mxu0 0.0
        %1169 = vmatprep.subr.mxu0 0.0
        %1170 = vmatpush1.msra.mxu0 %v1135
        %1171 = vmatprep.subr.mxu0 0.0
        %1172 = vmatpush1.msra.mxu0 %v1134
        %1173 = vmatprep.subr.mxu0 0.0
        %1174 = vmatpush1.msra.mxu0 %v1133
        %1175 = vmatprep.subr.mxu0 0.0
        %1176 = vmatpush1.msra.mxu0 %v1132
        %1177 = vmatprep.subr.mxu0 0.0
        %1178 = vmatpush2.msra.mxu0 0.0
        %1179 = vmatprep.subr.mxu0 0.0
        %1180 = vmatpush2.msra.mxu0 0.0
        %1181 = vmatprep.subr.mxu0 0.0
        %1182 = vmatpush2.msra.mxu0 0.0
        %1183 = vmatprep.subr.mxu0 0.0
        %1184 = vmatpush2.msra.mxu0 0.0
        %1185 = vmatprep.subr.mxu0 0.0
        %1186 = vmatpush2.msra.mxu0 0.0
        %1187 = vmatprep.subr.mxu0 0.0
        %1188 = vmatpush2.msra.mxu0 0.0
        %1189 = vmatprep.subr.mxu0 0.0
        %1190 = vmatpush2.msra.mxu0 0.0
        %1191 = vmatprep.subr.mxu0 0.0
        %1192 = vmatpush2.msra.mxu0 0.0
        %1193 = vmatprep.subr.mxu0 0.0
        %1194 = vmatpush2.msra.mxu0 0.0
        %1195 = vmatprep.subr.mxu0 0.0
        %1196 = vmatpush2.msra.mxu0 0.0
        %1197 = vmatprep.subr.mxu0 0.0
        %1198 = vmatpush2.msra.mxu0 0.0
        %1199 = vmatprep.subr.mxu0 0.0
        %1200 = vmatpush2.msra.mxu0 0.0
        %1201 = vmatprep.subr.mxu0 0.0
        %1202 = vmatpush2.msra.mxu0 0.0
        %1203 = vmatprep.subr.mxu0 0.0
        %1204 = vmatpush2.msra.mxu0 0.0
        %1205 = vmatprep.subr.mxu0 0.0
        %1206 = vmatpush2.msra.mxu0 0.0
        %1207 = vmatprep.subr.mxu0 0.0
        %1208 = vmatpush2.msra.mxu0 0.0
        %1209 = vmatprep.mubr.f32.mxu0 0.0
        %1210 = vmatmul.mubr.f32.gmra.mxu0 %v1143
        %v1211 = vpop.f32.mrf.mxu0
        %v1212 = vadd.f32 %v1140, %v1211
        %v1213 = vpop.f32.mrf.mxu0
        %1214 = vdwg.mxu0
        %vm1215 = vcmask 64512
        %v1217 = vsel %vm1215, %v945, 0
        %v1220 = vsel %vm1215, %v1035, 0
        %v1223 = vsel %vm1215, %v1040, 0
        %1225 = vmatprep.subr.mxu0 0.0
        %1226 = vmatpush1.xpose.msra.mxu0 0.0
        %1227 = vmatprep.subr.mxu0 0.0
        %1228 = vmatpush1.xpose.msra.mxu0 0.0
        %1229 = vmatprep.subr.mxu0 0.0
        %1230 = vmatpush1.xpose.msra.mxu0 0.0
        %1231 = vmatprep.subr.mxu0 0.0
        %1232 = vmatpush1.xpose.msra.mxu0 0.0
        %1233 = vmatprep.subr.mxu0 0.0
        %1234 = vmatpush1.xpose.msra.mxu0 0.0
        %1235 = vmatprep.subr.mxu0 0.0
        %1236 = vmatpush1.xpose.msra.mxu0 0.0
        %1237 = vmatprep.subr.mxu0 0.0
        %1238 = vmatpush1.xpose.msra.mxu0 0.0
        %1239 = vmatprep.subr.mxu0 0.0
        %1240 = vmatpush1.xpose.msra.mxu0 0.0
        %1241 = vmatprep.subr.mxu0 0.0
        %1242 = vmatpush1.xpose.msra.mxu0 0.0
        %1243 = vmatprep.subr.mxu0 0.0
        %1244 = vmatpush1.xpose.msra.mxu0 0.0
        %1245 = vmatprep.subr.mxu0 0.0
        %1246 = vmatpush1.xpose.msra.mxu0 0.0
        %1247 = vmatprep.subr.mxu0 0.0
        %1248 = vmatpush1.xpose.msra.mxu0 0.0
        %1249 = vmatprep.subr.mxu0 0.0
        %1250 = vmatpush1.xpose.msra.mxu0 0.0
        %1251 = vmatprep.subr.mxu0 0.0
        %1252 = vmatpush1.xpose.msra.mxu0 0.0
        %1253 = vmatprep.subr.mxu0 0.0
        %1254 = vmatpush1.xpose.msra.mxu0 %v1223
        %1255 = vmatprep.subr.mxu0 0.0
        %1256 = vmatpush1.xpose.msra.mxu0 %v1220
        %1257 = vmatprep.subr.mxu0 0.0
        %1258 = vmatpush2.xpose.msra.mxu0 0.0
        %1259 = vmatprep.subr.mxu0 0.0
        %1260 = vmatpush2.xpose.msra.mxu0 0.0
        %1261 = vmatprep.subr.mxu0 0.0
        %1262 = vmatpush2.xpose.msra.mxu0 0.0
        %1263 = vmatprep.subr.mxu0 0.0
        %1264 = vmatpush2.xpose.msra.mxu0 0.0
        %1265 = vmatprep.subr.mxu0 0.0
        %1266 = vmatpush2.xpose.msra.mxu0 0.0
        %1267 = vmatprep.subr.mxu0 0.0
        %1268 = vmatpush2.xpose.msra.mxu0 0.0
        %1269 = vmatprep.subr.mxu0 0.0
        %1270 = vmatpush2.xpose.msra.mxu0 0.0
        %1271 = vmatprep.subr.mxu0 0.0
        %1272 = vmatpush2.xpose.msra.mxu0 0.0
        %1273 = vmatprep.subr.mxu0 0.0
        %1274 = vmatpush2.xpose.msra.mxu0 0.0
        %1275 = vmatprep.subr.mxu0 0.0
        %1276 = vmatpush2.xpose.msra.mxu0 0.0
        %1277 = vmatprep.subr.mxu0 0.0
        %1278 = vmatpush2.xpose.msra.mxu0 0.0
        %1279 = vmatprep.subr.mxu0 0.0
        %1280 = vmatpush2.xpose.msra.mxu0 0.0
        %1281 = vmatprep.subr.mxu0 0.0
        %1282 = vmatpush2.xpose.msra.mxu0 0.0
        %1283 = vmatprep.subr.mxu0 0.0
        %1284 = vmatpush2.xpose.msra.mxu0 0.0
        %1285 = vmatprep.subr.mxu0 0.0
        %1286 = vmatpush2.xpose.msra.mxu0 0.0
        %1287 = vmatprep.subr.mxu0 0.0
        %1288 = vmatpush2.xpose.msra.mxu0 0.0
        %1289 = vmatprep.mubr.f32.mxu0 0.0
        %1290 = vmatmul.mubr.f32.gmra.mxu0 %v1217
        %v1291 = vpop.f32.mrf.mxu0
        %v1292 = vadd.f32 0.0, %v1291
        %v1293 = vpop.f32.mrf.mxu0
        %1294 = vdwg.mxu0
        %1295 = vmatprep.subr.mxu0 0.0
        %1296 = vmatpush1.xpose.msra.mxu0 0.0
        %1297 = vmatprep.subr.mxu0 0.0
        %1298 = vmatpush1.xpose.msra.mxu0 0.0
        %1299 = vmatprep.subr.mxu0 0.0
        %1300 = vmatpush1.xpose.msra.mxu0 0.0
        %1301 = vmatprep.subr.mxu0 0.0
        %1302 = vmatpush1.xpose.msra.mxu0 0.0
        %1303 = vmatprep.subr.mxu0 0.0
        %1304 = vmatpush1.xpose.msra.mxu0 0.0
        %1305 = vmatprep.subr.mxu0 0.0
        %1306 = vmatpush1.xpose.msra.mxu0 0.0
        %1307 = vmatprep.subr.mxu0 0.0
        %1308 = vmatpush1.xpose.msra.mxu0 0.0
        %1309 = vmatprep.subr.mxu0 0.0
        %1310 = vmatpush1.xpose.msra.mxu0 0.0
        %1311 = vmatprep.subr.mxu0 0.0
        %1312 = vmatpush1.xpose.msra.mxu0 0.0
        %1313 = vmatprep.subr.mxu0 0.0
        %1314 = vmatpush1.xpose.msra.mxu0 0.0
        %1315 = vmatprep.subr.mxu0 0.0
        %1316 = vmatpush1.xpose.msra.mxu0 0.0
        %1317 = vmatprep.subr.mxu0 0.0
        %1318 = vmatpush1.xpose.msra.mxu0 0.0
        %1319 = vmatprep.subr.mxu0 0.0
        %1320 = vmatpush1.xpose.msra.mxu0 0.0
        %1321 = vmatprep.subr.mxu0 0.0
        %1322 = vmatpush1.xpose.msra.mxu0 0.0
        %1323 = vmatprep.subr.mxu0 0.0
        %1324 = vmatpush1.xpose.msra.mxu0 0.0
        %1325 = vmatprep.subr.mxu0 0.0
        %1326 = vmatpush1.xpose.msra.mxu0 %v1217
        %1327 = vmatprep.subr.mxu0 0.0
        %1328 = vmatpush2.xpose.msra.mxu0 0.0
        %1329 = vmatprep.subr.mxu0 0.0
        %1330 = vmatpush2.xpose.msra.mxu0 0.0
        %1331 = vmatprep.subr.mxu0 0.0
        %1332 = vmatpush2.xpose.msra.mxu0 0.0
        %1333 = vmatprep.subr.mxu0 0.0
        %1334 = vmatpush2.xpose.msra.mxu0 0.0
        %1335 = vmatprep.subr.mxu0 0.0
        %1336 = vmatpush2.xpose.msra.mxu0 0.0
        %1337 = vmatprep.subr.mxu0 0.0
        %1338 = vmatpush2.xpose.msra.mxu0 0.0
        %1339 = vmatprep.subr.mxu0 0.0
        %1340 = vmatpush2.xpose.msra.mxu0 0.0
        %1341 = vmatprep.subr.mxu0 0.0
        %1342 = vmatpush2.xpose.msra.mxu0 0.0
        %1343 = vmatprep.subr.mxu0 0.0
        %1344 = vmatpush2.xpose.msra.mxu0 0.0
        %1345 = vmatprep.subr.mxu0 0.0
        %1346 = vmatpush2.xpose.msra.mxu0 0.0
        %1347 = vmatprep.subr.mxu0 0.0
        %1348 = vmatpush2.xpose.msra.mxu0 0.0
        %1349 = vmatprep.subr.mxu0 0.0
        %1350 = vmatpush2.xpose.msra.mxu0 0.0
        %1351 = vmatprep.subr.mxu0 0.0
        %1352 = vmatpush2.xpose.msra.mxu0 0.0
        %1353 = vmatprep.subr.mxu0 0.0
        %1354 = vmatpush2.xpose.msra.mxu0 0.0
        %1355 = vmatprep.subr.mxu0 0.0
        %1356 = vmatpush2.xpose.msra.mxu0 0.0
        %1357 = vmatprep.subr.mxu0 0.0
        %1358 = vmatpush2.xpose.msra.mxu0 0.0
        %1359 = vmatprep.mubr.f32.mxu0 0.0
        %1360 = vmatmul.mubr.f32.gmra.mxu0 %v1220
        %v1361 = vpop.f32.mrf.mxu0
        %v1362 = vadd.f32 0.0, %v1361
        %v1363 = vpop.f32.mrf.mxu0
        %1364 = vmatprep.mubr.f32.mxu0 0.0
        %1365 = vmatmul.mubr.f32.gmra.mxu0 %v1223
        %v1366 = vpop.f32.mrf.mxu0
        %v1367 = vadd.f32 0.0, %v1366
        %v1368 = vpop.f32.mrf.mxu0
        %1369 = vdwg.mxu0
        %vm1370 = vcmask 130048
        %v1371 = vsel %vm1370, %v1292, -inf
        %1372 = vmax.xlane.f32.xlu0 %v1371
        %v1373 = vpop.xlane.xlu0 %1372
        %v1374 = vsub.f32 %v1292, %v1373
        %v1375 = vmul.f32 %v1374, 1.442695
        %v1376 = vpow.pop %v1375
        %v1377 = vsel %vm1370, %v1376, 0.0
        %1378 = vadd.xlane.f32.xlu0 %v1377
        %v1379 = vpop.xlane.xlu0 %1378
        %v1380 = vrcp.pop %v1379
        %v1381 = vmul.f32 %v1376, %v1380
        %v1382 = vsel %vm1215, %v1362, -inf
        %1383 = vmax.xlane.f32.xlu0 %v1382
        %v1384 = vpop.xlane.xlu0 %1383
        %v1385 = vsel %vm1215, %v1367, -inf
        %1386 = vmax.xlane.f32.xlu0 %v1385
        %v1387 = vpop.xlane.xlu0 %1386
        %v1388 = vsub.f32 %v1362, %v1384
        %v1389 = vsub.f32 %v1367, %v1387
        %v1390 = vmul.f32 %v1388, 1.442695
        %v1391 = vpow.pop %v1390
        %v1392 = vmul.f32 %v1389, 1.442695
        %v1393 = vpow.pop %v1392
        %v1394 = vsel %vm1215, %v1391, 0.0
        %1395 = vadd.xlane.f32.xlu0 %v1394
        %v1396 = vpop.xlane.xlu0 %1395
        %v1397 = vsel %vm1215, %v1393, 0.0
        %1398 = vadd.xlane.f32.xlu0 %v1397
        %v1399 = vpop.xlane.xlu0 %1398
        %v1400 = vrcp.pop %v1396
        %v1401 = vrcp.pop %v1399
        %v1402 = vmul.f32 %v1391, %v1400
        %v1403 = vmul.f32 %v1393, %v1401
        %v1405 = vsel %vm1370, %v1381, 0
        %1407 = vmatprep.subr.mxu0 0.0
        %1408 = vmatpush1.msra.mxu0 0.0
        %1409 = vmatprep.subr.mxu0 0.0
        %1410 = vmatpush1.msra.mxu0 0.0
        %1411 = vmatprep.subr.mxu0 0.0
        %1412 = vmatpush1.msra.mxu0 0.0
        %1413 = vmatprep.subr.mxu0 0.0
        %1414 = vmatpush1.msra.mxu0 0.0
        %1415 = vmatprep.subr.mxu0 0.0
        %1416 = vmatpush1.msra.mxu0 0.0
        %1417 = vmatprep.subr.mxu0 0.0
        %1418 = vmatpush1.msra.mxu0 0.0
        %1419 = vmatprep.subr.mxu0 0.0
        %1420 = vmatpush1.msra.mxu0 0.0
        %1421 = vmatprep.subr.mxu0 0.0
        %1422 = vmatpush1.msra.mxu0 0.0
        %1423 = vmatprep.subr.mxu0 0.0
        %1424 = vmatpush1.msra.mxu0 0.0
        %1425 = vmatprep.subr.mxu0 0.0
        %1426 = vmatpush1.msra.mxu0 0.0
        %1427 = vmatprep.subr.mxu0 0.0
        %1428 = vmatpush1.msra.mxu0 0.0
        %1429 = vmatprep.subr.mxu0 0.0
        %1430 = vmatpush1.msra.mxu0 0.0
        %1431 = vmatprep.subr.mxu0 0.0
        %1432 = vmatpush1.msra.mxu0 0.0
        %1433 = vmatprep.subr.mxu0 0.0
        %1434 = vmatpush1.msra.mxu0 0.0
        %1435 = vmatprep.subr.mxu0 0.0
        %1436 = vmatpush1.msra.mxu0 %v1129
        %1437 = vmatprep.subr.mxu0 0.0
        %1438 = vmatpush1.msra.mxu0 %v1124
        %1439 = vmatprep.subr.mxu0 0.0
        %1440 = vmatpush2.msra.mxu0 0.0
        %1441 = vmatprep.subr.mxu0 0.0
        %1442 = vmatpush2.msra.mxu0 0.0
        %1443 = vmatprep.subr.mxu0 0.0
        %1444 = vmatpush2.msra.mxu0 0.0
        %1445 = vmatprep.subr.mxu0 0.0
        %1446 = vmatpush2.msra.mxu0 0.0
        %1447 = vmatprep.subr.mxu0 0.0
        %1448 = vmatpush2.msra.mxu0 0.0
        %1449 = vmatprep.subr.mxu0 0.0
        %1450 = vmatpush2.msra.mxu0 0.0
        %1451 = vmatprep.subr.mxu0 0.0
        %1452 = vmatpush2.msra.mxu0 0.0
        %1453 = vmatprep.subr.mxu0 0.0
        %1454 = vmatpush2.msra.mxu0 0.0
        %1455 = vmatprep.subr.mxu0 0.0
        %1456 = vmatpush2.msra.mxu0 0.0
        %1457 = vmatprep.subr.mxu0 0.0
        %1458 = vmatpush2.msra.mxu0 0.0
        %1459 = vmatprep.subr.mxu0 0.0
        %1460 = vmatpush2.msra.mxu0 0.0
        %1461 = vmatprep.subr.mxu0 0.0
        %1462 = vmatpush2.msra.mxu0 0.0
        %1463 = vmatprep.subr.mxu0 0.0
        %1464 = vmatpush2.msra.mxu0 0.0
        %1465 = vmatprep.subr.mxu0 0.0
        %1466 = vmatpush2.msra.mxu0 0.0
        %1467 = vmatprep.subr.mxu0 0.0
        %1468 = vmatpush2.msra.mxu0 0.0
        %1469 = vmatprep.subr.mxu0 0.0
        %1470 = vmatpush2.msra.mxu0 0.0
        %1471 = vmatprep.mubr.f32.mxu0 0.0
        %1472 = vmatmul.mubr.f32.gmra.mxu0 %v1405
        %v1473 = vpop.f32.mrf.mxu0
        %v1474 = vadd.f32 0.0, %v1473
        %v1475 = vpop.f32.mrf.mxu0
        %1476 = vdwg.mxu0
        %v1478 = vsel %vm1215, %v1402, 0
        %v1481 = vsel %vm1215, %v1403, 0
        %1483 = vmatprep.subr.mxu0 0.0
        %1484 = vmatpush1.msra.mxu0 0.0
        %1485 = vmatprep.subr.mxu0 0.0
        %1486 = vmatpush1.msra.mxu0 0.0
        %1487 = vmatprep.subr.mxu0 0.0
        %1488 = vmatpush1.msra.mxu0 0.0
        %1489 = vmatprep.subr.mxu0 0.0
        %1490 = vmatpush1.msra.mxu0 0.0
        %1491 = vmatprep.subr.mxu0 0.0
        %1492 = vmatpush1.msra.mxu0 0.0
        %1493 = vmatprep.subr.mxu0 0.0
        %1494 = vmatpush1.msra.mxu0 0.0
        %1495 = vmatprep.subr.mxu0 0.0
        %1496 = vmatpush1.msra.mxu0 0.0
        %1497 = vmatprep.subr.mxu0 0.0
        %1498 = vmatpush1.msra.mxu0 0.0
        %1499 = vmatprep.subr.mxu0 0.0
        %1500 = vmatpush1.msra.mxu0 0.0
        %1501 = vmatprep.subr.mxu0 0.0
        %1502 = vmatpush1.msra.mxu0 0.0
        %1503 = vmatprep.subr.mxu0 0.0
        %1504 = vmatpush1.msra.mxu0 0.0
        %1505 = vmatprep.subr.mxu0 0.0
        %1506 = vmatpush1.msra.mxu0 0.0
        %1507 = vmatprep.subr.mxu0 0.0
        %1508 = vmatpush1.msra.mxu0 0.0
        %1509 = vmatprep.subr.mxu0 0.0
        %1510 = vmatpush1.msra.mxu0 0.0
        %1511 = vmatprep.subr.mxu0 0.0
        %1512 = vmatpush1.msra.mxu0 0.0
        %1513 = vmatprep.subr.mxu0 0.0
        %1514 = vmatpush1.msra.mxu0 %v1212
        %1515 = vmatprep.subr.mxu0 0.0
        %1516 = vmatpush2.msra.mxu0 0.0
        %1517 = vmatprep.subr.mxu0 0.0
        %1518 = vmatpush2.msra.mxu0 0.0
        %1519 = vmatprep.subr.mxu0 0.0
        %1520 = vmatpush2.msra.mxu0 0.0
        %1521 = vmatprep.subr.mxu0 0.0
        %1522 = vmatpush2.msra.mxu0 0.0
        %1523 = vmatprep.subr.mxu0 0.0
        %1524 = vmatpush2.msra.mxu0 0.0
        %1525 = vmatprep.subr.mxu0 0.0
        %1526 = vmatpush2.msra.mxu0 0.0
        %1527 = vmatprep.subr.mxu0 0.0
        %1528 = vmatpush2.msra.mxu0 0.0
        %1529 = vmatprep.subr.mxu0 0.0
        %1530 = vmatpush2.msra.mxu0 0.0
        %1531 = vmatprep.subr.mxu0 0.0
        %1532 = vmatpush2.msra.mxu0 0.0
        %1533 = vmatprep.subr.mxu0 0.0
        %1534 = vmatpush2.msra.mxu0 0.0
        %1535 = vmatprep.subr.mxu0 0.0
        %1536 = vmatpush2.msra.mxu0 0.0
        %1537 = vmatprep.subr.mxu0 0.0
        %1538 = vmatpush2.msra.mxu0 0.0
        %1539 = vmatprep.subr.mxu0 0.0
        %1540 = vmatpush2.msra.mxu0 0.0
        %1541 = vmatprep.subr.mxu0 0.0
        %1542 = vmatpush2.msra.mxu0 0.0
        %1543 = vmatprep.subr.mxu0 0.0
        %1544 = vmatpush2.msra.mxu0 0.0
        %1545 = vmatprep.subr.mxu0 0.0
        %1546 = vmatpush2.msra.mxu0 0.0
        %1547 = vmatprep.mubr.f32.mxu0 0.0
        %1548 = vmatmul.mubr.f32.gmra.mxu0 %v1478
        %v1549 = vpop.f32.mrf.mxu0
        %v1550 = vadd.f32 0.0, %v1549
        %v1551 = vpop.f32.mrf.mxu0
        %1552 = vmatprep.mubr.f32.mxu0 0.0
        %1553 = vmatmul.mubr.f32.gmra.mxu0 %v1481
        %v1554 = vpop.f32.mrf.mxu0
        %v1555 = vadd.f32 0.0, %v1554
        %v1556 = vpop.f32.mrf.mxu0
        %1557 = vdwg.mxu0
        %1558 = vrot.lane.b32.xlu0 %v945, 120
        %v1559 = vpop.permute.xlu0 %1558
        %1560 = vrot.lane.b32.xlu0 %v1035, 120
        %v1561 = vpop.permute.xlu0 %1560
        %1562 = vrot.lane.b32.xlu0 %v1040, 120
        %v1563 = vpop.permute.xlu0 %1562
        %v1564 = vsel %vm1215, %v1559, 0
        %v1566 = vsel %vm1215, %v1561, 0
        %v1568 = vsel %vm1215, %v1563, 0
        %1570 = vmatprep.subr.mxu0 0.0
        %1571 = vmatpush1.xpose.msra.mxu0 0.0
        %1572 = vmatprep.subr.mxu0 0.0
        %1573 = vmatpush1.xpose.msra.mxu0 0.0
        %1574 = vmatprep.subr.mxu0 0.0
        %1575 = vmatpush1.xpose.msra.mxu0 0.0
        %1576 = vmatprep.subr.mxu0 0.0
        %1577 = vmatpush1.xpose.msra.mxu0 0.0
        %1578 = vmatprep.subr.mxu0 0.0
        %1579 = vmatpush1.xpose.msra.mxu0 0.0
        %1580 = vmatprep.subr.mxu0 0.0
        %1581 = vmatpush1.xpose.msra.mxu0 0.0
        %1582 = vmatprep.subr.mxu0 0.0
        %1583 = vmatpush1.xpose.msra.mxu0 0.0
        %1584 = vmatprep.subr.mxu0 0.0
        %1585 = vmatpush1.xpose.msra.mxu0 0.0
        %1586 = vmatprep.subr.mxu0 0.0
        %1587 = vmatpush1.xpose.msra.mxu0 0.0
        %1588 = vmatprep.subr.mxu0 0.0
        %1589 = vmatpush1.xpose.msra.mxu0 0.0
        %1590 = vmatprep.subr.mxu0 0.0
        %1591 = vmatpush1.xpose.msra.mxu0 0.0
        %1592 = vmatprep.subr.mxu0 0.0
        %1593 = vmatpush1.xpose.msra.mxu0 0.0
        %1594 = vmatprep.subr.mxu0 0.0
        %1595 = vmatpush1.xpose.msra.mxu0 0.0
        %1596 = vmatprep.subr.mxu0 0.0
        %1597 = vmatpush1.xpose.msra.mxu0 0.0
        %1598 = vmatprep.subr.mxu0 0.0
        %1599 = vmatpush1.xpose.msra.mxu0 %v1568
        %1600 = vmatprep.subr.mxu0 0.0
        %1601 = vmatpush1.xpose.msra.mxu0 %v1566
        %1602 = vmatprep.subr.mxu0 0.0
        %1603 = vmatpush2.xpose.msra.mxu0 0.0
        %1604 = vmatprep.subr.mxu0 0.0
        %1605 = vmatpush2.xpose.msra.mxu0 0.0
        %1606 = vmatprep.subr.mxu0 0.0
        %1607 = vmatpush2.xpose.msra.mxu0 0.0
        %1608 = vmatprep.subr.mxu0 0.0
        %1609 = vmatpush2.xpose.msra.mxu0 0.0
        %1610 = vmatprep.subr.mxu0 0.0
        %1611 = vmatpush2.xpose.msra.mxu0 0.0
        %1612 = vmatprep.subr.mxu0 0.0
        %1613 = vmatpush2.xpose.msra.mxu0 0.0
        %1614 = vmatprep.subr.mxu0 0.0
        %1615 = vmatpush2.xpose.msra.mxu0 0.0
        %1616 = vmatprep.subr.mxu0 0.0
        %1617 = vmatpush2.xpose.msra.mxu0 0.0
        %1618 = vmatprep.subr.mxu0 0.0
        %1619 = vmatpush2.xpose.msra.mxu0 0.0
        %1620 = vmatprep.subr.mxu0 0.0
        %1621 = vmatpush2.xpose.msra.mxu0 0.0
        %1622 = vmatprep.subr.mxu0 0.0
        %1623 = vmatpush2.xpose.msra.mxu0 0.0
        %1624 = vmatprep.subr.mxu0 0.0
        %1625 = vmatpush2.xpose.msra.mxu0 0.0
        %1626 = vmatprep.subr.mxu0 0.0
        %1627 = vmatpush2.xpose.msra.mxu0 0.0
        %1628 = vmatprep.subr.mxu0 0.0
        %1629 = vmatpush2.xpose.msra.mxu0 0.0
        %1630 = vmatprep.subr.mxu0 0.0
        %1631 = vmatpush2.xpose.msra.mxu0 0.0
        %1632 = vmatprep.subr.mxu0 0.0
        %1633 = vmatpush2.xpose.msra.mxu0 0.0
        %1634 = vmatprep.mubr.f32.mxu0 0.0
        %1635 = vmatmul.mubr.f32.gmra.mxu0 %v1564
        %v1636 = vpop.f32.mrf.mxu0
        %v1637 = vadd.f32 0.0, %v1636
        %v1638 = vpop.f32.mrf.mxu0
        %1639 = vdwg.mxu0
        %1640 = vmatprep.subr.mxu0 0.0
        %1641 = vmatpush1.xpose.msra.mxu0 0.0
        %1642 = vmatprep.subr.mxu0 0.0
        %1643 = vmatpush1.xpose.msra.mxu0 0.0
        %1644 = vmatprep.subr.mxu0 0.0
        %1645 = vmatpush1.xpose.msra.mxu0 0.0
        %1646 = vmatprep.subr.mxu0 0.0
        %1647 = vmatpush1.xpose.msra.mxu0 0.0
        %1648 = vmatprep.subr.mxu0 0.0
        %1649 = vmatpush1.xpose.msra.mxu0 0.0
        %1650 = vmatprep.subr.mxu0 0.0
        %1651 = vmatpush1.xpose.msra.mxu0 0.0
        %1652 = vmatprep.subr.mxu0 0.0
        %1653 = vmatpush1.xpose.msra.mxu0 0.0
        %1654 = vmatprep.subr.mxu0 0.0
        %1655 = vmatpush1.xpose.msra.mxu0 0.0
        %1656 = vmatprep.subr.mxu0 0.0
        %1657 = vmatpush1.xpose.msra.mxu0 0.0
        %1658 = vmatprep.subr.mxu0 0.0
        %1659 = vmatpush1.xpose.msra.mxu0 0.0
        %1660 = vmatprep.subr.mxu0 0.0
        %1661 = vmatpush1.xpose.msra.mxu0 0.0
        %1662 = vmatprep.subr.mxu0 0.0
        %1663 = vmatpush1.xpose.msra.mxu0 0.0
        %1664 = vmatprep.subr.mxu0 0.0
        %1665 = vmatpush1.xpose.msra.mxu0 0.0
        %1666 = vmatprep.subr.mxu0 0.0
        %1667 = vmatpush1.xpose.msra.mxu0 0.0
        %1668 = vmatprep.subr.mxu0 0.0
        %1669 = vmatpush1.xpose.msra.mxu0 0.0
        %1670 = vmatprep.subr.mxu0 0.0
        %1671 = vmatpush1.xpose.msra.mxu0 %v1564
        %1672 = vmatprep.subr.mxu0 0.0
        %1673 = vmatpush2.xpose.msra.mxu0 0.0
        %1674 = vmatprep.subr.mxu0 0.0
        %1675 = vmatpush2.xpose.msra.mxu0 0.0
        %1676 = vmatprep.subr.mxu0 0.0
        %1677 = vmatpush2.xpose.msra.mxu0 0.0
        %1678 = vmatprep.subr.mxu0 0.0
        %1679 = vmatpush2.xpose.msra.mxu0 0.0
        %1680 = vmatprep.subr.mxu0 0.0
        %1681 = vmatpush2.xpose.msra.mxu0 0.0
        %1682 = vmatprep.subr.mxu0 0.0
        %1683 = vmatpush2.xpose.msra.mxu0 0.0
        %1684 = vmatprep.subr.mxu0 0.0
        %1685 = vmatpush2.xpose.msra.mxu0 0.0
        %1686 = vmatprep.subr.mxu0 0.0
        %1687 = vmatpush2.xpose.msra.mxu0 0.0
        %1688 = vmatprep.subr.mxu0 0.0
        %1689 = vmatpush2.xpose.msra.mxu0 0.0
        %1690 = vmatprep.subr.mxu0 0.0
        %1691 = vmatpush2.xpose.msra.mxu0 0.0
        %1692 = vmatprep.subr.mxu0 0.0
        %1693 = vmatpush2.xpose.msra.mxu0 0.0
        %1694 = vmatprep.subr.mxu0 0.0
        %1695 = vmatpush2.xpose.msra.mxu0 0.0
        %1696 = vmatprep.subr.mxu0 0.0
        %1697 = vmatpush2.xpose.msra.mxu0 0.0
        %1698 = vmatprep.subr.mxu0 0.0
        %1699 = vmatpush2.xpose.msra.mxu0 0.0
        %1700 = vmatprep.subr.mxu0 0.0
        %1701 = vmatpush2.xpose.msra.mxu0 0.0
        %1702 = vmatprep.subr.mxu0 0.0
        %1703 = vmatpush2.xpose.msra.mxu0 0.0
        %1704 = vmatprep.mubr.f32.mxu0 0.0
        %1705 = vmatmul.mubr.f32.gmra.mxu0 %v1566
        %v1706 = vpop.f32.mrf.mxu0
        %v1707 = vadd.f32 0.0, %v1706
        %v1708 = vpop.f32.mrf.mxu0
        %1709 = vmatprep.mubr.f32.mxu0 0.0
        %1710 = vmatmul.mubr.f32.gmra.mxu0 %v1568
        %v1711 = vpop.f32.mrf.mxu0
        %v1712 = vadd.f32 0.0, %v1711
        %v1713 = vpop.f32.mrf.mxu0
        %1714 = vdwg.mxu0
        %v1715 = vsel %vm1370, %v1637, -inf
        %1716 = vmax.xlane.f32.xlu0 %v1715
        %v1717 = vpop.xlane.xlu0 %1716
        %v1718 = vsub.f32 %v1637, %v1717
        %v1719 = vmul.f32 %v1718, 1.442695
        %v1720 = vpow.pop %v1719
        %v1721 = vsel %vm1370, %v1720, 0.0
        %1722 = vadd.xlane.f32.xlu0 %v1721
        %v1723 = vpop.xlane.xlu0 %1722
        %v1724 = vrcp.pop %v1723
        %v1725 = vmul.f32 %v1720, %v1724
        %v1726 = vsel %vm1215, %v1707, -inf
        %1727 = vmax.xlane.f32.xlu0 %v1726
        %v1728 = vpop.xlane.xlu0 %1727
        %v1729 = vsel %vm1215, %v1712, -inf
        %1730 = vmax.xlane.f32.xlu0 %v1729
        %v1731 = vpop.xlane.xlu0 %1730
        %v1732 = vsub.f32 %v1707, %v1728
        %v1733 = vsub.f32 %v1712, %v1731
        %v1734 = vmul.f32 %v1732, 1.442695
        %v1735 = vpow.pop %v1734
        %v1736 = vmul.f32 %v1733, 1.442695
        %v1737 = vpow.pop %v1736
        %v1738 = vsel %vm1215, %v1735, 0.0
        %1739 = vadd.xlane.f32.xlu0 %v1738
        %v1740 = vpop.xlane.xlu0 %1739
        %v1741 = vsel %vm1215, %v1737, 0.0
        %1742 = vadd.xlane.f32.xlu0 %v1741
        %v1743 = vpop.xlane.xlu0 %1742
        %v1744 = vrcp.pop %v1740
        %v1745 = vrcp.pop %v1743
        %v1746 = vmul.f32 %v1735, %v1744
        %v1747 = vmul.f32 %v1737, %v1745
        %1750 = vrot.lane.b32.xlu0 %v1124, 120
        %v1751 = vpop.permute.xlu0 %1750
        %1752 = vrot.lane.b32.xlu0 %v1129, 120
        %v1753 = vpop.permute.xlu0 %1752
        %v1757 = vsel %vm1370, %v1725, 0
        %1759 = vmatprep.subr.mxu0 0.0
        %1760 = vmatpush1.msra.mxu0 0.0
        %1761 = vmatprep.subr.mxu0 0.0
        %1762 = vmatpush1.msra.mxu0 0.0
        %1763 = vmatprep.subr.mxu0 0.0
        %1764 = vmatpush1.msra.mxu0 0.0
        %1765 = vmatprep.subr.mxu0 0.0
        %1766 = vmatpush1.msra.mxu0 0.0
        %1767 = vmatprep.subr.mxu0 0.0
        %1768 = vmatpush1.msra.mxu0 0.0
        %1769 = vmatprep.subr.mxu0 0.0
        %1770 = vmatpush1.msra.mxu0 0.0
        %1771 = vmatprep.subr.mxu0 0.0
        %1772 = vmatpush1.msra.mxu0 0.0
        %1773 = vmatprep.subr.mxu0 0.0
        %1774 = vmatpush1.msra.mxu0 0.0
        %1775 = vmatprep.subr.mxu0 0.0
        %1776 = vmatpush1.msra.mxu0 0.0
        %1777 = vmatprep.subr.mxu0 0.0
        %1778 = vmatpush1.msra.mxu0 0.0
        %1779 = vmatprep.subr.mxu0 0.0
        %1780 = vmatpush1.msra.mxu0 0.0
        %1781 = vmatprep.subr.mxu0 0.0
        %1782 = vmatpush1.msra.mxu0 0.0
        %1783 = vmatprep.subr.mxu0 0.0
        %1784 = vmatpush1.msra.mxu0 0.0
        %1785 = vmatprep.subr.mxu0 0.0
        %1786 = vmatpush1.msra.mxu0 0.0
        %1787 = vmatprep.subr.mxu0 0.0
        %1788 = vmatpush1.msra.mxu0 %v1753
        %1789 = vmatprep.subr.mxu0 0.0
        %1790 = vmatpush1.msra.mxu0 %v1751
        %1791 = vmatprep.subr.mxu0 0.0
        %1792 = vmatpush2.msra.mxu0 0.0
        %1793 = vmatprep.subr.mxu0 0.0
        %1794 = vmatpush2.msra.mxu0 0.0
        %1795 = vmatprep.subr.mxu0 0.0
        %1796 = vmatpush2.msra.mxu0 0.0
        %1797 = vmatprep.subr.mxu0 0.0
        %1798 = vmatpush2.msra.mxu0 0.0
        %1799 = vmatprep.subr.mxu0 0.0
        %1800 = vmatpush2.msra.mxu0 0.0
        %1801 = vmatprep.subr.mxu0 0.0
        %1802 = vmatpush2.msra.mxu0 0.0
        %1803 = vmatprep.subr.mxu0 0.0
        %1804 = vmatpush2.msra.mxu0 0.0
        %1805 = vmatprep.subr.mxu0 0.0
        %1806 = vmatpush2.msra.mxu0 0.0
        %1807 = vmatprep.subr.mxu0 0.0
        %1808 = vmatpush2.msra.mxu0 0.0
        %1809 = vmatprep.subr.mxu0 0.0
        %1810 = vmatpush2.msra.mxu0 0.0
        %1811 = vmatprep.subr.mxu0 0.0
        %1812 = vmatpush2.msra.mxu0 0.0
        %1813 = vmatprep.subr.mxu0 0.0
        %1814 = vmatpush2.msra.mxu0 0.0
        %1815 = vmatprep.subr.mxu0 0.0
        %1816 = vmatpush2.msra.mxu0 0.0
        %1817 = vmatprep.subr.mxu0 0.0
        %1818 = vmatpush2.msra.mxu0 0.0
        %1819 = vmatprep.subr.mxu0 0.0
        %1820 = vmatpush2.msra.mxu0 0.0
        %1821 = vmatprep.subr.mxu0 0.0
        %1822 = vmatpush2.msra.mxu0 0.0
        %1823 = vmatprep.mubr.f32.mxu0 0.0
        %1824 = vmatmul.mubr.f32.gmra.mxu0 %v1757
        %v1825 = vpop.f32.mrf.mxu0
        %v1826 = vadd.f32 0.0, %v1825
        %v1827 = vpop.f32.mrf.mxu0
        %1828 = vdwg.mxu0
        %1830 = vrot.lane.b32.xlu0 %v1212, 120
        %v1831 = vpop.permute.xlu0 %1830
        %v1834 = vsel %vm1215, %v1746, 0
        %v1837 = vsel %vm1215, %v1747, 0
        %1839 = vmatprep.subr.mxu0 0.0
        %1840 = vmatpush1.msra.mxu0 0.0
        %1841 = vmatprep.subr.mxu0 0.0
        %1842 = vmatpush1.msra.mxu0 0.0
        %1843 = vmatprep.subr.mxu0 0.0
        %1844 = vmatpush1.msra.mxu0 0.0
        %1845 = vmatprep.subr.mxu0 0.0
        %1846 = vmatpush1.msra.mxu0 0.0
        %1847 = vmatprep.subr.mxu0 0.0
        %1848 = vmatpush1.msra.mxu0 0.0
        %1849 = vmatprep.subr.mxu0 0.0
        %1850 = vmatpush1.msra.mxu0 0.0
        %1851 = vmatprep.subr.mxu0 0.0
        %1852 = vmatpush1.msra.mxu0 0.0
        %1853 = vmatprep.subr.mxu0 0.0
        %1854 = vmatpush1.msra.mxu0 0.0
        %1855 = vmatprep.subr.mxu0 0.0
        %1856 = vmatpush1.msra.mxu0 0.0
        %1857 = vmatprep.subr.mxu0 0.0
        %1858 = vmatpush1.msra.mxu0 0.0
        %1859 = vmatprep.subr.mxu0 0.0
        %1860 = vmatpush1.msra.mxu0 0.0
        %1861 = vmatprep.subr.mxu0 0.0
        %1862 = vmatpush1.msra.mxu0 0.0
        %1863 = vmatprep.subr.mxu0 0.0
        %1864 = vmatpush1.msra.mxu0 0.0
        %1865 = vmatprep.subr.mxu0 0.0
        %1866 = vmatpush1.msra.mxu0 0.0
        %1867 = vmatprep.subr.mxu0 0.0
        %1868 = vmatpush1.msra.mxu0 0.0
        %1869 = vmatprep.subr.mxu0 0.0
        %1870 = vmatpush1.msra.mxu0 %v1831
        %1871 = vmatprep.subr.mxu0 0.0
        %1872 = vmatpush2.msra.mxu0 0.0
        %1873 = vmatprep.subr.mxu0 0.0
        %1874 = vmatpush2.msra.mxu0 0.0
        %1875 = vmatprep.subr.mxu0 0.0
        %1876 = vmatpush2.msra.mxu0 0.0
        %1877 = vmatprep.subr.mxu0 0.0
        %1878 = vmatpush2.msra.mxu0 0.0
        %1879 = vmatprep.subr.mxu0 0.0
        %1880 = vmatpush2.msra.mxu0 0.0
        %1881 = vmatprep.subr.mxu0 0.0
        %1882 = vmatpush2.msra.mxu0 0.0
        %1883 = vmatprep.subr.mxu0 0.0
        %1884 = vmatpush2.msra.mxu0 0.0
        %1885 = vmatprep.subr.mxu0 0.0
        %1886 = vmatpush2.msra.mxu0 0.0
        %1887 = vmatprep.subr.mxu0 0.0
        %1888 = vmatpush2.msra.mxu0 0.0
        %1889 = vmatprep.subr.mxu0 0.0
        %1890 = vmatpush2.msra.mxu0 0.0
        %1891 = vmatprep.subr.mxu0 0.0
        %1892 = vmatpush2.msra.mxu0 0.0
        %1893 = vmatprep.subr.mxu0 0.0
        %1894 = vmatpush2.msra.mxu0 0.0
        %1895 = vmatprep.subr.mxu0 0.0
        %1896 = vmatpush2.msra.mxu0 0.0
        %1897 = vmatprep.subr.mxu0 0.0
        %1898 = vmatpush2.msra.mxu0 0.0
        %1899 = vmatprep.subr.mxu0 0.0
        %1900 = vmatpush2.msra.mxu0 0.0
        %1901 = vmatprep.subr.mxu0 0.0
        %1902 = vmatpush2.msra.mxu0 0.0
        %1903 = vmatprep.mubr.f32.mxu0 0.0
        %1904 = vmatmul.mubr.f32.gmra.mxu0 %v1834
        %v1905 = vpop.f32.mrf.mxu0
        %v1906 = vadd.f32 0.0, %v1905
        %v1907 = vpop.f32.mrf.mxu0
        %1908 = vmatprep.mubr.f32.mxu0 0.0
        %1909 = vmatmul.mubr.f32.gmra.mxu0 %v1837
        %v1910 = vpop.f32.mrf.mxu0
        %v1911 = vadd.f32 0.0, %v1910
        %v1912 = vpop.f32.mrf.mxu0
        %1913 = vdwg.mxu0
        %1914 = vrot.lane.b32.xlu0 %v945, 112
        %v1915 = vpop.permute.xlu0 %1914
        %1916 = vrot.lane.b32.xlu0 %v1035, 112
        %v1917 = vpop.permute.xlu0 %1916
        %1918 = vrot.lane.b32.xlu0 %v1040, 112
        %v1919 = vpop.permute.xlu0 %1918
        %v1920 = vsel %vm1215, %v1915, 0
        %v1922 = vsel %vm1215, %v1917, 0
        %v1924 = vsel %vm1215, %v1919, 0
        %1926 = vmatprep.subr.mxu0 0.0
        %1927 = vmatpush1.xpose.msra.mxu0 0.0
        %1928 = vmatprep.subr.mxu0 0.0
        %1929 = vmatpush1.xpose.msra.mxu0 0.0
        %1930 = vmatprep.subr.mxu0 0.0
        %1931 = vmatpush1.xpose.msra.mxu0 0.0
        %1932 = vmatprep.subr.mxu0 0.0
        %1933 = vmatpush1.xpose.msra.mxu0 0.0
        %1934 = vmatprep.subr.mxu0 0.0
        %1935 = vmatpush1.xpose.msra.mxu0 0.0
        %1936 = vmatprep.subr.mxu0 0.0
        %1937 = vmatpush1.xpose.msra.mxu0 0.0
        %1938 = vmatprep.subr.mxu0 0.0
        %1939 = vmatpush1.xpose.msra.mxu0 0.0
        %1940 = vmatprep.subr.mxu0 0.0
        %1941 = vmatpush1.xpose.msra.mxu0 0.0
        %1942 = vmatprep.subr.mxu0 0.0
        %1943 = vmatpush1.xpose.msra.mxu0 0.0
        %1944 = vmatprep.subr.mxu0 0.0
        %1945 = vmatpush1.xpose.msra.mxu0 0.0
        %1946 = vmatprep.subr.mxu0 0.0
        %1947 = vmatpush1.xpose.msra.mxu0 0.0
        %1948 = vmatprep.subr.mxu0 0.0
        %1949 = vmatpush1.xpose.msra.mxu0 0.0
        %1950 = vmatprep.subr.mxu0 0.0
        %1951 = vmatpush1.xpose.msra.mxu0 0.0
        %1952 = vmatprep.subr.mxu0 0.0
        %1953 = vmatpush1.xpose.msra.mxu0 0.0
        %1954 = vmatprep.subr.mxu0 0.0
        %1955 = vmatpush1.xpose.msra.mxu0 %v1924
        %1956 = vmatprep.subr.mxu0 0.0
        %1957 = vmatpush1.xpose.msra.mxu0 %v1922
        %1958 = vmatprep.subr.mxu0 0.0
        %1959 = vmatpush2.xpose.msra.mxu0 0.0
        %1960 = vmatprep.subr.mxu0 0.0
        %1961 = vmatpush2.xpose.msra.mxu0 0.0
        %1962 = vmatprep.subr.mxu0 0.0
        %1963 = vmatpush2.xpose.msra.mxu0 0.0
        %1964 = vmatprep.subr.mxu0 0.0
        %1965 = vmatpush2.xpose.msra.mxu0 0.0
        %1966 = vmatprep.subr.mxu0 0.0
        %1967 = vmatpush2.xpose.msra.mxu0 0.0
        %1968 = vmatprep.subr.mxu0 0.0
        %1969 = vmatpush2.xpose.msra.mxu0 0.0
        %1970 = vmatprep.subr.mxu0 0.0
        %1971 = vmatpush2.xpose.msra.mxu0 0.0
        %1972 = vmatprep.subr.mxu0 0.0
        %1973 = vmatpush2.xpose.msra.mxu0 0.0
        %1974 = vmatprep.subr.mxu0 0.0
        %1975 = vmatpush2.xpose.msra.mxu0 0.0
        %1976 = vmatprep.subr.mxu0 0.0
        %1977 = vmatpush2.xpose.msra.mxu0 0.0
        %1978 = vmatprep.subr.mxu0 0.0
        %1979 = vmatpush2.xpose.msra.mxu0 0.0
        %1980 = vmatprep.subr.mxu0 0.0
        %1981 = vmatpush2.xpose.msra.mxu0 0.0
        %1982 = vmatprep.subr.mxu0 0.0
        %1983 = vmatpush2.xpose.msra.mxu0 0.0
        %1984 = vmatprep.subr.mxu0 0.0
        %1985 = vmatpush2.xpose.msra.mxu0 0.0
        %1986 = vmatprep.subr.mxu0 0.0
        %1987 = vmatpush2.xpose.msra.mxu0 0.0
        %1988 = vmatprep.subr.mxu0 0.0
        %1989 = vmatpush2.xpose.msra.mxu0 0.0
        %1990 = vmatprep.mubr.f32.mxu0 0.0
        %1991 = vmatmul.mubr.f32.gmra.mxu0 %v1920
        %v1992 = vpop.f32.mrf.mxu0
        %v1993 = vadd.f32 0.0, %v1992
        %v1994 = vpop.f32.mrf.mxu0
        %1995 = vdwg.mxu0
        %1996 = vmatprep.subr.mxu0 0.0
        %1997 = vmatpush1.xpose.msra.mxu0 0.0
        %1998 = vmatprep.subr.mxu0 0.0
        %1999 = vmatpush1.xpose.msra.mxu0 0.0
        %2000 = vmatprep.subr.mxu0 0.0
        %2001 = vmatpush1.xpose.msra.mxu0 0.0
        %2002 = vmatprep.subr.mxu0 0.0
        %2003 = vmatpush1.xpose.msra.mxu0 0.0
        %2004 = vmatprep.subr.mxu0 0.0
        %2005 = vmatpush1.xpose.msra.mxu0 0.0
        %2006 = vmatprep.subr.mxu0 0.0
        %2007 = vmatpush1.xpose.msra.mxu0 0.0
        %2008 = vmatprep.subr.mxu0 0.0
        %2009 = vmatpush1.xpose.msra.mxu0 0.0
        %2010 = vmatprep.subr.mxu0 0.0
        %2011 = vmatpush1.xpose.msra.mxu0 0.0
        %2012 = vmatprep.subr.mxu0 0.0
        %2013 = vmatpush1.xpose.msra.mxu0 0.0
        %2014 = vmatprep.subr.mxu0 0.0
        %2015 = vmatpush1.xpose.msra.mxu0 0.0
        %2016 = vmatprep.subr.mxu0 0.0
        %2017 = vmatpush1.xpose.msra.mxu0 0.0
        %2018 = vmatprep.subr.mxu0 0.0
        %2019 = vmatpush1.xpose.msra.mxu0 0.0
        %2020 = vmatprep.subr.mxu0 0.0
        %2021 = vmatpush1.xpose.msra.mxu0 0.0
        %2022 = vmatprep.subr.mxu0 0.0
        %2023 = vmatpush1.xpose.msra.mxu0 0.0
        %2024 = vmatprep.subr.mxu0 0.0
        %2025 = vmatpush1.xpose.msra.mxu0 0.0
        %2026 = vmatprep.subr.mxu0 0.0
        %2027 = vmatpush1.xpose.msra.mxu0 %v1920
        %2028 = vmatprep.subr.mxu0 0.0
        %2029 = vmatpush2.xpose.msra.mxu0 0.0
        %2030 = vmatprep.subr.mxu0 0.0
        %2031 = vmatpush2.xpose.msra.mxu0 0.0
        %2032 = vmatprep.subr.mxu0 0.0
        %2033 = vmatpush2.xpose.msra.mxu0 0.0
        %2034 = vmatprep.subr.mxu0 0.0
        %2035 = vmatpush2.xpose.msra.mxu0 0.0
        %2036 = vmatprep.subr.mxu0 0.0
        %2037 = vmatpush2.xpose.msra.mxu0 0.0
        %2038 = vmatprep.subr.mxu0 0.0
        %2039 = vmatpush2.xpose.msra.mxu0 0.0
        %2040 = vmatprep.subr.mxu0 0.0
        %2041 = vmatpush2.xpose.msra.mxu0 0.0
        %2042 = vmatprep.subr.mxu0 0.0
        %2043 = vmatpush2.xpose.msra.mxu0 0.0
        %2044 = vmatprep.subr.mxu0 0.0
        %2045 = vmatpush2.xpose.msra.mxu0 0.0
        %2046 = vmatprep.subr.mxu0 0.0
        %2047 = vmatpush2.xpose.msra.mxu0 0.0
        %2048 = vmatprep.subr.mxu0 0.0
        %2049 = vmatpush2.xpose.msra.mxu0 0.0
        %2050 = vmatprep.subr.mxu0 0.0
        %2051 = vmatpush2.xpose.msra.mxu0 0.0
        %2052 = vmatprep.subr.mxu0 0.0
        %2053 = vmatpush2.xpose.msra.mxu0 0.0
        %2054 = vmatprep.subr.mxu0 0.0
        %2055 = vmatpush2.xpose.msra.mxu0 0.0
        %2056 = vmatprep.subr.mxu0 0.0
        %2057 = vmatpush2.xpose.msra.mxu0 0.0
        %2058 = vmatprep.subr.mxu0 0.0
        %2059 = vmatpush2.xpose.msra.mxu0 0.0
        %2060 = vmatprep.mubr.f32.mxu0 0.0
        %2061 = vmatmul.mubr.f32.gmra.mxu0 %v1922
        %v2062 = vpop.f32.mrf.mxu0
        %v2063 = vadd.f32 0.0, %v2062
        %v2064 = vpop.f32.mrf.mxu0
        %2065 = vmatprep.mubr.f32.mxu0 0.0
        %2066 = vmatmul.mubr.f32.gmra.mxu0 %v1924
        %v2067 = vpop.f32.mrf.mxu0
        %v2068 = vadd.f32 0.0, %v2067
        %v2069 = vpop.f32.mrf.mxu0
        %2070 = vdwg.mxu0
        %v2071 = vsel %vm1370, %v1993, -inf
        %2072 = vmax.xlane.f32.xlu0 %v2071
        %v2073 = vpop.xlane.xlu0 %2072
        %v2074 = vsub.f32 %v1993, %v2073
        %v2075 = vmul.f32 %v2074, 1.442695
        %v2076 = vpow.pop %v2075
        %v2077 = vsel %vm1370, %v2076, 0.0
        %2078 = vadd.xlane.f32.xlu0 %v2077
        %v2079 = vpop.xlane.xlu0 %2078
        %v2080 = vrcp.pop %v2079
        %v2081 = vmul.f32 %v2076, %v2080
        %v2082 = vsel %vm1215, %v2063, -inf
        %2083 = vmax.xlane.f32.xlu0 %v2082
        %v2084 = vpop.xlane.xlu0 %2083
        %v2085 = vsel %vm1215, %v2068, -inf
        %2086 = vmax.xlane.f32.xlu0 %v2085
        %v2087 = vpop.xlane.xlu0 %2086
        %v2088 = vsub.f32 %v2063, %v2084
        %v2089 = vsub.f32 %v2068, %v2087
        %v2090 = vmul.f32 %v2088, 1.442695
        %v2091 = vpow.pop %v2090
        %v2092 = vmul.f32 %v2089, 1.442695
        %v2093 = vpow.pop %v2092
        %v2094 = vsel %vm1215, %v2091, 0.0
        %2095 = vadd.xlane.f32.xlu0 %v2094
        %v2096 = vpop.xlane.xlu0 %2095
        %v2097 = vsel %vm1215, %v2093, 0.0
        %2098 = vadd.xlane.f32.xlu0 %v2097
        %v2099 = vpop.xlane.xlu0 %2098
        %v2100 = vrcp.pop %v2096
        %v2101 = vrcp.pop %v2099
        %v2102 = vmul.f32 %v2091, %v2100
        %v2103 = vmul.f32 %v2093, %v2101
        %2104 = vrot.lane.b32.xlu0 %v1124, 112
        %v2105 = vpop.permute.xlu0 %2104
        %2106 = vrot.lane.b32.xlu0 %v1129, 112
        %v2107 = vpop.permute.xlu0 %2106
        %v2111 = vsel %vm1370, %v2081, 0
        %2113 = vmatprep.subr.mxu0 0.0
        %2114 = vmatpush1.msra.mxu0 0.0
        %2115 = vmatprep.subr.mxu0 0.0
        %2116 = vmatpush1.msra.mxu0 0.0
        %2117 = vmatprep.subr.mxu0 0.0
        %2118 = vmatpush1.msra.mxu0 0.0
        %2119 = vmatprep.subr.mxu0 0.0
        %2120 = vmatpush1.msra.mxu0 0.0
        %2121 = vmatprep.subr.mxu0 0.0
        %2122 = vmatpush1.msra.mxu0 0.0
        %2123 = vmatprep.subr.mxu0 0.0
        %2124 = vmatpush1.msra.mxu0 0.0
        %2125 = vmatprep.subr.mxu0 0.0
        %2126 = vmatpush1.msra.mxu0 0.0
        %2127 = vmatprep.subr.mxu0 0.0
        %2128 = vmatpush1.msra.mxu0 0.0
        %2129 = vmatprep.subr.mxu0 0.0
        %2130 = vmatpush1.msra.mxu0 0.0
        %2131 = vmatprep.subr.mxu0 0.0
        %2132 = vmatpush1.msra.mxu0 0.0
        %2133 = vmatprep.subr.mxu0 0.0
        %2134 = vmatpush1.msra.mxu0 0.0
        %2135 = vmatprep.subr.mxu0 0.0
        %2136 = vmatpush1.msra.mxu0 0.0
        %2137 = vmatprep.subr.mxu0 0.0
        %2138 = vmatpush1.msra.mxu0 0.0
        %2139 = vmatprep.subr.mxu0 0.0
        %2140 = vmatpush1.msra.mxu0 0.0
        %2141 = vmatprep.subr.mxu0 0.0
        %2142 = vmatpush1.msra.mxu0 %v2107
        %2143 = vmatprep.subr.mxu0 0.0
        %2144 = vmatpush1.msra.mxu0 %v2105
        %2145 = vmatprep.subr.mxu0 0.0
        %2146 = vmatpush2.msra.mxu0 0.0
        %2147 = vmatprep.subr.mxu0 0.0
        %2148 = vmatpush2.msra.mxu0 0.0
        %2149 = vmatprep.subr.mxu0 0.0
        %2150 = vmatpush2.msra.mxu0 0.0
        %2151 = vmatprep.subr.mxu0 0.0
        %2152 = vmatpush2.msra.mxu0 0.0
        %2153 = vmatprep.subr.mxu0 0.0
        %2154 = vmatpush2.msra.mxu0 0.0
        %2155 = vmatprep.subr.mxu0 0.0
        %2156 = vmatpush2.msra.mxu0 0.0
        %2157 = vmatprep.subr.mxu0 0.0
        %2158 = vmatpush2.msra.mxu0 0.0
        %2159 = vmatprep.subr.mxu0 0.0
        %2160 = vmatpush2.msra.mxu0 0.0
        %2161 = vmatprep.subr.mxu0 0.0
        %2162 = vmatpush2.msra.mxu0 0.0
        %2163 = vmatprep.subr.mxu0 0.0
        %2164 = vmatpush2.msra.mxu0 0.0
        %2165 = vmatprep.subr.mxu0 0.0
        %2166 = vmatpush2.msra.mxu0 0.0
        %2167 = vmatprep.subr.mxu0 0.0
        %2168 = vmatpush2.msra.mxu0 0.0
        %2169 = vmatprep.subr.mxu0 0.0
        %2170 = vmatpush2.msra.mxu0 0.0
        %2171 = vmatprep.subr.mxu0 0.0
        %2172 = vmatpush2.msra.mxu0 0.0
        %2173 = vmatprep.subr.mxu0 0.0
        %2174 = vmatpush2.msra.mxu0 0.0
        %2175 = vmatprep.subr.mxu0 0.0
        %2176 = vmatpush2.msra.mxu0 0.0
        %2177 = vmatprep.mubr.f32.mxu0 0.0
        %2178 = vmatmul.mubr.f32.gmra.mxu0 %v2111
        %v2179 = vpop.f32.mrf.mxu0
        %v2180 = vadd.f32 0.0, %v2179
        %v2181 = vpop.f32.mrf.mxu0
        %2182 = vdwg.mxu0
        %2183 = vrot.lane.b32.xlu0 %v1212, 112
        %v2184 = vpop.permute.xlu0 %2183
        %v2187 = vsel %vm1215, %v2102, 0
        %v2190 = vsel %vm1215, %v2103, 0
        %2192 = vmatprep.subr.mxu0 0.0
        %2193 = vmatpush1.msra.mxu0 0.0
        %2194 = vmatprep.subr.mxu0 0.0
        %2195 = vmatpush1.msra.mxu0 0.0
        %2196 = vmatprep.subr.mxu0 0.0
        %2197 = vmatpush1.msra.mxu0 0.0
        %2198 = vmatprep.subr.mxu0 0.0
        %2199 = vmatpush1.msra.mxu0 0.0
        %2200 = vmatprep.subr.mxu0 0.0
        %2201 = vmatpush1.msra.mxu0 0.0
        %2202 = vmatprep.subr.mxu0 0.0
        %2203 = vmatpush1.msra.mxu0 0.0
        %2204 = vmatprep.subr.mxu0 0.0
        %2205 = vmatpush1.msra.mxu0 0.0
        %2206 = vmatprep.subr.mxu0 0.0
        %2207 = vmatpush1.msra.mxu0 0.0
        %2208 = vmatprep.subr.mxu0 0.0
        %2209 = vmatpush1.msra.mxu0 0.0
        %2210 = vmatprep.subr.mxu0 0.0
        %2211 = vmatpush1.msra.mxu0 0.0
        %2212 = vmatprep.subr.mxu0 0.0
        %2213 = vmatpush1.msra.mxu0 0.0
        %2214 = vmatprep.subr.mxu0 0.0
        %2215 = vmatpush1.msra.mxu0 0.0
        %2216 = vmatprep.subr.mxu0 0.0
        %2217 = vmatpush1.msra.mxu0 0.0
        %2218 = vmatprep.subr.mxu0 0.0
        %2219 = vmatpush1.msra.mxu0 0.0
        %2220 = vmatprep.subr.mxu0 0.0
        %2221 = vmatpush1.msra.mxu0 0.0
        %2222 = vmatprep.subr.mxu0 0.0
        %2223 = vmatpush1.msra.mxu0 %v2184
        %2224 = vmatprep.subr.mxu0 0.0
        %2225 = vmatpush2.msra.mxu0 0.0
        %2226 = vmatprep.subr.mxu0 0.0
        %2227 = vmatpush2.msra.mxu0 0.0
        %2228 = vmatprep.subr.mxu0 0.0
        %2229 = vmatpush2.msra.mxu0 0.0
        %2230 = vmatprep.subr.mxu0 0.0
        %2231 = vmatpush2.msra.mxu0 0.0
        %2232 = vmatprep.subr.mxu0 0.0
        %2233 = vmatpush2.msra.mxu0 0.0
        %2234 = vmatprep.subr.mxu0 0.0
        %2235 = vmatpush2.msra.mxu0 0.0
        %2236 = vmatprep.subr.mxu0 0.0
        %2237 = vmatpush2.msra.mxu0 0.0
        %2238 = vmatprep.subr.mxu0 0.0
        %2239 = vmatpush2.msra.mxu0 0.0
        %2240 = vmatprep.subr.mxu0 0.0
        %2241 = vmatpush2.msra.mxu0 0.0
        %2242 = vmatprep.subr.mxu0 0.0
        %2243 = vmatpush2.msra.mxu0 0.0
        %2244 = vmatprep.subr.mxu0 0.0
        %2245 = vmatpush2.msra.mxu0 0.0
        %2246 = vmatprep.subr.mxu0 0.0
        %2247 = vmatpush2.msra.mxu0 0.0
        %2248 = vmatprep.subr.mxu0 0.0
        %2249 = vmatpush2.msra.mxu0 0.0
        %2250 = vmatprep.subr.mxu0 0.0
        %2251 = vmatpush2.msra.mxu0 0.0
        %2252 = vmatprep.subr.mxu0 0.0
        %2253 = vmatpush2.msra.mxu0 0.0
        %2254 = vmatprep.subr.mxu0 0.0
        %2255 = vmatpush2.msra.mxu0 0.0
        %2256 = vmatprep.mubr.f32.mxu0 0.0
        %2257 = vmatmul.mubr.f32.gmra.mxu0 %v2187
        %v2258 = vpop.f32.mrf.mxu0
        %v2259 = vadd.f32 0.0, %v2258
        %v2260 = vpop.f32.mrf.mxu0
        %2261 = vmatprep.mubr.f32.mxu0 0.0
        %2262 = vmatmul.mubr.f32.gmra.mxu0 %v2190
        %v2263 = vpop.f32.mrf.mxu0
        %v2264 = vadd.f32 0.0, %v2263
        %v2265 = vpop.f32.mrf.mxu0
        %2266 = vdwg.mxu0
        %2267 = vrot.lane.b32.xlu0 %v945, 104
        %v2268 = vpop.permute.xlu0 %2267
        %2269 = vrot.lane.b32.xlu0 %v1035, 104
        %v2270 = vpop.permute.xlu0 %2269
        %2271 = vrot.lane.b32.xlu0 %v1040, 104
        %v2272 = vpop.permute.xlu0 %2271
        %v2273 = vsel %vm1215, %v2268, 0
        %v2275 = vsel %vm1215, %v2270, 0
        %v2277 = vsel %vm1215, %v2272, 0
        %2279 = vmatprep.subr.mxu0 0.0
        %2280 = vmatpush1.xpose.msra.mxu0 0.0
        %2281 = vmatprep.subr.mxu0 0.0
        %2282 = vmatpush1.xpose.msra.mxu0 0.0
        %2283 = vmatprep.subr.mxu0 0.0
        %2284 = vmatpush1.xpose.msra.mxu0 0.0
        %2285 = vmatprep.subr.mxu0 0.0
        %2286 = vmatpush1.xpose.msra.mxu0 0.0
        %2287 = vmatprep.subr.mxu0 0.0
        %2288 = vmatpush1.xpose.msra.mxu0 0.0
        %2289 = vmatprep.subr.mxu0 0.0
        %2290 = vmatpush1.xpose.msra.mxu0 0.0
        %2291 = vmatprep.subr.mxu0 0.0
        %2292 = vmatpush1.xpose.msra.mxu0 0.0
        %2293 = vmatprep.subr.mxu0 0.0
        %2294 = vmatpush1.xpose.msra.mxu0 0.0
        %2295 = vmatprep.subr.mxu0 0.0
        %2296 = vmatpush1.xpose.msra.mxu0 0.0
        %2297 = vmatprep.subr.mxu0 0.0
        %2298 = vmatpush1.xpose.msra.mxu0 0.0
        %2299 = vmatprep.subr.mxu0 0.0
        %2300 = vmatpush1.xpose.msra.mxu0 0.0
        %2301 = vmatprep.subr.mxu0 0.0
        %2302 = vmatpush1.xpose.msra.mxu0 0.0
        %2303 = vmatprep.subr.mxu0 0.0
        %2304 = vmatpush1.xpose.msra.mxu0 0.0
        %2305 = vmatprep.subr.mxu0 0.0
        %2306 = vmatpush1.xpose.msra.mxu0 0.0
        %2307 = vmatprep.subr.mxu0 0.0
        %2308 = vmatpush1.xpose.msra.mxu0 %v2277
        %2309 = vmatprep.subr.mxu0 0.0
        %2310 = vmatpush1.xpose.msra.mxu0 %v2275
        %2311 = vmatprep.subr.mxu0 0.0
        %2312 = vmatpush2.xpose.msra.mxu0 0.0
        %2313 = vmatprep.subr.mxu0 0.0
        %2314 = vmatpush2.xpose.msra.mxu0 0.0
        %2315 = vmatprep.subr.mxu0 0.0
        %2316 = vmatpush2.xpose.msra.mxu0 0.0
        %2317 = vmatprep.subr.mxu0 0.0
        %2318 = vmatpush2.xpose.msra.mxu0 0.0
        %2319 = vmatprep.subr.mxu0 0.0
        %2320 = vmatpush2.xpose.msra.mxu0 0.0
        %2321 = vmatprep.subr.mxu0 0.0
        %2322 = vmatpush2.xpose.msra.mxu0 0.0
        %2323 = vmatprep.subr.mxu0 0.0
        %2324 = vmatpush2.xpose.msra.mxu0 0.0
        %2325 = vmatprep.subr.mxu0 0.0
        %2326 = vmatpush2.xpose.msra.mxu0 0.0
        %2327 = vmatprep.subr.mxu0 0.0
        %2328 = vmatpush2.xpose.msra.mxu0 0.0
        %2329 = vmatprep.subr.mxu0 0.0
        %2330 = vmatpush2.xpose.msra.mxu0 0.0
        %2331 = vmatprep.subr.mxu0 0.0
        %2332 = vmatpush2.xpose.msra.mxu0 0.0
        %2333 = vmatprep.subr.mxu0 0.0
        %2334 = vmatpush2.xpose.msra.mxu0 0.0
        %2335 = vmatprep.subr.mxu0 0.0
        %2336 = vmatpush2.xpose.msra.mxu0 0.0
        %2337 = vmatprep.subr.mxu0 0.0
        %2338 = vmatpush2.xpose.msra.mxu0 0.0
        %2339 = vmatprep.subr.mxu0 0.0
        %2340 = vmatpush2.xpose.msra.mxu0 0.0
        %2341 = vmatprep.subr.mxu0 0.0
        %2342 = vmatpush2.xpose.msra.mxu0 0.0
        %2343 = vmatprep.mubr.f32.mxu0 0.0
        %2344 = vmatmul.mubr.f32.gmra.mxu0 %v2273
        %v2345 = vpop.f32.mrf.mxu0
        %v2346 = vadd.f32 0.0, %v2345
        %v2347 = vpop.f32.mrf.mxu0
        %2348 = vdwg.mxu0
        %2349 = vmatprep.subr.mxu0 0.0
        %2350 = vmatpush1.xpose.msra.mxu0 0.0
        %2351 = vmatprep.subr.mxu0 0.0
        %2352 = vmatpush1.xpose.msra.mxu0 0.0
        %2353 = vmatprep.subr.mxu0 0.0
        %2354 = vmatpush1.xpose.msra.mxu0 0.0
        %2355 = vmatprep.subr.mxu0 0.0
        %2356 = vmatpush1.xpose.msra.mxu0 0.0
        %2357 = vmatprep.subr.mxu0 0.0
        %2358 = vmatpush1.xpose.msra.mxu0 0.0
        %2359 = vmatprep.subr.mxu0 0.0
        %2360 = vmatpush1.xpose.msra.mxu0 0.0
        %2361 = vmatprep.subr.mxu0 0.0
        %2362 = vmatpush1.xpose.msra.mxu0 0.0
        %2363 = vmatprep.subr.mxu0 0.0
        %2364 = vmatpush1.xpose.msra.mxu0 0.0
        %2365 = vmatprep.subr.mxu0 0.0
        %2366 = vmatpush1.xpose.msra.mxu0 0.0
        %2367 = vmatprep.subr.mxu0 0.0
        %2368 = vmatpush1.xpose.msra.mxu0 0.0
        %2369 = vmatprep.subr.mxu0 0.0
        %2370 = vmatpush1.xpose.msra.mxu0 0.0
        %2371 = vmatprep.subr.mxu0 0.0
        %2372 = vmatpush1.xpose.msra.mxu0 0.0
        %2373 = vmatprep.subr.mxu0 0.0
        %2374 = vmatpush1.xpose.msra.mxu0 0.0
        %2375 = vmatprep.subr.mxu0 0.0
        %2376 = vmatpush1.xpose.msra.mxu0 0.0
        %2377 = vmatprep.subr.mxu0 0.0
        %2378 = vmatpush1.xpose.msra.mxu0 0.0
        %2379 = vmatprep.subr.mxu0 0.0
        %2380 = vmatpush1.xpose.msra.mxu0 %v2273
        %2381 = vmatprep.subr.mxu0 0.0
        %2382 = vmatpush2.xpose.msra.mxu0 0.0
        %2383 = vmatprep.subr.mxu0 0.0
        %2384 = vmatpush2.xpose.msra.mxu0 0.0
        %2385 = vmatprep.subr.mxu0 0.0
        %2386 = vmatpush2.xpose.msra.mxu0 0.0
        %2387 = vmatprep.subr.mxu0 0.0
        %2388 = vmatpush2.xpose.msra.mxu0 0.0
        %2389 = vmatprep.subr.mxu0 0.0
        %2390 = vmatpush2.xpose.msra.mxu0 0.0
        %2391 = vmatprep.subr.mxu0 0.0
        %2392 = vmatpush2.xpose.msra.mxu0 0.0
        %2393 = vmatprep.subr.mxu0 0.0
        %2394 = vmatpush2.xpose.msra.mxu0 0.0
        %2395 = vmatprep.subr.mxu0 0.0
        %2396 = vmatpush2.xpose.msra.mxu0 0.0
        %2397 = vmatprep.subr.mxu0 0.0
        %2398 = vmatpush2.xpose.msra.mxu0 0.0
        %2399 = vmatprep.subr.mxu0 0.0
        %2400 = vmatpush2.xpose.msra.mxu0 0.0
        %2401 = vmatprep.subr.mxu0 0.0
        %2402 = vmatpush2.xpose.msra.mxu0 0.0
        %2403 = vmatprep.subr.mxu0 0.0
        %2404 = vmatpush2.xpose.msra.mxu0 0.0
        %2405 = vmatprep.subr.mxu0 0.0
        %2406 = vmatpush2.xpose.msra.mxu0 0.0
        %2407 = vmatprep.subr.mxu0 0.0
        %2408 = vmatpush2.xpose.msra.mxu0 0.0
        %2409 = vmatprep.subr.mxu0 0.0
        %2410 = vmatpush2.xpose.msra.mxu0 0.0
        %2411 = vmatprep.subr.mxu0 0.0
        %2412 = vmatpush2.xpose.msra.mxu0 0.0
        %2413 = vmatprep.mubr.f32.mxu0 0.0
        %2414 = vmatmul.mubr.f32.gmra.mxu0 %v2275
        %v2415 = vpop.f32.mrf.mxu0
        %v2416 = vadd.f32 0.0, %v2415
        %v2417 = vpop.f32.mrf.mxu0
        %2418 = vmatprep.mubr.f32.mxu0 0.0
        %2419 = vmatmul.mubr.f32.gmra.mxu0 %v2277
        %v2420 = vpop.f32.mrf.mxu0
        %v2421 = vadd.f32 0.0, %v2420
        %v2422 = vpop.f32.mrf.mxu0
        %2423 = vdwg.mxu0
        %v2424 = vsel %vm1370, %v2346, -inf
        %2425 = vmax.xlane.f32.xlu0 %v2424
        %v2426 = vpop.xlane.xlu0 %2425
        %v2427 = vsub.f32 %v2346, %v2426
        %v2428 = vmul.f32 %v2427, 1.442695
        %v2429 = vpow.pop %v2428
        %v2430 = vsel %vm1370, %v2429, 0.0
        %2431 = vadd.xlane.f32.xlu0 %v2430
        %v2432 = vpop.xlane.xlu0 %2431
        %v2433 = vrcp.pop %v2432
        %v2434 = vmul.f32 %v2429, %v2433
        %v2435 = vsel %vm1215, %v2416, -inf
        %2436 = vmax.xlane.f32.xlu0 %v2435
        %v2437 = vpop.xlane.xlu0 %2436
        %v2438 = vsel %vm1215, %v2421, -inf
        %2439 = vmax.xlane.f32.xlu0 %v2438
        %v2440 = vpop.xlane.xlu0 %2439
        %v2441 = vsub.f32 %v2416, %v2437
        %v2442 = vsub.f32 %v2421, %v2440
        %v2443 = vmul.f32 %v2441, 1.442695
        %v2444 = vpow.pop %v2443
        %v2445 = vmul.f32 %v2442, 1.442695
        %v2446 = vpow.pop %v2445
        %v2447 = vsel %vm1215, %v2444, 0.0
        %2448 = vadd.xlane.f32.xlu0 %v2447
        %v2449 = vpop.xlane.xlu0 %2448
        %v2450 = vsel %vm1215, %v2446, 0.0
        %2451 = vadd.xlane.f32.xlu0 %v2450
        %v2452 = vpop.xlane.xlu0 %2451
        %v2453 = vrcp.pop %v2449
        %v2454 = vrcp.pop %v2452
        %v2455 = vmul.f32 %v2444, %v2453
        %v2456 = vmul.f32 %v2446, %v2454
        %2457 = vrot.lane.b32.xlu0 %v1124, 104
        %v2458 = vpop.permute.xlu0 %2457
        %2459 = vrot.lane.b32.xlu0 %v1129, 104
        %v2460 = vpop.permute.xlu0 %2459
        %v2464 = vsel %vm1370, %v2434, 0
        %2466 = vmatprep.subr.mxu0 0.0
        %2467 = vmatpush1.msra.mxu0 0.0
        %2468 = vmatprep.subr.mxu0 0.0
        %2469 = vmatpush1.msra.mxu0 0.0
        %2470 = vmatprep.subr.mxu0 0.0
        %2471 = vmatpush1.msra.mxu0 0.0
        %2472 = vmatprep.subr.mxu0 0.0
        %2473 = vmatpush1.msra.mxu0 0.0
        %2474 = vmatprep.subr.mxu0 0.0
        %2475 = vmatpush1.msra.mxu0 0.0
        %2476 = vmatprep.subr.mxu0 0.0
        %2477 = vmatpush1.msra.mxu0 0.0
        %2478 = vmatprep.subr.mxu0 0.0
        %2479 = vmatpush1.msra.mxu0 0.0
        %2480 = vmatprep.subr.mxu0 0.0
        %2481 = vmatpush1.msra.mxu0 0.0
        %2482 = vmatprep.subr.mxu0 0.0
        %2483 = vmatpush1.msra.mxu0 0.0
        %2484 = vmatprep.subr.mxu0 0.0
        %2485 = vmatpush1.msra.mxu0 0.0
        %2486 = vmatprep.subr.mxu0 0.0
        %2487 = vmatpush1.msra.mxu0 0.0
        %2488 = vmatprep.subr.mxu0 0.0
        %2489 = vmatpush1.msra.mxu0 0.0
        %2490 = vmatprep.subr.mxu0 0.0
        %2491 = vmatpush1.msra.mxu0 0.0
        %2492 = vmatprep.subr.mxu0 0.0
        %2493 = vmatpush1.msra.mxu0 0.0
        %2494 = vmatprep.subr.mxu0 0.0
        %2495 = vmatpush1.msra.mxu0 %v2460
        %2496 = vmatprep.subr.mxu0 0.0
        %2497 = vmatpush1.msra.mxu0 %v2458
        %2498 = vmatprep.subr.mxu0 0.0
        %2499 = vmatpush2.msra.mxu0 0.0
        %2500 = vmatprep.subr.mxu0 0.0
        %2501 = vmatpush2.msra.mxu0 0.0
        %2502 = vmatprep.subr.mxu0 0.0
        %2503 = vmatpush2.msra.mxu0 0.0
        %2504 = vmatprep.subr.mxu0 0.0
        %2505 = vmatpush2.msra.mxu0 0.0
        %2506 = vmatprep.subr.mxu0 0.0
        %2507 = vmatpush2.msra.mxu0 0.0
        %2508 = vmatprep.subr.mxu0 0.0
        %2509 = vmatpush2.msra.mxu0 0.0
        %2510 = vmatprep.subr.mxu0 0.0
        %2511 = vmatpush2.msra.mxu0 0.0
        %2512 = vmatprep.subr.mxu0 0.0
        %2513 = vmatpush2.msra.mxu0 0.0
        %2514 = vmatprep.subr.mxu0 0.0
        %2515 = vmatpush2.msra.mxu0 0.0
        %2516 = vmatprep.subr.mxu0 0.0
        %2517 = vmatpush2.msra.mxu0 0.0
        %2518 = vmatprep.subr.mxu0 0.0
        %2519 = vmatpush2.msra.mxu0 0.0
        %2520 = vmatprep.subr.mxu0 0.0
        %2521 = vmatpush2.msra.mxu0 0.0
        %2522 = vmatprep.subr.mxu0 0.0
        %2523 = vmatpush2.msra.mxu0 0.0
        %2524 = vmatprep.subr.mxu0 0.0
        %2525 = vmatpush2.msra.mxu0 0.0
        %2526 = vmatprep.subr.mxu0 0.0
        %2527 = vmatpush2.msra.mxu0 0.0
        %2528 = vmatprep.subr.mxu0 0.0
        %2529 = vmatpush2.msra.mxu0 0.0
        %2530 = vmatprep.mubr.f32.mxu0 0.0
        %2531 = vmatmul.mubr.f32.gmra.mxu0 %v2464
        %v2532 = vpop.f32.mrf.mxu0
        %v2533 = vadd.f32 0.0, %v2532
        %v2534 = vpop.f32.mrf.mxu0
        %2535 = vdwg.mxu0
        %2536 = vrot.lane.b32.xlu0 %v1212, 104
        %v2537 = vpop.permute.xlu0 %2536
        %v2540 = vsel %vm1215, %v2455, 0
        %v2543 = vsel %vm1215, %v2456, 0
        %2545 = vmatprep.subr.mxu0 0.0
        %2546 = vmatpush1.msra.mxu0 0.0
        %2547 = vmatprep.subr.mxu0 0.0
        %2548 = vmatpush1.msra.mxu0 0.0
        %2549 = vmatprep.subr.mxu0 0.0
        %2550 = vmatpush1.msra.mxu0 0.0
        %2551 = vmatprep.subr.mxu0 0.0
        %2552 = vmatpush1.msra.mxu0 0.0
        %2553 = vmatprep.subr.mxu0 0.0
        %2554 = vmatpush1.msra.mxu0 0.0
        %2555 = vmatprep.subr.mxu0 0.0
        %2556 = vmatpush1.msra.mxu0 0.0
        %2557 = vmatprep.subr.mxu0 0.0
        %2558 = vmatpush1.msra.mxu0 0.0
        %2559 = vmatprep.subr.mxu0 0.0
        %2560 = vmatpush1.msra.mxu0 0.0
        %2561 = vmatprep.subr.mxu0 0.0
        %2562 = vmatpush1.msra.mxu0 0.0
        %2563 = vmatprep.subr.mxu0 0.0
        %2564 = vmatpush1.msra.mxu0 0.0
        %2565 = vmatprep.subr.mxu0 0.0
        %2566 = vmatpush1.msra.mxu0 0.0
        %2567 = vmatprep.subr.mxu0 0.0
        %2568 = vmatpush1.msra.mxu0 0.0
        %2569 = vmatprep.subr.mxu0 0.0
        %2570 = vmatpush1.msra.mxu0 0.0
        %2571 = vmatprep.subr.mxu0 0.0
        %2572 = vmatpush1.msra.mxu0 0.0
        %2573 = vmatprep.subr.mxu0 0.0
        %2574 = vmatpush1.msra.mxu0 0.0
        %2575 = vmatprep.subr.mxu0 0.0
        %2576 = vmatpush1.msra.mxu0 %v2537
        %2577 = vmatprep.subr.mxu0 0.0
        %2578 = vmatpush2.msra.mxu0 0.0
        %2579 = vmatprep.subr.mxu0 0.0
        %2580 = vmatpush2.msra.mxu0 0.0
        %2581 = vmatprep.subr.mxu0 0.0
        %2582 = vmatpush2.msra.mxu0 0.0
        %2583 = vmatprep.subr.mxu0 0.0
        %2584 = vmatpush2.msra.mxu0 0.0
        %2585 = vmatprep.subr.mxu0 0.0
        %2586 = vmatpush2.msra.mxu0 0.0
        %2587 = vmatprep.subr.mxu0 0.0
        %2588 = vmatpush2.msra.mxu0 0.0
        %2589 = vmatprep.subr.mxu0 0.0
        %2590 = vmatpush2.msra.mxu0 0.0
        %2591 = vmatprep.subr.mxu0 0.0
        %2592 = vmatpush2.msra.mxu0 0.0
        %2593 = vmatprep.subr.mxu0 0.0
        %2594 = vmatpush2.msra.mxu0 0.0
        %2595 = vmatprep.subr.mxu0 0.0
        %2596 = vmatpush2.msra.mxu0 0.0
        %2597 = vmatprep.subr.mxu0 0.0
        %2598 = vmatpush2.msra.mxu0 0.0
        %2599 = vmatprep.subr.mxu0 0.0
        %2600 = vmatpush2.msra.mxu0 0.0
        %2601 = vmatprep.subr.mxu0 0.0
        %2602 = vmatpush2.msra.mxu0 0.0
        %2603 = vmatprep.subr.mxu0 0.0
        %2604 = vmatpush2.msra.mxu0 0.0
        %2605 = vmatprep.subr.mxu0 0.0
        %2606 = vmatpush2.msra.mxu0 0.0
        %2607 = vmatprep.subr.mxu0 0.0
        %2608 = vmatpush2.msra.mxu0 0.0
        %2609 = vmatprep.mubr.f32.mxu0 0.0
        %2610 = vmatmul.mubr.f32.gmra.mxu0 %v2540
        %v2611 = vpop.f32.mrf.mxu0
        %v2612 = vadd.f32 0.0, %v2611
        %v2613 = vpop.f32.mrf.mxu0
        %2614 = vmatprep.mubr.f32.mxu0 0.0
        %2615 = vmatmul.mubr.f32.gmra.mxu0 %v2543
        %v2616 = vpop.f32.mrf.mxu0
        %v2617 = vadd.f32 0.0, %v2616
        %v2618 = vpop.f32.mrf.mxu0
        %2619 = vdwg.mxu0
        %2621 = vrot.lane.b32.xlu0 %v1826, 8
        %v2622 = vpop.permute.xlu0 %2621
        %2625 = vrot.lane.b32.xlu0 %v2180, 16
        %v2626 = vpop.permute.xlu0 %2625
        %2629 = vrot.lane.b32.xlu0 %v2533, 24
        %v2630 = vpop.permute.xlu0 %2629
        %v2632 = vsel %vm1215, %v1474, %v2622
        %v2633 = vsel %vm1370, %v2632, %v2626
        %vm2634 = vcmask 195584
        %v2635 = vsel %vm2634, %v2633, %v2630
        %2638 = vrot.lane.b32.xlu0 %v1906, 8
        %v2639 = vpop.permute.xlu0 %2638
        %2640 = vrot.lane.b32.xlu0 %v1911, 8
        %v2641 = vpop.permute.xlu0 %2640
        %2646 = vrot.lane.b32.xlu0 %v2259, 16
        %v2647 = vpop.permute.xlu0 %2646
        %2648 = vrot.lane.b32.xlu0 %v2264, 16
        %v2649 = vpop.permute.xlu0 %2648
        %2654 = vrot.lane.b32.xlu0 %v2612, 24
        %v2655 = vpop.permute.xlu0 %2654
        %2656 = vrot.lane.b32.xlu0 %v2617, 24
        %v2657 = vpop.permute.xlu0 %2656
        %v2660 = vsel %vm1215, %v1550, %v2639
        %v2661 = vsel %vm1215, %v1555, %v2641
        %v2662 = vsel %vm1370, %v2660, %v2647
        %v2663 = vsel %vm1370, %v2661, %v2649
        %v2664 = vsel %vm2634, %v2662, %v2655
        %v2665 = vsel %vm2634, %v2663, %v2657
        %v2667 = vlaneseq
        %v2668 = vshrl.u32 %v2667, 7
        %v2669 = vsub.s32 0, %v2668
        %v2670 = vrot.slane %v779, %v2669
        %v2673 = vsel %vm791, %v2635, 0
        %2675 = vmatprep.subr.mxu0 0.0
        %2676 = vmatpush1.msra.mxu0 0.0
        %2677 = vmatprep.subr.mxu0 0.0
        %2678 = vmatpush1.msra.mxu0 0.0
        %2679 = vmatprep.subr.mxu0 0.0
        %2680 = vmatpush1.msra.mxu0 0.0
        %2681 = vmatprep.subr.mxu0 0.0
        %2682 = vmatpush1.msra.mxu0 0.0
        %2683 = vmatprep.subr.mxu0 0.0
        %2684 = vmatpush1.msra.mxu0 0.0
        %2685 = vmatprep.subr.mxu0 0.0
        %2686 = vmatpush1.msra.mxu0 0.0
        %2687 = vmatprep.subr.mxu0 0.0
        %2688 = vmatpush1.msra.mxu0 0.0
        %2689 = vmatprep.subr.mxu0 0.0
        %2690 = vmatpush1.msra.mxu0 0.0
        %2691 = vmatprep.subr.mxu0 0.0
        %2692 = vmatpush1.msra.mxu0 0.0
        %2693 = vmatprep.subr.mxu0 0.0
        %2694 = vmatpush1.msra.mxu0 0.0
        %2695 = vmatprep.subr.mxu0 0.0
        %2696 = vmatpush1.msra.mxu0 0.0
        %2697 = vmatprep.subr.mxu0 0.0
        %2698 = vmatpush1.msra.mxu0 0.0
        %2699 = vmatprep.subr.mxu0 0.0
        %2700 = vmatpush1.msra.mxu0 %v786
        %2701 = vmatprep.subr.mxu0 0.0
        %2702 = vmatpush1.msra.mxu0 %v785
        %2703 = vmatprep.subr.mxu0 0.0
        %2704 = vmatpush1.msra.mxu0 %v784
        %2705 = vmatprep.subr.mxu0 0.0
        %2706 = vmatpush1.msra.mxu0 %v783
        %2707 = vmatprep.subr.mxu0 0.0
        %2708 = vmatpush2.msra.mxu0 0.0
        %2709 = vmatprep.subr.mxu0 0.0
        %2710 = vmatpush2.msra.mxu0 0.0
        %2711 = vmatprep.subr.mxu0 0.0
        %2712 = vmatpush2.msra.mxu0 0.0
        %2713 = vmatprep.subr.mxu0 0.0
        %2714 = vmatpush2.msra.mxu0 0.0
        %2715 = vmatprep.subr.mxu0 0.0
        %2716 = vmatpush2.msra.mxu0 0.0
        %2717 = vmatprep.subr.mxu0 0.0
        %2718 = vmatpush2.msra.mxu0 0.0
        %2719 = vmatprep.subr.mxu0 0.0
        %2720 = vmatpush2.msra.mxu0 0.0
        %2721 = vmatprep.subr.mxu0 0.0
        %2722 = vmatpush2.msra.mxu0 0.0
        %2723 = vmatprep.subr.mxu0 0.0
        %2724 = vmatpush2.msra.mxu0 0.0
        %2725 = vmatprep.subr.mxu0 0.0
        %2726 = vmatpush2.msra.mxu0 0.0
        %2727 = vmatprep.subr.mxu0 0.0
        %2728 = vmatpush2.msra.mxu0 0.0
        %2729 = vmatprep.subr.mxu0 0.0
        %2730 = vmatpush2.msra.mxu0 0.0
        %2731 = vmatprep.subr.mxu0 0.0
        %2732 = vmatpush2.msra.mxu0 0.0
        %2733 = vmatprep.subr.mxu0 0.0
        %2734 = vmatpush2.msra.mxu0 0.0
        %2735 = vmatprep.subr.mxu0 0.0
        %2736 = vmatpush2.msra.mxu0 0.0
        %2737 = vmatprep.subr.mxu0 0.0
        %2738 = vmatpush2.msra.mxu0 0.0
        %2739 = vmatprep.mubr.f32.mxu0 0.0
        %2740 = vmatmul.mubr.f32.gmra.mxu0 %v2673
        %v2741 = vpop.f32.mrf.mxu0
        %v2742 = vadd.f32 %v2670, %v2741
        %v2743 = vpop.f32.mrf.mxu0
        %2744 = vdwg.mxu0
        %v2746 = vlaneseq
        %v2747 = vshrl.u32 %v2746, 7
        %v2748 = vsub.s32 0, %v2747
        %v2749 = vrot.slane %v780, %v2748
        %v2752 = vsel %vm791, %v2664, 0
        %v2755 = vsel %vm791, %v2665, 0
        %2757 = vmatprep.subr.mxu0 0.0
        %2758 = vmatpush1.msra.mxu0 0.0
        %2759 = vmatprep.subr.mxu0 0.0
        %2760 = vmatpush1.msra.mxu0 0.0
        %2761 = vmatprep.subr.mxu0 0.0
        %2762 = vmatpush1.msra.mxu0 0.0
        %2763 = vmatprep.subr.mxu0 0.0
        %2764 = vmatpush1.msra.mxu0 0.0
        %2765 = vmatprep.subr.mxu0 0.0
        %2766 = vmatpush1.msra.mxu0 0.0
        %2767 = vmatprep.subr.mxu0 0.0
        %2768 = vmatpush1.msra.mxu0 0.0
        %2769 = vmatprep.subr.mxu0 0.0
        %2770 = vmatpush1.msra.mxu0 0.0
        %2771 = vmatprep.subr.mxu0 0.0
        %2772 = vmatpush1.msra.mxu0 0.0
        %2773 = vmatprep.subr.mxu0 0.0
        %2774 = vmatpush1.msra.mxu0 0.0
        %2775 = vmatprep.subr.mxu0 0.0
        %2776 = vmatpush1.msra.mxu0 0.0
        %2777 = vmatprep.subr.mxu0 0.0
        %2778 = vmatpush1.msra.mxu0 0.0
        %2779 = vmatprep.subr.mxu0 0.0
        %2780 = vmatpush1.msra.mxu0 0.0
        %2781 = vmatprep.subr.mxu0 0.0
        %2782 = vmatpush1.msra.mxu0 %v790
        %2783 = vmatprep.subr.mxu0 0.0
        %2784 = vmatpush1.msra.mxu0 %v789
        %2785 = vmatprep.subr.mxu0 0.0
        %2786 = vmatpush1.msra.mxu0 %v788
        %2787 = vmatprep.subr.mxu0 0.0
        %2788 = vmatpush1.msra.mxu0 %v787
        %2789 = vmatprep.subr.mxu0 0.0
        %2790 = vmatpush2.msra.mxu0 0.0
        %2791 = vmatprep.subr.mxu0 0.0
        %2792 = vmatpush2.msra.mxu0 0.0
        %2793 = vmatprep.subr.mxu0 0.0
        %2794 = vmatpush2.msra.mxu0 0.0
        %2795 = vmatprep.subr.mxu0 0.0
        %2796 = vmatpush2.msra.mxu0 0.0
        %2797 = vmatprep.subr.mxu0 0.0
        %2798 = vmatpush2.msra.mxu0 0.0
        %2799 = vmatprep.subr.mxu0 0.0
        %2800 = vmatpush2.msra.mxu0 0.0
        %2801 = vmatprep.subr.mxu0 0.0
        %2802 = vmatpush2.msra.mxu0 0.0
        %2803 = vmatprep.subr.mxu0 0.0
        %2804 = vmatpush2.msra.mxu0 0.0
        %2805 = vmatprep.subr.mxu0 0.0
        %2806 = vmatpush2.msra.mxu0 0.0
        %2807 = vmatprep.subr.mxu0 0.0
        %2808 = vmatpush2.msra.mxu0 0.0
        %2809 = vmatprep.subr.mxu0 0.0
        %2810 = vmatpush2.msra.mxu0 0.0
        %2811 = vmatprep.subr.mxu0 0.0
        %2812 = vmatpush2.msra.mxu0 0.0
        %2813 = vmatprep.subr.mxu0 0.0
        %2814 = vmatpush2.msra.mxu0 0.0
        %2815 = vmatprep.subr.mxu0 0.0
        %2816 = vmatpush2.msra.mxu0 0.0
        %2817 = vmatprep.subr.mxu0 0.0
        %2818 = vmatpush2.msra.mxu0 0.0
        %2819 = vmatprep.subr.mxu0 0.0
        %2820 = vmatpush2.msra.mxu0 0.0
        %2821 = vmatprep.mubr.f32.mxu0 0.0
        %2822 = vmatmul.mubr.f32.gmra.mxu0 %v2752
        %v2823 = vpop.f32.mrf.mxu0
        %v2824 = vadd.f32 %v2749, %v2823
        %v2825 = vpop.f32.mrf.mxu0
        %2826 = vmatprep.mubr.f32.mxu0 0.0
        %2827 = vmatmul.mubr.f32.gmra.mxu0 %v2755
        %v2828 = vpop.f32.mrf.mxu0
        %v2829 = vadd.f32 %v2749, %v2828
        %v2830 = vpop.f32.mrf.mxu0
        %2831 = vdwg.mxu0
        %v2833 = vlaneseq
        %v2834 = vshrl.u32 %v2833, 7
        %v2835 = vsub.s32 0, %v2834
        %v2836 = vrot.slane %v781, %v2835
        %v2838 = vmul.f32 %v2836, %v2742
        %v2839 = vadd.f32 %v819, %v2838
        %v2841 = vlaneseq
        %v2842 = vshrl.u32 %v2841, 7
        %v2843 = vsub.s32 0, %v2842
        %v2844 = vrot.slane %v782, %v2843
        %v2846 = vmul.f32 %v2844, %v2824
        %v2847 = vmul.f32 %v2844, %v2829
        %v2848 = vadd.f32 %v862, %v2846
        %v2849 = vadd.f32 %v863, %v2847
        %2850 = vst.msk [vmem:[%s754] sm:$0xff] %vm791, %v2839
        %2851 = vst.msk [vmem:[%s761] sm:$0xff] %vm820, %v2848
        %2852 = vst.msk [vmem:[%s761 + $0x8] sm:$0xff] %vm820, %v2849
        %s2853 = sand.u32 %s510, 1
        %s2854 = scalar_lea.sflag [#allocation4], %s2853
        %s2855 = sand.u32 %s510, 1
        %s2856 = smul.addr %s2855, 8
        %s2857 = scalar_lea.vmem [#allocation7], %s2856
        %s2858 = sand.u32 %s536, 1
        %s2859 = scalar_lea.sflag [#allocation9], %s2858
        %s2860 = sand.u32 %s536, 1
        %s2861 = smul.addr %s2860, 16
        %s2862 = scalar_lea.vmem [#allocation8], %s2861
        // Predicated region
        $region113: #{tpu_custom_call.1} parent=103 // pred_check
          %p2863 = pneg %p520
        $region114: #{tpu_custom_call.1} parent=103 // pred_check_branch
          %2865 = sbr.rel (%p2863) target = $region116
        $region115: #{tpu_custom_call.1} parent=103 // pred_region
          %s2867 = ssub.s32 128, 128
          %2868 = vsyncadd %s2854, %s2867
          %s2869 = smul.addr %s46, 128
          %s2870 = scalar_lea.hbm %s21, %s2869
          %s2872 = sshll.u32 %s2857, 4
          %s2873 = int_to_ptr.vmem [resolvable:$true] %s2872
          %2875 = dma.vmem_to_hbm [thread:$0]  %s2873, 128, %s2870, %s2854
        $region116: #{tpu_custom_call.1} parent=103 // pred_fallthru
          _
        // Predicated region
        $region117: #{tpu_custom_call.1} parent=103 // pred_check
          %p2876 = pneg %p546
        $region118: #{tpu_custom_call.1} parent=103 // pred_check_branch
          %2878 = sbr.rel (%p2876) target = $region120
        $region119: #{tpu_custom_call.1} parent=103 // pred_region
          %s2880 = ssub.s32 256, 256
          %2881 = vsyncadd %s2859, %s2880
          %s2882 = smul.addr %s46, 2
          %s2883 = smul.addr %s2882, 128
          %s2884 = scalar_lea.hbm %s22, %s2883
          %s2885 = sshll.u32 %s2862, 4
          %s2886 = int_to_ptr.vmem [resolvable:$true] %s2885
          %2891 = dma.vmem_to_hbm [thread:$0]  %s2886, 256, %s2884, %s2859, 128, 128, 8
        $region120: #{tpu_custom_call.1} parent=103 // pred_fallthru
          _
      $region104: #{tpu_custom_call.1} parent=5 // pred_fallthru
        _
      %p2892 = scmp.le.s32.totalorder 2, %s41
      // Predicated region
      $region121: #{tpu_custom_call.1} parent=5 // pred_check
        %p2893 = pneg %p2892
      $region122: #{tpu_custom_call.1} parent=5 // pred_check_branch
        %2895 = sbr.rel (%p2893) target = $region124
      $region123: #{tpu_custom_call.1} parent=5 // pred_region
        %s2896 = ssub.s32 %s41, 2
        // Predicated region
        $region125: #{tpu_custom_call.1} parent=123 // pred_check
          %p2897 = pneg %p526
        $region126: #{tpu_custom_call.1} parent=123 // pred_check_branch
          %2899 = sbr.rel (%p2897) target = $region128
        $region127: #{tpu_custom_call.1} parent=123 // pred_region
          %s2900 = sand.u32 %s511, 1
          %s2901 = scalar_lea.sflag [#allocation4], %s2900
          %s2902 = sand.u32 %s511, 1
          %s2903 = smul.addr %s2902, 8
          %s2904 = scalar_lea.vmem [#allocation7], %s2903
          %2905 = dma.done %s2901, 128
        $region128: #{tpu_custom_call.1} parent=123 // pred_fallthru
          _
        // Predicated region
        $region129: #{tpu_custom_call.1} parent=123 // pred_check
          %p2906 = pneg %p552
        $region130: #{tpu_custom_call.1} parent=123 // pred_check_branch
          %2908 = sbr.rel (%p2906) target = $region132
        $region131: #{tpu_custom_call.1} parent=123 // pred_region
          %s2909 = sand.u32 %s537, 1
          %s2910 = scalar_lea.sflag [#allocation9], %s2909
          %s2911 = sand.u32 %s537, 1
          %s2912 = smul.addr %s2911, 16
          %s2913 = scalar_lea.vmem [#allocation8], %s2912
          %2914 = dma.done %s2910, 256
        $region132: #{tpu_custom_call.1} parent=123 // pred_fallthru
          _
      $region124: #{tpu_custom_call.1} parent=5 // pred_fallthru
        _
    $region6: #{tpu_custom_call.1} parent=1 // loop_footer
      %s45 = sadd.s32 1, %s41
    $region7: #{tpu_custom_call.1} parent=1 // loop_footer_branch
      %40 = sbr.rel target = $region3
    $region8: #{tpu_custom_call.1} parent=1 // loop_exit
      _
    %2915 = vsyncpa [#allocation3], 1
    %s2916 = scalar_lea.sflag [#allocation3], 1
    %2917 = vsyncpa %s2916, 1
    %2918 = vsyncpa [#allocation6], 1
    %s2919 = scalar_lea.sflag [#allocation6], 1
    %2920 = vsyncpa %s2919, 1
    %2921 = vsyncpa [#allocation4], 1
    %s2922 = scalar_lea.sflag [#allocation4], 1
    %2923 = vsyncpa %s2922, 1
    %2924 = vsyncpa [#allocation9], 1
    %s2925 = scalar_lea.sflag [#allocation9], 1
    %2926 = vsyncpa %s2925, 1

</llo_original>
